<compile_context>
chip_gen: v5e
topology: v5e:2x2
jax: 0.10.0
libtpu: 0.0.40
codegen_flags: <defaults>
</compile_context>

<pallas_src>
import jax
import jax.numpy as jnp
from jax.experimental import pallas as pl
from jax.experimental.pallas import tpu as pltpu


# ------------------------------ fused kernel --------------------------------

def _fused_cnn_kernel(xs_ref, w1_ref, b1_ref, w2_ref, b2_ref, wfc_ref, bfc_ref,
                      out_ref, patch_ref, p1pad_ref, patch2_ref, feat_ref):
    # ---- stage A: conv1 (5x5, s2, p2) + maxpool2x2, computed pool-parity split
    # xs_ref block: (1, 36, 108) where  xs[rh*9+i, rw*27+j*3+c] = Xpad[4i+rh, 4j+rw, c]
    # patch matrix (32, 600): 4 row groups (pool parity a,b) x 8 rows (p1),
    #                         25 col groups (tap kh,kw) x 24 cols (q1*3+ci).
    for a in range(2):
        for b in range(2):
            g = a * 2 + b
            for kh in range(5):
                for kw in range(5):
                    t = kh * 5 + kw
                    u = 2 * a + kh
                    v = 2 * b + kw
                    rh, dh = u % 4, u // 4
                    rw, dw = v % 4, v // 4
                    blk = xs_ref[0,
                                 rh * 9 + dh: rh * 9 + dh + 8,
                                 rw * 27 + dw * 3: rw * 27 + dw * 3 + 24]
                    patch_ref[g * 8:(g + 1) * 8, t * 24:(t + 1) * 24] = blk

    y = jnp.dot(patch_ref[...], w1_ref[...],
                preferred_element_type=jnp.float32)                    # (32, 64)
    # maxpool over the 4 parity groups, then add the conv1 bias once
    p1 = jnp.maximum(jnp.maximum(y[0:8], y[8:16]),
                     jnp.maximum(y[16:24], y[24:32])) + b1_ref[...]    # (8, 64)

    # ---- zero-padded pool1 output: rows = padded h (12), cols = w*8 + c (96)
    p1pad_ref[...] = jnp.zeros((12, 96), jnp.float32)
    p1pad_ref[2:10, 16:80] = p1

    # ---- stage B: conv2 im2col (16, 200); cols ordered (kh, kw, ci)
    for h2 in range(4):
        for w2 in range(4):
            r = h2 * 4 + w2
            for kh in range(5):
                patch2_ref[r:r + 1, kh * 40:(kh + 1) * 40] = \
                    p1pad_ref[2 * h2 + kh: 2 * h2 + kh + 1,
                              16 * w2: 16 * w2 + 40]

    y2 = jnp.dot(patch2_ref[...], w2_ref[...],
                 preferred_element_type=jnp.float32) + b2_ref[...]     # (16, 16)

    # ---- pool2 (2x2) + flatten in (p2, q2, c2) order
    for p2 in range(2):
        for q2 in range(2):
            r0 = 8 * p2 + 2 * q2
            m = jnp.maximum(jnp.maximum(y2[r0:r0 + 1], y2[r0 + 1:r0 + 2]),
                            jnp.maximum(y2[r0 + 4:r0 + 5], y2[r0 + 5:r0 + 6]))
            feat_ref[0:1, (p2 * 2 + q2) * 16:(p2 * 2 + q2 + 1) * 16] = m

    # ---- fc1 (weights pre-permuted on the host to this feature order, 128-padded)
    logits = jnp.dot(feat_ref[...], wfc_ref[...],
                     preferred_element_type=jnp.float32) + bfc_ref[...]  # (1, 128)
    out_ref[...] = logits.reshape(1, 1, 128)


# --------------------------------- wrapper ----------------------------------

def corrected_cnn_forward(x, params):
    # x: (N, 3, 32, 32) NCHW, matches PyTorch CorrectedCNN.forward
    N = x.shape[0]
    w1, b1 = params['w1'], params['b1']       # (8,3,5,5), (8,)
    w2, b2 = params['w2'], params['b2']       # (16,8,5,5), (16,)
    wfc, bfc = params['wfc'], params['bfc']   # (10,64), (10,)

    # --- host-side one-time repacks (tiny, single XLA fusions) ---
    # input: pad 2 + space-to-depth(4) so all in-kernel conv taps are contiguous
    xp = jnp.pad(x, ((0, 0), (0, 0), (2, 2), (2, 2)))                  # (N,3,36,36)
    xs = xp.reshape(N, 3, 9, 4, 9, 4).transpose(0, 3, 2, 5, 4, 1)
    xs = xs.reshape(N, 36, 108)

    # conv1 weights -> block-diagonal over the 8 output columns: (600, 64)
    w1r = jnp.transpose(w1, (2, 3, 1, 0))                              # (5,5,3,8)
    eye8 = jnp.eye(8, dtype=w1.dtype)
    w1big = jnp.einsum('qQ,hwcd->hwqcQd', eye8, w1r).reshape(600, 64)
    b1big = jnp.tile(b1, 8).reshape(1, 64)

    # conv2 weights: rows ordered (kh, kw, ci)
    w2r = jnp.transpose(w2, (2, 3, 1, 0)).reshape(200, 16)
    b2r = b2.reshape(1, 16)

    # fc weights permuted to the kernel's (p2, q2, c2) feature order, 128-lane pad
    wfcr = jnp.transpose(wfc.reshape(10, 16, 2, 2), (2, 3, 1, 0)).reshape(64, 10)
    wfcp = jnp.pad(wfcr, ((0, 0), (0, 118)))                           # (64, 128)
    bfcp = jnp.pad(bfc, (0, 118)).reshape(1, 128)

    out = pl.pallas_call(
        _fused_cnn_kernel,
        out_shape=jax.ShapeDtypeStruct((N, 1, 128), jnp.float32),
        grid_spec=pltpu.PrefetchScalarGridSpec(
            num_scalar_prefetch=0,
            grid=(N,),
            in_specs=[
                pl.BlockSpec((1, 36, 108), lambda n: (n, 0, 0)),   # input
                pl.BlockSpec((600, 64), lambda n: (0, 0)),         # w1 (block-diag)
                pl.BlockSpec((1, 64), lambda n: (0, 0)),           # b1 (tiled)
                pl.BlockSpec((200, 16), lambda n: (0, 0)),         # w2
                pl.BlockSpec((1, 16), lambda n: (0, 0)),           # b2
                pl.BlockSpec((64, 128), lambda n: (0, 0)),         # wfc (padded)
                pl.BlockSpec((1, 128), lambda n: (0, 0)),          # bfc (padded)
            ],
            out_specs=pl.BlockSpec((1, 1, 128), lambda n: (n, 0, 0)),
            scratch_shapes=[
                pltpu.VMEM((32, 600), jnp.float32),   # conv1 parity-split patches
                pltpu.VMEM((12, 96), jnp.float32),    # padded pool1 output
                pltpu.VMEM((16, 200), jnp.float32),   # conv2 im2col patches
                pltpu.VMEM((1, 64), jnp.float32),     # flattened features
            ],
        ),
        compiler_params=pltpu.CompilerParams(
            dimension_semantics=("parallel",)),
    )(xs, w1big, b1big, w2r, b2r, wfcp, bfcp)

    return out.reshape(N, 128)[:, :10]


# ----------------------------- pure-JAX reference ----------------------------

def _reference_forward(x, params):
    hp = jax.lax.Precision.HIGHEST
    y = jax.lax.conv_general_dilated(
        x, params['w1'], window_strides=(2, 2), padding=((2, 2), (2, 2)),
        dimension_numbers=('NCHW', 'OIHW', 'NCHW'), precision=hp)
    y = y + params['b1'][None, :, None, None]
    y = jax.lax.reduce_window(y, -jnp.inf, jax.lax.max,
                              (1, 1, 2, 2), (1, 1, 2, 2), 'VALID')
    y = jax.lax.conv_general_dilated(
        y, params['w2'], window_strides=(2, 2), padding=((2, 2), (2, 2)),
        dimension_numbers=('NCHW', 'OIHW', 'NCHW'), precision=hp)
    y = y + params['b2'][None, :, None, None]
    y = jax.lax.reduce_window(y, -jnp.inf, jax.lax.max,
                              (1, 1, 2, 2), (1, 1, 2, 2), 'VALID')
    y = y.reshape(y.shape[0], -1)
    return y @ params['wfc'].T + params['bfc']


# ----------------------------------- main ------------------------------------

if __name__ == "__main__":
    key = jax.random.PRNGKey(0)
    k1, k2, k3, k4, k5, k6, kx = jax.random.split(key, 7)

    def uinit(k, shape, fan_in):
        # deterministic stand-in for PyTorch's default U(-1/sqrt(fan_in), ...)
        bound = 1.0 / (fan_in ** 0.5)
        return jax.random.uniform(k, shape, jnp.float32, -bound, bound)

    params = {
        'w1':  uinit(k1, (8, 3, 5, 5), 3 * 5 * 5),
        'b1':  uinit(k2, (8,),          3 * 5 * 5),
        'w2':  uinit(k3, (16, 8, 5, 5), 8 * 5 * 5),
        'b2':  uinit(k4, (16,),         8 * 5 * 5),
        'wfc': uinit(k5, (10, 64),      64),
        'bfc': uinit(k6, (10,),         64),
    }

    # fc1 expects 16*2*2 features -> input must be 3x32x32
    x = jax.random.normal(kx, (2, 3, 32, 32), jnp.float32)

    fwd = jax.jit(corrected_cnn_forward)
    out = fwd(x, params)
    jax.block_until_ready(out)
    assert out.shape == (2, 10), out.shape

    ref = _reference_forward(x, params)
    err = float(jnp.max(jnp.abs(out - ref)))
    assert err < 3e-2, f"mismatch vs reference: max abs err = {err}"

    print("KERNEL_OK")
</pallas_src>

<mosaic_0001>
module attributes {stable_mosaic.version = 11 : i64} {
  func.func @_fused_cnn_kernel(%arg0: i32, %arg1: memref<1x36x108xf32, #tpu.memory_space<vmem>>, %arg2: memref<600x64xf32, #tpu.memory_space<vmem>>, %arg3: memref<1x64xf32, #tpu.memory_space<vmem>>, %arg4: memref<200x16xf32, #tpu.memory_space<vmem>>, %arg5: memref<1x16xf32, #tpu.memory_space<vmem>>, %arg6: memref<64x128xf32, #tpu.memory_space<vmem>>, %arg7: memref<1x128xf32, #tpu.memory_space<vmem>>, %arg8: memref<1x1x128xf32, #tpu.memory_space<vmem>>, %arg9: memref<32x600xf32, #tpu.memory_space<vmem>>, %arg10: memref<12x96xf32, #tpu.memory_space<vmem>>, %arg11: memref<16x200xf32, #tpu.memory_space<vmem>>, %arg12: memref<1x64xf32, #tpu.memory_space<vmem>>) attributes {dimension_semantics = [#tpu.dimension_semantics<parallel>], iteration_bounds = array<i64: 2>, scalar_prefetch = 0 : i64, scratch_operands = 4 : i64, tpu.core_type = #tpu.core_type<tc>, window_params = [{transform_indices = @transform_0, window_bounds = array<i64: 1, 36, 108>}, {pipeline_mode = #tpu.pipeline_mode<synchronous>, transform_indices = @transform_1, window_bounds = array<i64: 600, 64>}, {pipeline_mode = #tpu.pipeline_mode<synchronous>, transform_indices = @transform_2, window_bounds = array<i64: 1, 64>}, {pipeline_mode = #tpu.pipeline_mode<synchronous>, transform_indices = @transform_3, window_bounds = array<i64: 200, 16>}, {pipeline_mode = #tpu.pipeline_mode<synchronous>, transform_indices = @transform_4, window_bounds = array<i64: 1, 16>}, {pipeline_mode = #tpu.pipeline_mode<synchronous>, transform_indices = @transform_5, window_bounds = array<i64: 64, 128>}, {pipeline_mode = #tpu.pipeline_mode<synchronous>, transform_indices = @transform_6, window_bounds = array<i64: 1, 128>}, {transform_indices = @transform_7, window_bounds = array<i64: 1, 1, 128>}]} {
    %c0 = arith.constant 0 : index
    %c0_0 = arith.constant 0 : index
    %c0_1 = arith.constant 0 : index
    %0 = vector.load %arg1[%c0, %c0_0, %c0_1] : memref<1x36x108xf32, #tpu.memory_space<vmem>>, vector<1x8x24xf32>
    %1 = vector.shape_cast %0 : vector<1x8x24xf32> to vector<8x24xf32>
    %c0_2 = arith.constant 0 : index
    %c0_3 = arith.constant 0 : index
    %2 = vector.load %arg9[%c0_2, %c0_3] : memref<32x600xf32, #tpu.memory_space<vmem>>, vector<8x24xf32>
    tpu.vector_store %arg9[%c0_2, %c0_3], %1 {strides = array<i32>} : memref<32x600xf32, #tpu.memory_space<vmem>>, vector<8x24xf32>,
    %c0_4 = arith.constant 0 : index
    %c0_5 = arith.constant 0 : index
    %c27 = arith.constant 27 : index
    %3 = vector.load %arg1[%c0_4, %c0_5, %c27] : memref<1x36x108xf32, #tpu.memory_space<vmem>>, vector<1x8x24xf32>
    %4 = vector.shape_cast %3 : vector<1x8x24xf32> to vector<8x24xf32>
    %c0_6 = arith.constant 0 : index
    %c24 = arith.constant 24 : index
    %5 = vector.load %arg9[%c0_6, %c24] : memref<32x600xf32, #tpu.memory_space<vmem>>, vector<8x24xf32>
    tpu.vector_store %arg9[%c0_6, %c24], %4 {strides = array<i32>} : memref<32x600xf32, #tpu.memory_space<vmem>>, vector<8x24xf32>,
    %c0_7 = arith.constant 0 : index
    %c0_8 = arith.constant 0 : index
    %c54 = arith.constant 54 : index
    %6 = vector.load %arg1[%c0_7, %c0_8, %c54] : memref<1x36x108xf32, #tpu.memory_space<vmem>>, vector<1x8x24xf32>
    %7 = vector.shape_cast %6 : vector<1x8x24xf32> to vector<8x24xf32>
    %c0_9 = arith.constant 0 : index
    %c48 = arith.constant 48 : index
    %8 = vector.load %arg9[%c0_9, %c48] : memref<32x600xf32, #tpu.memory_space<vmem>>, vector<8x24xf32>
    tpu.vector_store %arg9[%c0_9, %c48], %7 {strides = array<i32>} : memref<32x600xf32, #tpu.memory_space<vmem>>, vector<8x24xf32>,
    %c0_10 = arith.constant 0 : index
    %c0_11 = arith.constant 0 : index
    %c81 = arith.constant 81 : index
    %9 = vector.load %arg1[%c0_10, %c0_11, %c81] : memref<1x36x108xf32, #tpu.memory_space<vmem>>, vector<1x8x24xf32>
    %10 = vector.shape_cast %9 : vector<1x8x24xf32> to vector<8x24xf32>
    %c0_12 = arith.constant 0 : index
    %c72 = arith.constant 72 : index
    %11 = vector.load %arg9[%c0_12, %c72] : memref<32x600xf32, #tpu.memory_space<vmem>>, vector<8x24xf32>
    tpu.vector_store %arg9[%c0_12, %c72], %10 {strides = array<i32>} : memref<32x600xf32, #tpu.memory_space<vmem>>, vector<8x24xf32>,
    %c0_13 = arith.constant 0 : index
    %c0_14 = arith.constant 0 : index
    %c3 = arith.constant 3 : index
    %12 = vector.load %arg1[%c0_13, %c0_14, %c3] : memref<1x36x108xf32, #tpu.memory_space<vmem>>, vector<1x8x24xf32>
    %13 = vector.shape_cast %12 : vector<1x8x24xf32> to vector<8x24xf32>
    %c0_15 = arith.constant 0 : index
    %c96 = arith.constant 96 : index
    %14 = vector.load %arg9[%c0_15, %c96] : memref<32x600xf32, #tpu.memory_space<vmem>>, vector<8x24xf32>
    tpu.vector_store %arg9[%c0_15, %c96], %13 {strides = array<i32>} : memref<32x600xf32, #tpu.memory_space<vmem>>, vector<8x24xf32>,
    %c0_16 = arith.constant 0 : index
    %c9 = arith.constant 9 : index
    %c0_17 = arith.constant 0 : index
    %15 = vector.load %arg1[%c0_16, %c9, %c0_17] : memref<1x36x108xf32, #tpu.memory_space<vmem>>, vector<1x8x24xf32>
    %16 = vector.shape_cast %15 : vector<1x8x24xf32> to vector<8x24xf32>
    %c0_18 = arith.constant 0 : index
    %c120 = arith.constant 120 : index
    %17 = vector.load %arg9[%c0_18, %c120] : memref<32x600xf32, #tpu.memory_space<vmem>>, vector<8x24xf32>
    tpu.vector_store %arg9[%c0_18, %c120], %16 {strides = array<i32>} : memref<32x600xf32, #tpu.memory_space<vmem>>, vector<8x24xf32>,
    %c0_19 = arith.constant 0 : index
    %c9_20 = arith.constant 9 : index
    %c27_21 = arith.constant 27 : index
    %18 = vector.load %arg1[%c0_19, %c9_20, %c27_21] : memref<1x36x108xf32, #tpu.memory_space<vmem>>, vector<1x8x24xf32>
    %19 = vector.shape_cast %18 : vector<1x8x24xf32> to vector<8x24xf32>
    %c0_22 = arith.constant 0 : index
    %c144 = arith.constant 144 : index
    %20 = vector.load %arg9[%c0_22, %c144] : memref<32x600xf32, #tpu.memory_space<vmem>>, vector<8x24xf32>
    tpu.vector_store %arg9[%c0_22, %c144], %19 {strides = array<i32>} : memref<32x600xf32, #tpu.memory_space<vmem>>, vector<8x24xf32>,
    %c0_23 = arith.constant 0 : index
    %c9_24 = arith.constant 9 : index
    %c54_25 = arith.constant 54 : index
    %21 = vector.load %arg1[%c0_23, %c9_24, %c54_25] : memref<1x36x108xf32, #tpu.memory_space<vmem>>, vector<1x8x24xf32>
    %22 = vector.shape_cast %21 : vector<1x8x24xf32> to vector<8x24xf32>
    %c0_26 = arith.constant 0 : index
    %c168 = arith.constant 168 : index
    %23 = vector.load %arg9[%c0_26, %c168] : memref<32x600xf32, #tpu.memory_space<vmem>>, vector<8x24xf32>
    tpu.vector_store %arg9[%c0_26, %c168], %22 {strides = array<i32>} : memref<32x600xf32, #tpu.memory_space<vmem>>, vector<8x24xf32>,
    %c0_27 = arith.constant 0 : index
    %c9_28 = arith.constant 9 : index
    %c81_29 = arith.constant 81 : index
    %24 = vector.load %arg1[%c0_27, %c9_28, %c81_29] : memref<1x36x108xf32, #tpu.memory_space<vmem>>, vector<1x8x24xf32>
    %25 = vector.shape_cast %24 : vector<1x8x24xf32> to vector<8x24xf32>
    %c0_30 = arith.constant 0 : index
    %c192 = arith.constant 192 : index
    %26 = vector.load %arg9[%c0_30, %c192] : memref<32x600xf32, #tpu.memory_space<vmem>>, vector<8x24xf32>
    tpu.vector_store %arg9[%c0_30, %c192], %25 {strides = array<i32>} : memref<32x600xf32, #tpu.memory_space<vmem>>, vector<8x24xf32>,
    %c0_31 = arith.constant 0 : index
    %c9_32 = arith.constant 9 : index
    %c3_33 = arith.constant 3 : index
    %27 = vector.load %arg1[%c0_31, %c9_32, %c3_33] : memref<1x36x108xf32, #tpu.memory_space<vmem>>, vector<1x8x24xf32>
    %28 = vector.shape_cast %27 : vector<1x8x24xf32> to vector<8x24xf32>
    %c0_34 = arith.constant 0 : index
    %c216 = arith.constant 216 : index
    %29 = vector.load %arg9[%c0_34, %c216] : memref<32x600xf32, #tpu.memory_space<vmem>>, vector<8x24xf32>
    tpu.vector_store %arg9[%c0_34, %c216], %28 {strides = array<i32>} : memref<32x600xf32, #tpu.memory_space<vmem>>, vector<8x24xf32>,
    %c0_35 = arith.constant 0 : index
    %c18 = arith.constant 18 : index
    %c0_36 = arith.constant 0 : index
    %30 = vector.load %arg1[%c0_35, %c18, %c0_36] : memref<1x36x108xf32, #tpu.memory_space<vmem>>, vector<1x8x24xf32>
    %31 = vector.shape_cast %30 : vector<1x8x24xf32> to vector<8x24xf32>
    %c0_37 = arith.constant 0 : index
    %c240 = arith.constant 240 : index
    %32 = vector.load %arg9[%c0_37, %c240] : memref<32x600xf32, #tpu.memory_space<vmem>>, vector<8x24xf32>
    tpu.vector_store %arg9[%c0_37, %c240], %31 {strides = array<i32>} : memref<32x600xf32, #tpu.memory_space<vmem>>, vector<8x24xf32>,
    %c0_38 = arith.constant 0 : index
    %c18_39 = arith.constant 18 : index
    %c27_40 = arith.constant 27 : index
    %33 = vector.load %arg1[%c0_38, %c18_39, %c27_40] : memref<1x36x108xf32, #tpu.memory_space<vmem>>, vector<1x8x24xf32>
    %34 = vector.shape_cast %33 : vector<1x8x24xf32> to vector<8x24xf32>
    %c0_41 = arith.constant 0 : index
    %c264 = arith.constant 264 : index
    %35 = vector.load %arg9[%c0_41, %c264] : memref<32x600xf32, #tpu.memory_space<vmem>>, vector<8x24xf32>
    tpu.vector_store %arg9[%c0_41, %c264], %34 {strides = array<i32>} : memref<32x600xf32, #tpu.memory_space<vmem>>, vector<8x24xf32>,
    %c0_42 = arith.constant 0 : index
    %c18_43 = arith.constant 18 : index
    %c54_44 = arith.constant 54 : index
    %36 = vector.load %arg1[%c0_42, %c18_43, %c54_44] : memref<1x36x108xf32, #tpu.memory_space<vmem>>, vector<1x8x24xf32>
    %37 = vector.shape_cast %36 : vector<1x8x24xf32> to vector<8x24xf32>
    %c0_45 = arith.constant 0 : index
    %c288 = arith.constant 288 : index
    %38 = vector.load %arg9[%c0_45, %c288] : memref<32x600xf32, #tpu.memory_space<vmem>>, vector<8x24xf32>
    tpu.vector_store %arg9[%c0_45, %c288], %37 {strides = array<i32>} : memref<32x600xf32, #tpu.memory_space<vmem>>, vector<8x24xf32>,
    %c0_46 = arith.constant 0 : index
    %c18_47 = arith.constant 18 : index
    %c81_48 = arith.constant 81 : index
    %39 = vector.load %arg1[%c0_46, %c18_47, %c81_48] : memref<1x36x108xf32, #tpu.memory_space<vmem>>, vector<1x8x24xf32>
    %40 = vector.shape_cast %39 : vector<1x8x24xf32> to vector<8x24xf32>
    %c0_49 = arith.constant 0 : index
    %c312 = arith.constant 312 : index
    %41 = vector.load %arg9[%c0_49, %c312] : memref<32x600xf32, #tpu.memory_space<vmem>>, vector<8x24xf32>
    tpu.vector_store %arg9[%c0_49, %c312], %40 {strides = array<i32>} : memref<32x600xf32, #tpu.memory_space<vmem>>, vector<8x24xf32>,
    %c0_50 = arith.constant 0 : index
    %c18_51 = arith.constant 18 : index
    %c3_52 = arith.constant 3 : index
    %42 = vector.load %arg1[%c0_50, %c18_51, %c3_52] : memref<1x36x108xf32, #tpu.memory_space<vmem>>, vector<1x8x24xf32>
    %43 = vector.shape_cast %42 : vector<1x8x24xf32> to vector<8x24xf32>
    %c0_53 = arith.constant 0 : index
    %c336 = arith.constant 336 : index
    %44 = vector.load %arg9[%c0_53, %c336] : memref<32x600xf32, #tpu.memory_space<vmem>>, vector<8x24xf32>
    tpu.vector_store %arg9[%c0_53, %c336], %43 {strides = array<i32>} : memref<32x600xf32, #tpu.memory_space<vmem>>, vector<8x24xf32>,
    %c0_54 = arith.constant 0 : index
    %c27_55 = arith.constant 27 : index
    %c0_56 = arith.constant 0 : index
    %45 = vector.load %arg1[%c0_54, %c27_55, %c0_56] : memref<1x36x108xf32, #tpu.memory_space<vmem>>, vector<1x8x24xf32>
    %46 = vector.shape_cast %45 : vector<1x8x24xf32> to vector<8x24xf32>
    %c0_57 = arith.constant 0 : index
    %c360 = arith.constant 360 : index
    %47 = vector.load %arg9[%c0_57, %c360] : memref<32x600xf32, #tpu.memory_space<vmem>>, vector<8x24xf32>
    tpu.vector_store %arg9[%c0_57, %c360], %46 {strides = array<i32>} : memref<32x600xf32, #tpu.memory_space<vmem>>, vector<8x24xf32>,
    %c0_58 = arith.constant 0 : index
    %c27_59 = arith.constant 27 : index
    %c27_60 = arith.constant 27 : index
    %48 = vector.load %arg1[%c0_58, %c27_59, %c27_60] : memref<1x36x108xf32, #tpu.memory_space<vmem>>, vector<1x8x24xf32>
    %49 = vector.shape_cast %48 : vector<1x8x24xf32> to vector<8x24xf32>
    %c0_61 = arith.constant 0 : index
    %c384 = arith.constant 384 : index
    %50 = vector.load %arg9[%c0_61, %c384] : memref<32x600xf32, #tpu.memory_space<vmem>>, vector<8x24xf32>
    tpu.vector_store %arg9[%c0_61, %c384], %49 {strides = array<i32>} : memref<32x600xf32, #tpu.memory_space<vmem>>, vector<8x24xf32>,
    %c0_62 = arith.constant 0 : index
    %c27_63 = arith.constant 27 : index
    %c54_64 = arith.constant 54 : index
    %51 = vector.load %arg1[%c0_62, %c27_63, %c54_64] : memref<1x36x108xf32, #tpu.memory_space<vmem>>, vector<1x8x24xf32>
    %52 = vector.shape_cast %51 : vector<1x8x24xf32> to vector<8x24xf32>
    %c0_65 = arith.constant 0 : index
    %c408 = arith.constant 408 : index
    %53 = vector.load %arg9[%c0_65, %c408] : memref<32x600xf32, #tpu.memory_space<vmem>>, vector<8x24xf32>
    tpu.vector_store %arg9[%c0_65, %c408], %52 {strides = array<i32>} : memref<32x600xf32, #tpu.memory_space<vmem>>, vector<8x24xf32>,
    %c0_66 = arith.constant 0 : index
    %c27_67 = arith.constant 27 : index
    %c81_68 = arith.constant 81 : index
    %54 = vector.load %arg1[%c0_66, %c27_67, %c81_68] : memref<1x36x108xf32, #tpu.memory_space<vmem>>, vector<1x8x24xf32>
    %55 = vector.shape_cast %54 : vector<1x8x24xf32> to vector<8x24xf32>
    %c0_69 = arith.constant 0 : index
    %c432 = arith.constant 432 : index
    %56 = vector.load %arg9[%c0_69, %c432] : memref<32x600xf32, #tpu.memory_space<vmem>>, vector<8x24xf32>
    tpu.vector_store %arg9[%c0_69, %c432], %55 {strides = array<i32>} : memref<32x600xf32, #tpu.memory_space<vmem>>, vector<8x24xf32>,
    %c0_70 = arith.constant 0 : index
    %c27_71 = arith.constant 27 : index
    %c3_72 = arith.constant 3 : index
    %57 = vector.load %arg1[%c0_70, %c27_71, %c3_72] : memref<1x36x108xf32, #tpu.memory_space<vmem>>, vector<1x8x24xf32>
    %58 = vector.shape_cast %57 : vector<1x8x24xf32> to vector<8x24xf32>
    %c0_73 = arith.constant 0 : index
    %c456 = arith.constant 456 : index
    %59 = vector.load %arg9[%c0_73, %c456] : memref<32x600xf32, #tpu.memory_space<vmem>>, vector<8x24xf32>
    tpu.vector_store %arg9[%c0_73, %c456], %58 {strides = array<i32>} : memref<32x600xf32, #tpu.memory_space<vmem>>, vector<8x24xf32>,
    %c0_74 = arith.constant 0 : index
    %c1 = arith.constant 1 : index
    %c0_75 = arith.constant 0 : index
    %60 = vector.load %arg1[%c0_74, %c1, %c0_75] : memref<1x36x108xf32, #tpu.memory_space<vmem>>, vector<1x8x24xf32>
    %61 = vector.shape_cast %60 : vector<1x8x24xf32> to vector<8x24xf32>
    %c0_76 = arith.constant 0 : index
    %c480 = arith.constant 480 : index
    %62 = vector.load %arg9[%c0_76, %c480] : memref<32x600xf32, #tpu.memory_space<vmem>>, vector<8x24xf32>
    tpu.vector_store %arg9[%c0_76, %c480], %61 {strides = array<i32>} : memref<32x600xf32, #tpu.memory_space<vmem>>, vector<8x24xf32>,
    %c0_77 = arith.constant 0 : index
    %c1_78 = arith.constant 1 : index
    %c27_79 = arith.constant 27 : index
    %63 = vector.load %arg1[%c0_77, %c1_78, %c27_79] : memref<1x36x108xf32, #tpu.memory_space<vmem>>, vector<1x8x24xf32>
    %64 = vector.shape_cast %63 : vector<1x8x24xf32> to vector<8x24xf32>
    %c0_80 = arith.constant 0 : index
    %c504 = arith.constant 504 : index
    %65 = vector.load %arg9[%c0_80, %c504] : memref<32x600xf32, #tpu.memory_space<vmem>>, vector<8x24xf32>
    tpu.vector_store %arg9[%c0_80, %c504], %64 {strides = array<i32>} : memref<32x600xf32, #tpu.memory_space<vmem>>, vector<8x24xf32>,
    %c0_81 = arith.constant 0 : index
    %c1_82 = arith.constant 1 : index
    %c54_83 = arith.constant 54 : index
    %66 = vector.load %arg1[%c0_81, %c1_82, %c54_83] : memref<1x36x108xf32, #tpu.memory_space<vmem>>, vector<1x8x24xf32>
    %67 = vector.shape_cast %66 : vector<1x8x24xf32> to vector<8x24xf32>
    %c0_84 = arith.constant 0 : index
    %c528 = arith.constant 528 : index
    %68 = vector.load %arg9[%c0_84, %c528] : memref<32x600xf32, #tpu.memory_space<vmem>>, vector<8x24xf32>
    tpu.vector_store %arg9[%c0_84, %c528], %67 {strides = array<i32>} : memref<32x600xf32, #tpu.memory_space<vmem>>, vector<8x24xf32>,
    %c0_85 = arith.constant 0 : index
    %c1_86 = arith.constant 1 : index
    %c81_87 = arith.constant 81 : index
    %69 = vector.load %arg1[%c0_85, %c1_86, %c81_87] : memref<1x36x108xf32, #tpu.memory_space<vmem>>, vector<1x8x24xf32>
    %70 = vector.shape_cast %69 : vector<1x8x24xf32> to vector<8x24xf32>
    %c0_88 = arith.constant 0 : index
    %c552 = arith.constant 552 : index
    %71 = vector.load %arg9[%c0_88, %c552] : memref<32x600xf32, #tpu.memory_space<vmem>>, vector<8x24xf32>
    tpu.vector_store %arg9[%c0_88, %c552], %70 {strides = array<i32>} : memref<32x600xf32, #tpu.memory_space<vmem>>, vector<8x24xf32>,
    %c0_89 = arith.constant 0 : index
    %c1_90 = arith.constant 1 : index
    %c3_91 = arith.constant 3 : index
    %72 = vector.load %arg1[%c0_89, %c1_90, %c3_91] : memref<1x36x108xf32, #tpu.memory_space<vmem>>, vector<1x8x24xf32>
    %73 = vector.shape_cast %72 : vector<1x8x24xf32> to vector<8x24xf32>
    %c0_92 = arith.constant 0 : index
    %c576 = arith.constant 576 : index
    %74 = vector.load %arg9[%c0_92, %c576] : memref<32x600xf32, #tpu.memory_space<vmem>>, vector<8x24xf32>
    tpu.vector_store %arg9[%c0_92, %c576], %73 {strides = array<i32>} : memref<32x600xf32, #tpu.memory_space<vmem>>, vector<8x24xf32>,
    %c0_93 = arith.constant 0 : index
    %c0_94 = arith.constant 0 : index
    %c54_95 = arith.constant 54 : index
    %75 = vector.load %arg1[%c0_93, %c0_94, %c54_95] : memref<1x36x108xf32, #tpu.memory_space<vmem>>, vector<1x8x24xf32>
    %76 = vector.shape_cast %75 : vector<1x8x24xf32> to vector<8x24xf32>
    %c8 = arith.constant 8 : index
    %c0_96 = arith.constant 0 : index
    %77 = vector.load %arg9[%c8, %c0_96] : memref<32x600xf32, #tpu.memory_space<vmem>>, vector<8x24xf32>
    tpu.vector_store %arg9[%c8, %c0_96], %76 {strides = array<i32>} : memref<32x600xf32, #tpu.memory_space<vmem>>, vector<8x24xf32>,
    %c0_97 = arith.constant 0 : index
    %c0_98 = arith.constant 0 : index
    %c81_99 = arith.constant 81 : index
    %78 = vector.load %arg1[%c0_97, %c0_98, %c81_99] : memref<1x36x108xf32, #tpu.memory_space<vmem>>, vector<1x8x24xf32>
    %79 = vector.shape_cast %78 : vector<1x8x24xf32> to vector<8x24xf32>
    %c8_100 = arith.constant 8 : index
    %c24_101 = arith.constant 24 : index
    %80 = vector.load %arg9[%c8_100, %c24_101] : memref<32x600xf32, #tpu.memory_space<vmem>>, vector<8x24xf32>
    tpu.vector_store %arg9[%c8_100, %c24_101], %79 {strides = array<i32>} : memref<32x600xf32, #tpu.memory_space<vmem>>, vector<8x24xf32>,
    %c0_102 = arith.constant 0 : index
    %c0_103 = arith.constant 0 : index
    %c3_104 = arith.constant 3 : index
    %81 = vector.load %arg1[%c0_102, %c0_103, %c3_104] : memref<1x36x108xf32, #tpu.memory_space<vmem>>, vector<1x8x24xf32>
    %82 = vector.shape_cast %81 : vector<1x8x24xf32> to vector<8x24xf32>
    %c8_105 = arith.constant 8 : index
    %c48_106 = arith.constant 48 : index
    %83 = vector.load %arg9[%c8_105, %c48_106] : memref<32x600xf32, #tpu.memory_space<vmem>>, vector<8x24xf32>
    tpu.vector_store %arg9[%c8_105, %c48_106], %82 {strides = array<i32>} : memref<32x600xf32, #tpu.memory_space<vmem>>, vector<8x24xf32>,
    %c0_107 = arith.constant 0 : index
    %c0_108 = arith.constant 0 : index
    %c30 = arith.constant 30 : index
    %84 = vector.load %arg1[%c0_107, %c0_108, %c30] : memref<1x36x108xf32, #tpu.memory_space<vmem>>, vector<1x8x24xf32>
    %85 = vector.shape_cast %84 : vector<1x8x24xf32> to vector<8x24xf32>
    %c8_109 = arith.constant 8 : index
    %c72_110 = arith.constant 72 : index
    %86 = vector.load %arg9[%c8_109, %c72_110] : memref<32x600xf32, #tpu.memory_space<vmem>>, vector<8x24xf32>
    tpu.vector_store %arg9[%c8_109, %c72_110], %85 {strides = array<i32>} : memref<32x600xf32, #tpu.memory_space<vmem>>, vector<8x24xf32>,
    %c0_111 = arith.constant 0 : index
    %c0_112 = arith.constant 0 : index
    %c57 = arith.constant 57 : index
    %87 = vector.load %arg1[%c0_111, %c0_112, %c57] : memref<1x36x108xf32, #tpu.memory_space<vmem>>, vector<1x8x24xf32>
    %88 = vector.shape_cast %87 : vector<1x8x24xf32> to vector<8x24xf32>
    %c8_113 = arith.constant 8 : index
    %c96_114 = arith.constant 96 : index
    %89 = vector.load %arg9[%c8_113, %c96_114] : memref<32x600xf32, #tpu.memory_space<vmem>>, vector<8x24xf32>
    tpu.vector_store %arg9[%c8_113, %c96_114], %88 {strides = array<i32>} : memref<32x600xf32, #tpu.memory_space<vmem>>, vector<8x24xf32>,
    %c0_115 = arith.constant 0 : index
    %c9_116 = arith.constant 9 : index
    %c54_117 = arith.constant 54 : index
    %90 = vector.load %arg1[%c0_115, %c9_116, %c54_117] : memref<1x36x108xf32, #tpu.memory_space<vmem>>, vector<1x8x24xf32>
    %91 = vector.shape_cast %90 : vector<1x8x24xf32> to vector<8x24xf32>
    %c8_118 = arith.constant 8 : index
    %c120_119 = arith.constant 120 : index
    %92 = vector.load %arg9[%c8_118, %c120_119] : memref<32x600xf32, #tpu.memory_space<vmem>>, vector<8x24xf32>
    tpu.vector_store %arg9[%c8_118, %c120_119], %91 {strides = array<i32>} : memref<32x600xf32, #tpu.memory_space<vmem>>, vector<8x24xf32>,
    %c0_120 = arith.constant 0 : index
    %c9_121 = arith.constant 9 : index
    %c81_122 = arith.constant 81 : index
    %93 = vector.load %arg1[%c0_120, %c9_121, %c81_122] : memref<1x36x108xf32, #tpu.memory_space<vmem>>, vector<1x8x24xf32>
    %94 = vector.shape_cast %93 : vector<1x8x24xf32> to vector<8x24xf32>
    %c8_123 = arith.constant 8 : index
    %c144_124 = arith.constant 144 : index
    %95 = vector.load %arg9[%c8_123, %c144_124] : memref<32x600xf32, #tpu.memory_space<vmem>>, vector<8x24xf32>
    tpu.vector_store %arg9[%c8_123, %c144_124], %94 {strides = array<i32>} : memref<32x600xf32, #tpu.memory_space<vmem>>, vector<8x24xf32>,
    %c0_125 = arith.constant 0 : index
    %c9_126 = arith.constant 9 : index
    %c3_127 = arith.constant 3 : index
    %96 = vector.load %arg1[%c0_125, %c9_126, %c3_127] : memref<1x36x108xf32, #tpu.memory_space<vmem>>, vector<1x8x24xf32>
    %97 = vector.shape_cast %96 : vector<1x8x24xf32> to vector<8x24xf32>
    %c8_128 = arith.constant 8 : index
    %c168_129 = arith.constant 168 : index
    %98 = vector.load %arg9[%c8_128, %c168_129] : memref<32x600xf32, #tpu.memory_space<vmem>>, vector<8x24xf32>
    tpu.vector_store %arg9[%c8_128, %c168_129], %97 {strides = array<i32>} : memref<32x600xf32, #tpu.memory_space<vmem>>, vector<8x24xf32>,
    %c0_130 = arith.constant 0 : index
    %c9_131 = arith.constant 9 : index
    %c30_132 = arith.constant 30 : index
    %99 = vector.load %arg1[%c0_130, %c9_131, %c30_132] : memref<1x36x108xf32, #tpu.memory_space<vmem>>, vector<1x8x24xf32>
    %100 = vector.shape_cast %99 : vector<1x8x24xf32> to vector<8x24xf32>
    %c8_133 = arith.constant 8 : index
    %c192_134 = arith.constant 192 : index
    %101 = vector.load %arg9[%c8_133, %c192_134] : memref<32x600xf32, #tpu.memory_space<vmem>>, vector<8x24xf32>
    tpu.vector_store %arg9[%c8_133, %c192_134], %100 {strides = array<i32>} : memref<32x600xf32, #tpu.memory_space<vmem>>, vector<8x24xf32>,
    %c0_135 = arith.constant 0 : index
    %c9_136 = arith.constant 9 : index
    %c57_137 = arith.constant 57 : index
    %102 = vector.load %arg1[%c0_135, %c9_136, %c57_137] : memref<1x36x108xf32, #tpu.memory_space<vmem>>, vector<1x8x24xf32>
    %103 = vector.shape_cast %102 : vector<1x8x24xf32> to vector<8x24xf32>
    %c8_138 = arith.constant 8 : index
    %c216_139 = arith.constant 216 : index
    %104 = vector.load %arg9[%c8_138, %c216_139] : memref<32x600xf32, #tpu.memory_space<vmem>>, vector<8x24xf32>
    tpu.vector_store %arg9[%c8_138, %c216_139], %103 {strides = array<i32>} : memref<32x600xf32, #tpu.memory_space<vmem>>, vector<8x24xf32>,
    %c0_140 = arith.constant 0 : index
    %c18_141 = arith.constant 18 : index
    %c54_142 = arith.constant 54 : index
    %105 = vector.load %arg1[%c0_140, %c18_141, %c54_142] : memref<1x36x108xf32, #tpu.memory_space<vmem>>, vector<1x8x24xf32>
    %106 = vector.shape_cast %105 : vector<1x8x24xf32> to vector<8x24xf32>
    %c8_143 = arith.constant 8 : index
    %c240_144 = arith.constant 240 : index
    %107 = vector.load %arg9[%c8_143, %c240_144] : memref<32x600xf32, #tpu.memory_space<vmem>>, vector<8x24xf32>
    tpu.vector_store %arg9[%c8_143, %c240_144], %106 {strides = array<i32>} : memref<32x600xf32, #tpu.memory_space<vmem>>, vector<8x24xf32>,
    %c0_145 = arith.constant 0 : index
    %c18_146 = arith.constant 18 : index
    %c81_147 = arith.constant 81 : index
    %108 = vector.load %arg1[%c0_145, %c18_146, %c81_147] : memref<1x36x108xf32, #tpu.memory_space<vmem>>, vector<1x8x24xf32>
    %109 = vector.shape_cast %108 : vector<1x8x24xf32> to vector<8x24xf32>
    %c8_148 = arith.constant 8 : index
    %c264_149 = arith.constant 264 : index
    %110 = vector.load %arg9[%c8_148, %c264_149] : memref<32x600xf32, #tpu.memory_space<vmem>>, vector<8x24xf32>
    tpu.vector_store %arg9[%c8_148, %c264_149], %109 {strides = array<i32>} : memref<32x600xf32, #tpu.memory_space<vmem>>, vector<8x24xf32>,
    %c0_150 = arith.constant 0 : index
    %c18_151 = arith.constant 18 : index
    %c3_152 = arith.constant 3 : index
    %111 = vector.load %arg1[%c0_150, %c18_151, %c3_152] : memref<1x36x108xf32, #tpu.memory_space<vmem>>, vector<1x8x24xf32>
    %112 = vector.shape_cast %111 : vector<1x8x24xf32> to vector<8x24xf32>
    %c8_153 = arith.constant 8 : index
    %c288_154 = arith.constant 288 : index
    %113 = vector.load %arg9[%c8_153, %c288_154] : memref<32x600xf32, #tpu.memory_space<vmem>>, vector<8x24xf32>
    tpu.vector_store %arg9[%c8_153, %c288_154], %112 {strides = array<i32>} : memref<32x600xf32, #tpu.memory_space<vmem>>, vector<8x24xf32>,
    %c0_155 = arith.constant 0 : index
    %c18_156 = arith.constant 18 : index
    %c30_157 = arith.constant 30 : index
    %114 = vector.load %arg1[%c0_155, %c18_156, %c30_157] : memref<1x36x108xf32, #tpu.memory_space<vmem>>, vector<1x8x24xf32>
    %115 = vector.shape_cast %114 : vector<1x8x24xf32> to vector<8x24xf32>
    %c8_158 = arith.constant 8 : index
    %c312_159 = arith.constant 312 : index
    %116 = vector.load %arg9[%c8_158, %c312_159] : memref<32x600xf32, #tpu.memory_space<vmem>>, vector<8x24xf32>
    tpu.vector_store %arg9[%c8_158, %c312_159], %115 {strides = array<i32>} : memref<32x600xf32, #tpu.memory_space<vmem>>, vector<8x24xf32>,
    %c0_160 = arith.constant 0 : index
    %c18_161 = arith.constant 18 : index
    %c57_162 = arith.constant 57 : index
    %117 = vector.load %arg1[%c0_160, %c18_161, %c57_162] : memref<1x36x108xf32, #tpu.memory_space<vmem>>, vector<1x8x24xf32>
    %118 = vector.shape_cast %117 : vector<1x8x24xf32> to vector<8x24xf32>
    %c8_163 = arith.constant 8 : index
    %c336_164 = arith.constant 336 : index
    %119 = vector.load %arg9[%c8_163, %c336_164] : memref<32x600xf32, #tpu.memory_space<vmem>>, vector<8x24xf32>
    tpu.vector_store %arg9[%c8_163, %c336_164], %118 {strides = array<i32>} : memref<32x600xf32, #tpu.memory_space<vmem>>, vector<8x24xf32>,
    %c0_165 = arith.constant 0 : index
    %c27_166 = arith.constant 27 : index
    %c54_167 = arith.constant 54 : index
    %120 = vector.load %arg1[%c0_165, %c27_166, %c54_167] : memref<1x36x108xf32, #tpu.memory_space<vmem>>, vector<1x8x24xf32>
    %121 = vector.shape_cast %120 : vector<1x8x24xf32> to vector<8x24xf32>
    %c8_168 = arith.constant 8 : index
    %c360_169 = arith.constant 360 : index
    %122 = vector.load %arg9[%c8_168, %c360_169] : memref<32x600xf32, #tpu.memory_space<vmem>>, vector<8x24xf32>
    tpu.vector_store %arg9[%c8_168, %c360_169], %121 {strides = array<i32>} : memref<32x600xf32, #tpu.memory_space<vmem>>, vector<8x24xf32>,
    %c0_170 = arith.constant 0 : index
    %c27_171 = arith.constant 27 : index
    %c81_172 = arith.constant 81 : index
    %123 = vector.load %arg1[%c0_170, %c27_171, %c81_172] : memref<1x36x108xf32, #tpu.memory_space<vmem>>, vector<1x8x24xf32>
    %124 = vector.shape_cast %123 : vector<1x8x24xf32> to vector<8x24xf32>
    %c8_173 = arith.constant 8 : index
    %c384_174 = arith.constant 384 : index
    %125 = vector.load %arg9[%c8_173, %c384_174] : memref<32x600xf32, #tpu.memory_space<vmem>>, vector<8x24xf32>
    tpu.vector_store %arg9[%c8_173, %c384_174], %124 {strides = array<i32>} : memref<32x600xf32, #tpu.memory_space<vmem>>, vector<8x24xf32>,
    %c0_175 = arith.constant 0 : index
    %c27_176 = arith.constant 27 : index
    %c3_177 = arith.constant 3 : index
    %126 = vector.load %arg1[%c0_175, %c27_176, %c3_177] : memref<1x36x108xf32, #tpu.memory_space<vmem>>, vector<1x8x24xf32>
    %127 = vector.shape_cast %126 : vector<1x8x24xf32> to vector<8x24xf32>
    %c8_178 = arith.constant 8 : index
    %c408_179 = arith.constant 408 : index
    %128 = vector.load %arg9[%c8_178, %c408_179] : memref<32x600xf32, #tpu.memory_space<vmem>>, vector<8x24xf32>
    tpu.vector_store %arg9[%c8_178, %c408_179], %127 {strides = array<i32>} : memref<32x600xf32, #tpu.memory_space<vmem>>, vector<8x24xf32>,
    %c0_180 = arith.constant 0 : index
    %c27_181 = arith.constant 27 : index
    %c30_182 = arith.constant 30 : index
    %129 = vector.load %arg1[%c0_180, %c27_181, %c30_182] : memref<1x36x108xf32, #tpu.memory_space<vmem>>, vector<1x8x24xf32>
    %130 = vector.shape_cast %129 : vector<1x8x24xf32> to vector<8x24xf32>
    %c8_183 = arith.constant 8 : index
    %c432_184 = arith.constant 432 : index
    %131 = vector.load %arg9[%c8_183, %c432_184] : memref<32x600xf32, #tpu.memory_space<vmem>>, vector<8x24xf32>
    tpu.vector_store %arg9[%c8_183, %c432_184], %130 {strides = array<i32>} : memref<32x600xf32, #tpu.memory_space<vmem>>, vector<8x24xf32>,
    %c0_185 = arith.constant 0 : index
    %c27_186 = arith.constant 27 : index
    %c57_187 = arith.constant 57 : index
    %132 = vector.load %arg1[%c0_185, %c27_186, %c57_187] : memref<1x36x108xf32, #tpu.memory_space<vmem>>, vector<1x8x24xf32>
    %133 = vector.shape_cast %132 : vector<1x8x24xf32> to vector<8x24xf32>
    %c8_188 = arith.constant 8 : index
    %c456_189 = arith.constant 456 : index
    %134 = vector.load %arg9[%c8_188, %c456_189] : memref<32x600xf32, #tpu.memory_space<vmem>>, vector<8x24xf32>
    tpu.vector_store %arg9[%c8_188, %c456_189], %133 {strides = array<i32>} : memref<32x600xf32, #tpu.memory_space<vmem>>, vector<8x24xf32>,
    %c0_190 = arith.constant 0 : index
    %c1_191 = arith.constant 1 : index
    %c54_192 = arith.constant 54 : index
    %135 = vector.load %arg1[%c0_190, %c1_191, %c54_192] : memref<1x36x108xf32, #tpu.memory_space<vmem>>, vector<1x8x24xf32>
    %136 = vector.shape_cast %135 : vector<1x8x24xf32> to vector<8x24xf32>
    %c8_193 = arith.constant 8 : index
    %c480_194 = arith.constant 480 : index
    %137 = vector.load %arg9[%c8_193, %c480_194] : memref<32x600xf32, #tpu.memory_space<vmem>>, vector<8x24xf32>
    tpu.vector_store %arg9[%c8_193, %c480_194], %136 {strides = array<i32>} : memref<32x600xf32, #tpu.memory_space<vmem>>, vector<8x24xf32>,
    %c0_195 = arith.constant 0 : index
    %c1_196 = arith.constant 1 : index
    %c81_197 = arith.constant 81 : index
    %138 = vector.load %arg1[%c0_195, %c1_196, %c81_197] : memref<1x36x108xf32, #tpu.memory_space<vmem>>, vector<1x8x24xf32>
    %139 = vector.shape_cast %138 : vector<1x8x24xf32> to vector<8x24xf32>
    %c8_198 = arith.constant 8 : index
    %c504_199 = arith.constant 504 : index
    %140 = vector.load %arg9[%c8_198, %c504_199] : memref<32x600xf32, #tpu.memory_space<vmem>>, vector<8x24xf32>
    tpu.vector_store %arg9[%c8_198, %c504_199], %139 {strides = array<i32>} : memref<32x600xf32, #tpu.memory_space<vmem>>, vector<8x24xf32>,
    %c0_200 = arith.constant 0 : index
    %c1_201 = arith.constant 1 : index
    %c3_202 = arith.constant 3 : index
    %141 = vector.load %arg1[%c0_200, %c1_201, %c3_202] : memref<1x36x108xf32, #tpu.memory_space<vmem>>, vector<1x8x24xf32>
    %142 = vector.shape_cast %141 : vector<1x8x24xf32> to vector<8x24xf32>
    %c8_203 = arith.constant 8 : index
    %c528_204 = arith.constant 528 : index
    %143 = vector.load %arg9[%c8_203, %c528_204] : memref<32x600xf32, #tpu.memory_space<vmem>>, vector<8x24xf32>
    tpu.vector_store %arg9[%c8_203, %c528_204], %142 {strides = array<i32>} : memref<32x600xf32, #tpu.memory_space<vmem>>, vector<8x24xf32>,
    %c0_205 = arith.constant 0 : index
    %c1_206 = arith.constant 1 : index
    %c30_207 = arith.constant 30 : index
    %144 = vector.load %arg1[%c0_205, %c1_206, %c30_207] : memref<1x36x108xf32, #tpu.memory_space<vmem>>, vector<1x8x24xf32>
    %145 = vector.shape_cast %144 : vector<1x8x24xf32> to vector<8x24xf32>
    %c8_208 = arith.constant 8 : index
    %c552_209 = arith.constant 552 : index
    %146 = vector.load %arg9[%c8_208, %c552_209] : memref<32x600xf32, #tpu.memory_space<vmem>>, vector<8x24xf32>
    tpu.vector_store %arg9[%c8_208, %c552_209], %145 {strides = array<i32>} : memref<32x600xf32, #tpu.memory_space<vmem>>, vector<8x24xf32>,
    %c0_210 = arith.constant 0 : index
    %c1_211 = arith.constant 1 : index
    %c57_212 = arith.constant 57 : index
    %147 = vector.load %arg1[%c0_210, %c1_211, %c57_212] : memref<1x36x108xf32, #tpu.memory_space<vmem>>, vector<1x8x24xf32>
    %148 = vector.shape_cast %147 : vector<1x8x24xf32> to vector<8x24xf32>
    %c8_213 = arith.constant 8 : index
    %c576_214 = arith.constant 576 : index
    %149 = vector.load %arg9[%c8_213, %c576_214] : memref<32x600xf32, #tpu.memory_space<vmem>>, vector<8x24xf32>
    tpu.vector_store %arg9[%c8_213, %c576_214], %148 {strides = array<i32>} : memref<32x600xf32, #tpu.memory_space<vmem>>, vector<8x24xf32>,
    %c0_215 = arith.constant 0 : index
    %c18_216 = arith.constant 18 : index
    %c0_217 = arith.constant 0 : index
    %150 = vector.load %arg1[%c0_215, %c18_216, %c0_217] : memref<1x36x108xf32, #tpu.memory_space<vmem>>, vector<1x8x24xf32>
    %151 = vector.shape_cast %150 : vector<1x8x24xf32> to vector<8x24xf32>
    %c16 = arith.constant 16 : index
    %c0_218 = arith.constant 0 : index
    %152 = vector.load %arg9[%c16, %c0_218] : memref<32x600xf32, #tpu.memory_space<vmem>>, vector<8x24xf32>
    tpu.vector_store %arg9[%c16, %c0_218], %151 {strides = array<i32>} : memref<32x600xf32, #tpu.memory_space<vmem>>, vector<8x24xf32>,
    %c0_219 = arith.constant 0 : index
    %c18_220 = arith.constant 18 : index
    %c27_221 = arith.constant 27 : index
    %153 = vector.load %arg1[%c0_219, %c18_220, %c27_221] : memref<1x36x108xf32, #tpu.memory_space<vmem>>, vector<1x8x24xf32>
    %154 = vector.shape_cast %153 : vector<1x8x24xf32> to vector<8x24xf32>
    %c16_222 = arith.constant 16 : index
    %c24_223 = arith.constant 24 : index
    %155 = vector.load %arg9[%c16_222, %c24_223] : memref<32x600xf32, #tpu.memory_space<vmem>>, vector<8x24xf32>
    tpu.vector_store %arg9[%c16_222, %c24_223], %154 {strides = array<i32>} : memref<32x600xf32, #tpu.memory_space<vmem>>, vector<8x24xf32>,
    %c0_224 = arith.constant 0 : index
    %c18_225 = arith.constant 18 : index
    %c54_226 = arith.constant 54 : index
    %156 = vector.load %arg1[%c0_224, %c18_225, %c54_226] : memref<1x36x108xf32, #tpu.memory_space<vmem>>, vector<1x8x24xf32>
    %157 = vector.shape_cast %156 : vector<1x8x24xf32> to vector<8x24xf32>
    %c16_227 = arith.constant 16 : index
    %c48_228 = arith.constant 48 : index
    %158 = vector.load %arg9[%c16_227, %c48_228] : memref<32x600xf32, #tpu.memory_space<vmem>>, vector<8x24xf32>
    tpu.vector_store %arg9[%c16_227, %c48_228], %157 {strides = array<i32>} : memref<32x600xf32, #tpu.memory_space<vmem>>, vector<8x24xf32>,
    %c0_229 = arith.constant 0 : index
    %c18_230 = arith.constant 18 : index
    %c81_231 = arith.constant 81 : index
    %159 = vector.load %arg1[%c0_229, %c18_230, %c81_231] : memref<1x36x108xf32, #tpu.memory_space<vmem>>, vector<1x8x24xf32>
    %160 = vector.shape_cast %159 : vector<1x8x24xf32> to vector<8x24xf32>
    %c16_232 = arith.constant 16 : index
    %c72_233 = arith.constant 72 : index
    %161 = vector.load %arg9[%c16_232, %c72_233] : memref<32x600xf32, #tpu.memory_space<vmem>>, vector<8x24xf32>
    tpu.vector_store %arg9[%c16_232, %c72_233], %160 {strides = array<i32>} : memref<32x600xf32, #tpu.memory_space<vmem>>, vector<8x24xf32>,
    %c0_234 = arith.constant 0 : index
    %c18_235 = arith.constant 18 : index
    %c3_236 = arith.constant 3 : index
    %162 = vector.load %arg1[%c0_234, %c18_235, %c3_236] : memref<1x36x108xf32, #tpu.memory_space<vmem>>, vector<1x8x24xf32>
    %163 = vector.shape_cast %162 : vector<1x8x24xf32> to vector<8x24xf32>
    %c16_237 = arith.constant 16 : index
    %c96_238 = arith.constant 96 : index
    %164 = vector.load %arg9[%c16_237, %c96_238] : memref<32x600xf32, #tpu.memory_space<vmem>>, vector<8x24xf32>
    tpu.vector_store %arg9[%c16_237, %c96_238], %163 {strides = array<i32>} : memref<32x600xf32, #tpu.memory_space<vmem>>, vector<8x24xf32>,
    %c0_239 = arith.constant 0 : index
    %c27_240 = arith.constant 27 : index
    %c0_241 = arith.constant 0 : index
    %165 = vector.load %arg1[%c0_239, %c27_240, %c0_241] : memref<1x36x108xf32, #tpu.memory_space<vmem>>, vector<1x8x24xf32>
    %166 = vector.shape_cast %165 : vector<1x8x24xf32> to vector<8x24xf32>
    %c16_242 = arith.constant 16 : index
    %c120_243 = arith.constant 120 : index
    %167 = vector.load %arg9[%c16_242, %c120_243] : memref<32x600xf32, #tpu.memory_space<vmem>>, vector<8x24xf32>
    tpu.vector_store %arg9[%c16_242, %c120_243], %166 {strides = array<i32>} : memref<32x600xf32, #tpu.memory_space<vmem>>, vector<8x24xf32>,
    %c0_244 = arith.constant 0 : index
    %c27_245 = arith.constant 27 : index
    %c27_246 = arith.constant 27 : index
    %168 = vector.load %arg1[%c0_244, %c27_245, %c27_246] : memref<1x36x108xf32, #tpu.memory_space<vmem>>, vector<1x8x24xf32>
    %169 = vector.shape_cast %168 : vector<1x8x24xf32> to vector<8x24xf32>
    %c16_247 = arith.constant 16 : index
    %c144_248 = arith.constant 144 : index
    %170 = vector.load %arg9[%c16_247, %c144_248] : memref<32x600xf32, #tpu.memory_space<vmem>>, vector<8x24xf32>
    tpu.vector_store %arg9[%c16_247, %c144_248], %169 {strides = array<i32>} : memref<32x600xf32, #tpu.memory_space<vmem>>, vector<8x24xf32>,
    %c0_249 = arith.constant 0 : index
    %c27_250 = arith.constant 27 : index
    %c54_251 = arith.constant 54 : index
    %171 = vector.load %arg1[%c0_249, %c27_250, %c54_251] : memref<1x36x108xf32, #tpu.memory_space<vmem>>, vector<1x8x24xf32>
    %172 = vector.shape_cast %171 : vector<1x8x24xf32> to vector<8x24xf32>
    %c16_252 = arith.constant 16 : index
    %c168_253 = arith.constant 168 : index
    %173 = vector.load %arg9[%c16_252, %c168_253] : memref<32x600xf32, #tpu.memory_space<vmem>>, vector<8x24xf32>
    tpu.vector_store %arg9[%c16_252, %c168_253], %172 {strides = array<i32>} : memref<32x600xf32, #tpu.memory_space<vmem>>, vector<8x24xf32>,
    %c0_254 = arith.constant 0 : index
    %c27_255 = arith.constant 27 : index
    %c81_256 = arith.constant 81 : index
    %174 = vector.load %arg1[%c0_254, %c27_255, %c81_256] : memref<1x36x108xf32, #tpu.memory_space<vmem>>, vector<1x8x24xf32>
    %175 = vector.shape_cast %174 : vector<1x8x24xf32> to vector<8x24xf32>
    %c16_257 = arith.constant 16 : index
    %c192_258 = arith.constant 192 : index
    %176 = vector.load %arg9[%c16_257, %c192_258] : memref<32x600xf32, #tpu.memory_space<vmem>>, vector<8x24xf32>
    tpu.vector_store %arg9[%c16_257, %c192_258], %175 {strides = array<i32>} : memref<32x600xf32, #tpu.memory_space<vmem>>, vector<8x24xf32>,
    %c0_259 = arith.constant 0 : index
    %c27_260 = arith.constant 27 : index
    %c3_261 = arith.constant 3 : index
    %177 = vector.load %arg1[%c0_259, %c27_260, %c3_261] : memref<1x36x108xf32, #tpu.memory_space<vmem>>, vector<1x8x24xf32>
    %178 = vector.shape_cast %177 : vector<1x8x24xf32> to vector<8x24xf32>
    %c16_262 = arith.constant 16 : index
    %c216_263 = arith.constant 216 : index
    %179 = vector.load %arg9[%c16_262, %c216_263] : memref<32x600xf32, #tpu.memory_space<vmem>>, vector<8x24xf32>
    tpu.vector_store %arg9[%c16_262, %c216_263], %178 {strides = array<i32>} : memref<32x600xf32, #tpu.memory_space<vmem>>, vector<8x24xf32>,
    %c0_264 = arith.constant 0 : index
    %c1_265 = arith.constant 1 : index
    %c0_266 = arith.constant 0 : index
    %180 = vector.load %arg1[%c0_264, %c1_265, %c0_266] : memref<1x36x108xf32, #tpu.memory_space<vmem>>, vector<1x8x24xf32>
    %181 = vector.shape_cast %180 : vector<1x8x24xf32> to vector<8x24xf32>
    %c16_267 = arith.constant 16 : index
    %c240_268 = arith.constant 240 : index
    %182 = vector.load %arg9[%c16_267, %c240_268] : memref<32x600xf32, #tpu.memory_space<vmem>>, vector<8x24xf32>
    tpu.vector_store %arg9[%c16_267, %c240_268], %181 {strides = array<i32>} : memref<32x600xf32, #tpu.memory_space<vmem>>, vector<8x24xf32>,
    %c0_269 = arith.constant 0 : index
    %c1_270 = arith.constant 1 : index
    %c27_271 = arith.constant 27 : index
    %183 = vector.load %arg1[%c0_269, %c1_270, %c27_271] : memref<1x36x108xf32, #tpu.memory_space<vmem>>, vector<1x8x24xf32>
    %184 = vector.shape_cast %183 : vector<1x8x24xf32> to vector<8x24xf32>
    %c16_272 = arith.constant 16 : index
    %c264_273 = arith.constant 264 : index
    %185 = vector.load %arg9[%c16_272, %c264_273] : memref<32x600xf32, #tpu.memory_space<vmem>>, vector<8x24xf32>
    tpu.vector_store %arg9[%c16_272, %c264_273], %184 {strides = array<i32>} : memref<32x600xf32, #tpu.memory_space<vmem>>, vector<8x24xf32>,
    %c0_274 = arith.constant 0 : index
    %c1_275 = arith.constant 1 : index
    %c54_276 = arith.constant 54 : index
    %186 = vector.load %arg1[%c0_274, %c1_275, %c54_276] : memref<1x36x108xf32, #tpu.memory_space<vmem>>, vector<1x8x24xf32>
    %187 = vector.shape_cast %186 : vector<1x8x24xf32> to vector<8x24xf32>
    %c16_277 = arith.constant 16 : index
    %c288_278 = arith.constant 288 : index
    %188 = vector.load %arg9[%c16_277, %c288_278] : memref<32x600xf32, #tpu.memory_space<vmem>>, vector<8x24xf32>
    tpu.vector_store %arg9[%c16_277, %c288_278], %187 {strides = array<i32>} : memref<32x600xf32, #tpu.memory_space<vmem>>, vector<8x24xf32>,
    %c0_279 = arith.constant 0 : index
    %c1_280 = arith.constant 1 : index
    %c81_281 = arith.constant 81 : index
    %189 = vector.load %arg1[%c0_279, %c1_280, %c81_281] : memref<1x36x108xf32, #tpu.memory_space<vmem>>, vector<1x8x24xf32>
    %190 = vector.shape_cast %189 : vector<1x8x24xf32> to vector<8x24xf32>
    %c16_282 = arith.constant 16 : index
    %c312_283 = arith.constant 312 : index
    %191 = vector.load %arg9[%c16_282, %c312_283] : memref<32x600xf32, #tpu.memory_space<vmem>>, vector<8x24xf32>
    tpu.vector_store %arg9[%c16_282, %c312_283], %190 {strides = array<i32>} : memref<32x600xf32, #tpu.memory_space<vmem>>, vector<8x24xf32>,
    %c0_284 = arith.constant 0 : index
    %c1_285 = arith.constant 1 : index
    %c3_286 = arith.constant 3 : index
    %192 = vector.load %arg1[%c0_284, %c1_285, %c3_286] : memref<1x36x108xf32, #tpu.memory_space<vmem>>, vector<1x8x24xf32>
    %193 = vector.shape_cast %192 : vector<1x8x24xf32> to vector<8x24xf32>
    %c16_287 = arith.constant 16 : index
    %c336_288 = arith.constant 336 : index
    %194 = vector.load %arg9[%c16_287, %c336_288] : memref<32x600xf32, #tpu.memory_space<vmem>>, vector<8x24xf32>
    tpu.vector_store %arg9[%c16_287, %c336_288], %193 {strides = array<i32>} : memref<32x600xf32, #tpu.memory_space<vmem>>, vector<8x24xf32>,
    %c0_289 = arith.constant 0 : index
    %c10 = arith.constant 10 : index
    %c0_290 = arith.constant 0 : index
    %195 = vector.load %arg1[%c0_289, %c10, %c0_290] : memref<1x36x108xf32, #tpu.memory_space<vmem>>, vector<1x8x24xf32>
    %196 = vector.shape_cast %195 : vector<1x8x24xf32> to vector<8x24xf32>
    %c16_291 = arith.constant 16 : index
    %c360_292 = arith.constant 360 : index
    %197 = vector.load %arg9[%c16_291, %c360_292] : memref<32x600xf32, #tpu.memory_space<vmem>>, vector<8x24xf32>
    tpu.vector_store %arg9[%c16_291, %c360_292], %196 {strides = array<i32>} : memref<32x600xf32, #tpu.memory_space<vmem>>, vector<8x24xf32>,
    %c0_293 = arith.constant 0 : index
    %c10_294 = arith.constant 10 : index
    %c27_295 = arith.constant 27 : index
    %198 = vector.load %arg1[%c0_293, %c10_294, %c27_295] : memref<1x36x108xf32, #tpu.memory_space<vmem>>, vector<1x8x24xf32>
    %199 = vector.shape_cast %198 : vector<1x8x24xf32> to vector<8x24xf32>
    %c16_296 = arith.constant 16 : index
    %c384_297 = arith.constant 384 : index
    %200 = vector.load %arg9[%c16_296, %c384_297] : memref<32x600xf32, #tpu.memory_space<vmem>>, vector<8x24xf32>
    tpu.vector_store %arg9[%c16_296, %c384_297], %199 {strides = array<i32>} : memref<32x600xf32, #tpu.memory_space<vmem>>, vector<8x24xf32>,
    %c0_298 = arith.constant 0 : index
    %c10_299 = arith.constant 10 : index
    %c54_300 = arith.constant 54 : index
    %201 = vector.load %arg1[%c0_298, %c10_299, %c54_300] : memref<1x36x108xf32, #tpu.memory_space<vmem>>, vector<1x8x24xf32>
    %202 = vector.shape_cast %201 : vector<1x8x24xf32> to vector<8x24xf32>
    %c16_301 = arith.constant 16 : index
    %c408_302 = arith.constant 408 : index
    %203 = vector.load %arg9[%c16_301, %c408_302] : memref<32x600xf32, #tpu.memory_space<vmem>>, vector<8x24xf32>
    tpu.vector_store %arg9[%c16_301, %c408_302], %202 {strides = array<i32>} : memref<32x600xf32, #tpu.memory_space<vmem>>, vector<8x24xf32>,
    %c0_303 = arith.constant 0 : index
    %c10_304 = arith.constant 10 : index
    %c81_305 = arith.constant 81 : index
    %204 = vector.load %arg1[%c0_303, %c10_304, %c81_305] : memref<1x36x108xf32, #tpu.memory_space<vmem>>, vector<1x8x24xf32>
    %205 = vector.shape_cast %204 : vector<1x8x24xf32> to vector<8x24xf32>
    %c16_306 = arith.constant 16 : index
    %c432_307 = arith.constant 432 : index
    %206 = vector.load %arg9[%c16_306, %c432_307] : memref<32x600xf32, #tpu.memory_space<vmem>>, vector<8x24xf32>
    tpu.vector_store %arg9[%c16_306, %c432_307], %205 {strides = array<i32>} : memref<32x600xf32, #tpu.memory_space<vmem>>, vector<8x24xf32>,
    %c0_308 = arith.constant 0 : index
    %c10_309 = arith.constant 10 : index
    %c3_310 = arith.constant 3 : index
    %207 = vector.load %arg1[%c0_308, %c10_309, %c3_310] : memref<1x36x108xf32, #tpu.memory_space<vmem>>, vector<1x8x24xf32>
    %208 = vector.shape_cast %207 : vector<1x8x24xf32> to vector<8x24xf32>
    %c16_311 = arith.constant 16 : index
    %c456_312 = arith.constant 456 : index
    %209 = vector.load %arg9[%c16_311, %c456_312] : memref<32x600xf32, #tpu.memory_space<vmem>>, vector<8x24xf32>
    tpu.vector_store %arg9[%c16_311, %c456_312], %208 {strides = array<i32>} : memref<32x600xf32, #tpu.memory_space<vmem>>, vector<8x24xf32>,
    %c0_313 = arith.constant 0 : index
    %c19 = arith.constant 19 : index
    %c0_314 = arith.constant 0 : index
    %210 = vector.load %arg1[%c0_313, %c19, %c0_314] : memref<1x36x108xf32, #tpu.memory_space<vmem>>, vector<1x8x24xf32>
    %211 = vector.shape_cast %210 : vector<1x8x24xf32> to vector<8x24xf32>
    %c16_315 = arith.constant 16 : index
    %c480_316 = arith.constant 480 : index
    %212 = vector.load %arg9[%c16_315, %c480_316] : memref<32x600xf32, #tpu.memory_space<vmem>>, vector<8x24xf32>
    tpu.vector_store %arg9[%c16_315, %c480_316], %211 {strides = array<i32>} : memref<32x600xf32, #tpu.memory_space<vmem>>, vector<8x24xf32>,
    %c0_317 = arith.constant 0 : index
    %c19_318 = arith.constant 19 : index
    %c27_319 = arith.constant 27 : index
    %213 = vector.load %arg1[%c0_317, %c19_318, %c27_319] : memref<1x36x108xf32, #tpu.memory_space<vmem>>, vector<1x8x24xf32>
    %214 = vector.shape_cast %213 : vector<1x8x24xf32> to vector<8x24xf32>
    %c16_320 = arith.constant 16 : index
    %c504_321 = arith.constant 504 : index
    %215 = vector.load %arg9[%c16_320, %c504_321] : memref<32x600xf32, #tpu.memory_space<vmem>>, vector<8x24xf32>
    tpu.vector_store %arg9[%c16_320, %c504_321], %214 {strides = array<i32>} : memref<32x600xf32, #tpu.memory_space<vmem>>, vector<8x24xf32>,
    %c0_322 = arith.constant 0 : index
    %c19_323 = arith.constant 19 : index
    %c54_324 = arith.constant 54 : index
    %216 = vector.load %arg1[%c0_322, %c19_323, %c54_324] : memref<1x36x108xf32, #tpu.memory_space<vmem>>, vector<1x8x24xf32>
    %217 = vector.shape_cast %216 : vector<1x8x24xf32> to vector<8x24xf32>
    %c16_325 = arith.constant 16 : index
    %c528_326 = arith.constant 528 : index
    %218 = vector.load %arg9[%c16_325, %c528_326] : memref<32x600xf32, #tpu.memory_space<vmem>>, vector<8x24xf32>
    tpu.vector_store %arg9[%c16_325, %c528_326], %217 {strides = array<i32>} : memref<32x600xf32, #tpu.memory_space<vmem>>, vector<8x24xf32>,
    %c0_327 = arith.constant 0 : index
    %c19_328 = arith.constant 19 : index
    %c81_329 = arith.constant 81 : index
    %219 = vector.load %arg1[%c0_327, %c19_328, %c81_329] : memref<1x36x108xf32, #tpu.memory_space<vmem>>, vector<1x8x24xf32>
    %220 = vector.shape_cast %219 : vector<1x8x24xf32> to vector<8x24xf32>
    %c16_330 = arith.constant 16 : index
    %c552_331 = arith.constant 552 : index
    %221 = vector.load %arg9[%c16_330, %c552_331] : memref<32x600xf32, #tpu.memory_space<vmem>>, vector<8x24xf32>
    tpu.vector_store %arg9[%c16_330, %c552_331], %220 {strides = array<i32>} : memref<32x600xf32, #tpu.memory_space<vmem>>, vector<8x24xf32>,
    %c0_332 = arith.constant 0 : index
    %c19_333 = arith.constant 19 : index
    %c3_334 = arith.constant 3 : index
    %222 = vector.load %arg1[%c0_332, %c19_333, %c3_334] : memref<1x36x108xf32, #tpu.memory_space<vmem>>, vector<1x8x24xf32>
    %223 = vector.shape_cast %222 : vector<1x8x24xf32> to vector<8x24xf32>
    %c16_335 = arith.constant 16 : index
    %c576_336 = arith.constant 576 : index
    %224 = vector.load %arg9[%c16_335, %c576_336] : memref<32x600xf32, #tpu.memory_space<vmem>>, vector<8x24xf32>
    tpu.vector_store %arg9[%c16_335, %c576_336], %223 {strides = array<i32>} : memref<32x600xf32, #tpu.memory_space<vmem>>, vector<8x24xf32>,
    %c0_337 = arith.constant 0 : index
    %c18_338 = arith.constant 18 : index
    %c54_339 = arith.constant 54 : index
    %225 = vector.load %arg1[%c0_337, %c18_338, %c54_339] : memref<1x36x108xf32, #tpu.memory_space<vmem>>, vector<1x8x24xf32>
    %226 = vector.shape_cast %225 : vector<1x8x24xf32> to vector<8x24xf32>
    %c24_340 = arith.constant 24 : index
    %c0_341 = arith.constant 0 : index
    %227 = vector.load %arg9[%c24_340, %c0_341] : memref<32x600xf32, #tpu.memory_space<vmem>>, vector<8x24xf32>
    tpu.vector_store %arg9[%c24_340, %c0_341], %226 {strides = array<i32>} : memref<32x600xf32, #tpu.memory_space<vmem>>, vector<8x24xf32>,
    %c0_342 = arith.constant 0 : index
    %c18_343 = arith.constant 18 : index
    %c81_344 = arith.constant 81 : index
    %228 = vector.load %arg1[%c0_342, %c18_343, %c81_344] : memref<1x36x108xf32, #tpu.memory_space<vmem>>, vector<1x8x24xf32>
    %229 = vector.shape_cast %228 : vector<1x8x24xf32> to vector<8x24xf32>
    %c24_345 = arith.constant 24 : index
    %c24_346 = arith.constant 24 : index
    %230 = vector.load %arg9[%c24_345, %c24_346] : memref<32x600xf32, #tpu.memory_space<vmem>>, vector<8x24xf32>
    tpu.vector_store %arg9[%c24_345, %c24_346], %229 {strides = array<i32>} : memref<32x600xf32, #tpu.memory_space<vmem>>, vector<8x24xf32>,
    %c0_347 = arith.constant 0 : index
    %c18_348 = arith.constant 18 : index
    %c3_349 = arith.constant 3 : index
    %231 = vector.load %arg1[%c0_347, %c18_348, %c3_349] : memref<1x36x108xf32, #tpu.memory_space<vmem>>, vector<1x8x24xf32>
    %232 = vector.shape_cast %231 : vector<1x8x24xf32> to vector<8x24xf32>
    %c24_350 = arith.constant 24 : index
    %c48_351 = arith.constant 48 : index
    %233 = vector.load %arg9[%c24_350, %c48_351] : memref<32x600xf32, #tpu.memory_space<vmem>>, vector<8x24xf32>
    tpu.vector_store %arg9[%c24_350, %c48_351], %232 {strides = array<i32>} : memref<32x600xf32, #tpu.memory_space<vmem>>, vector<8x24xf32>,
    %c0_352 = arith.constant 0 : index
    %c18_353 = arith.constant 18 : index
    %c30_354 = arith.constant 30 : index
    %234 = vector.load %arg1[%c0_352, %c18_353, %c30_354] : memref<1x36x108xf32, #tpu.memory_space<vmem>>, vector<1x8x24xf32>
    %235 = vector.shape_cast %234 : vector<1x8x24xf32> to vector<8x24xf32>
    %c24_355 = arith.constant 24 : index
    %c72_356 = arith.constant 72 : index
    %236 = vector.load %arg9[%c24_355, %c72_356] : memref<32x600xf32, #tpu.memory_space<vmem>>, vector<8x24xf32>
    tpu.vector_store %arg9[%c24_355, %c72_356], %235 {strides = array<i32>} : memref<32x600xf32, #tpu.memory_space<vmem>>, vector<8x24xf32>,
    %c0_357 = arith.constant 0 : index
    %c18_358 = arith.constant 18 : index
    %c57_359 = arith.constant 57 : index
    %237 = vector.load %arg1[%c0_357, %c18_358, %c57_359] : memref<1x36x108xf32, #tpu.memory_space<vmem>>, vector<1x8x24xf32>
    %238 = vector.shape_cast %237 : vector<1x8x24xf32> to vector<8x24xf32>
    %c24_360 = arith.constant 24 : index
    %c96_361 = arith.constant 96 : index
    %239 = vector.load %arg9[%c24_360, %c96_361] : memref<32x600xf32, #tpu.memory_space<vmem>>, vector<8x24xf32>
    tpu.vector_store %arg9[%c24_360, %c96_361], %238 {strides = array<i32>} : memref<32x600xf32, #tpu.memory_space<vmem>>, vector<8x24xf32>,
    %c0_362 = arith.constant 0 : index
    %c27_363 = arith.constant 27 : index
    %c54_364 = arith.constant 54 : index
    %240 = vector.load %arg1[%c0_362, %c27_363, %c54_364] : memref<1x36x108xf32, #tpu.memory_space<vmem>>, vector<1x8x24xf32>
    %241 = vector.shape_cast %240 : vector<1x8x24xf32> to vector<8x24xf32>
    %c24_365 = arith.constant 24 : index
    %c120_366 = arith.constant 120 : index
    %242 = vector.load %arg9[%c24_365, %c120_366] : memref<32x600xf32, #tpu.memory_space<vmem>>, vector<8x24xf32>
    tpu.vector_store %arg9[%c24_365, %c120_366], %241 {strides = array<i32>} : memref<32x600xf32, #tpu.memory_space<vmem>>, vector<8x24xf32>,
    %c0_367 = arith.constant 0 : index
    %c27_368 = arith.constant 27 : index
    %c81_369 = arith.constant 81 : index
    %243 = vector.load %arg1[%c0_367, %c27_368, %c81_369] : memref<1x36x108xf32, #tpu.memory_space<vmem>>, vector<1x8x24xf32>
    %244 = vector.shape_cast %243 : vector<1x8x24xf32> to vector<8x24xf32>
    %c24_370 = arith.constant 24 : index
    %c144_371 = arith.constant 144 : index
    %245 = vector.load %arg9[%c24_370, %c144_371] : memref<32x600xf32, #tpu.memory_space<vmem>>, vector<8x24xf32>
    tpu.vector_store %arg9[%c24_370, %c144_371], %244 {strides = array<i32>} : memref<32x600xf32, #tpu.memory_space<vmem>>, vector<8x24xf32>,
    %c0_372 = arith.constant 0 : index
    %c27_373 = arith.constant 27 : index
    %c3_374 = arith.constant 3 : index
    %246 = vector.load %arg1[%c0_372, %c27_373, %c3_374] : memref<1x36x108xf32, #tpu.memory_space<vmem>>, vector<1x8x24xf32>
    %247 = vector.shape_cast %246 : vector<1x8x24xf32> to vector<8x24xf32>
    %c24_375 = arith.constant 24 : index
    %c168_376 = arith.constant 168 : index
    %248 = vector.load %arg9[%c24_375, %c168_376] : memref<32x600xf32, #tpu.memory_space<vmem>>, vector<8x24xf32>
    tpu.vector_store %arg9[%c24_375, %c168_376], %247 {strides = array<i32>} : memref<32x600xf32, #tpu.memory_space<vmem>>, vector<8x24xf32>,
    %c0_377 = arith.constant 0 : index
    %c27_378 = arith.constant 27 : index
    %c30_379 = arith.constant 30 : index
    %249 = vector.load %arg1[%c0_377, %c27_378, %c30_379] : memref<1x36x108xf32, #tpu.memory_space<vmem>>, vector<1x8x24xf32>
    %250 = vector.shape_cast %249 : vector<1x8x24xf32> to vector<8x24xf32>
    %c24_380 = arith.constant 24 : index
    %c192_381 = arith.constant 192 : index
    %251 = vector.load %arg9[%c24_380, %c192_381] : memref<32x600xf32, #tpu.memory_space<vmem>>, vector<8x24xf32>
    tpu.vector_store %arg9[%c24_380, %c192_381], %250 {strides = array<i32>} : memref<32x600xf32, #tpu.memory_space<vmem>>, vector<8x24xf32>,
    %c0_382 = arith.constant 0 : index
    %c27_383 = arith.constant 27 : index
    %c57_384 = arith.constant 57 : index
    %252 = vector.load %arg1[%c0_382, %c27_383, %c57_384] : memref<1x36x108xf32, #tpu.memory_space<vmem>>, vector<1x8x24xf32>
    %253 = vector.shape_cast %252 : vector<1x8x24xf32> to vector<8x24xf32>
    %c24_385 = arith.constant 24 : index
    %c216_386 = arith.constant 216 : index
    %254 = vector.load %arg9[%c24_385, %c216_386] : memref<32x600xf32, #tpu.memory_space<vmem>>, vector<8x24xf32>
    tpu.vector_store %arg9[%c24_385, %c216_386], %253 {strides = array<i32>} : memref<32x600xf32, #tpu.memory_space<vmem>>, vector<8x24xf32>,
    %c0_387 = arith.constant 0 : index
    %c1_388 = arith.constant 1 : index
    %c54_389 = arith.constant 54 : index
    %255 = vector.load %arg1[%c0_387, %c1_388, %c54_389] : memref<1x36x108xf32, #tpu.memory_space<vmem>>, vector<1x8x24xf32>
    %256 = vector.shape_cast %255 : vector<1x8x24xf32> to vector<8x24xf32>
    %c24_390 = arith.constant 24 : index
    %c240_391 = arith.constant 240 : index
    %257 = vector.load %arg9[%c24_390, %c240_391] : memref<32x600xf32, #tpu.memory_space<vmem>>, vector<8x24xf32>
    tpu.vector_store %arg9[%c24_390, %c240_391], %256 {strides = array<i32>} : memref<32x600xf32, #tpu.memory_space<vmem>>, vector<8x24xf32>,
    %c0_392 = arith.constant 0 : index
    %c1_393 = arith.constant 1 : index
    %c81_394 = arith.constant 81 : index
    %258 = vector.load %arg1[%c0_392, %c1_393, %c81_394] : memref<1x36x108xf32, #tpu.memory_space<vmem>>, vector<1x8x24xf32>
    %259 = vector.shape_cast %258 : vector<1x8x24xf32> to vector<8x24xf32>
    %c24_395 = arith.constant 24 : index
    %c264_396 = arith.constant 264 : index
    %260 = vector.load %arg9[%c24_395, %c264_396] : memref<32x600xf32, #tpu.memory_space<vmem>>, vector<8x24xf32>
    tpu.vector_store %arg9[%c24_395, %c264_396], %259 {strides = array<i32>} : memref<32x600xf32, #tpu.memory_space<vmem>>, vector<8x24xf32>,
    %c0_397 = arith.constant 0 : index
    %c1_398 = arith.constant 1 : index
    %c3_399 = arith.constant 3 : index
    %261 = vector.load %arg1[%c0_397, %c1_398, %c3_399] : memref<1x36x108xf32, #tpu.memory_space<vmem>>, vector<1x8x24xf32>
    %262 = vector.shape_cast %261 : vector<1x8x24xf32> to vector<8x24xf32>
    %c24_400 = arith.constant 24 : index
    %c288_401 = arith.constant 288 : index
    %263 = vector.load %arg9[%c24_400, %c288_401] : memref<32x600xf32, #tpu.memory_space<vmem>>, vector<8x24xf32>
    tpu.vector_store %arg9[%c24_400, %c288_401], %262 {strides = array<i32>} : memref<32x600xf32, #tpu.memory_space<vmem>>, vector<8x24xf32>,
    %c0_402 = arith.constant 0 : index
    %c1_403 = arith.constant 1 : index
    %c30_404 = arith.constant 30 : index
    %264 = vector.load %arg1[%c0_402, %c1_403, %c30_404] : memref<1x36x108xf32, #tpu.memory_space<vmem>>, vector<1x8x24xf32>
    %265 = vector.shape_cast %264 : vector<1x8x24xf32> to vector<8x24xf32>
    %c24_405 = arith.constant 24 : index
    %c312_406 = arith.constant 312 : index
    %266 = vector.load %arg9[%c24_405, %c312_406] : memref<32x600xf32, #tpu.memory_space<vmem>>, vector<8x24xf32>
    tpu.vector_store %arg9[%c24_405, %c312_406], %265 {strides = array<i32>} : memref<32x600xf32, #tpu.memory_space<vmem>>, vector<8x24xf32>,
    %c0_407 = arith.constant 0 : index
    %c1_408 = arith.constant 1 : index
    %c57_409 = arith.constant 57 : index
    %267 = vector.load %arg1[%c0_407, %c1_408, %c57_409] : memref<1x36x108xf32, #tpu.memory_space<vmem>>, vector<1x8x24xf32>
    %268 = vector.shape_cast %267 : vector<1x8x24xf32> to vector<8x24xf32>
    %c24_410 = arith.constant 24 : index
    %c336_411 = arith.constant 336 : index
    %269 = vector.load %arg9[%c24_410, %c336_411] : memref<32x600xf32, #tpu.memory_space<vmem>>, vector<8x24xf32>
    tpu.vector_store %arg9[%c24_410, %c336_411], %268 {strides = array<i32>} : memref<32x600xf32, #tpu.memory_space<vmem>>, vector<8x24xf32>,
    %c0_412 = arith.constant 0 : index
    %c10_413 = arith.constant 10 : index
    %c54_414 = arith.constant 54 : index
    %270 = vector.load %arg1[%c0_412, %c10_413, %c54_414] : memref<1x36x108xf32, #tpu.memory_space<vmem>>, vector<1x8x24xf32>
    %271 = vector.shape_cast %270 : vector<1x8x24xf32> to vector<8x24xf32>
    %c24_415 = arith.constant 24 : index
    %c360_416 = arith.constant 360 : index
    %272 = vector.load %arg9[%c24_415, %c360_416] : memref<32x600xf32, #tpu.memory_space<vmem>>, vector<8x24xf32>
    tpu.vector_store %arg9[%c24_415, %c360_416], %271 {strides = array<i32>} : memref<32x600xf32, #tpu.memory_space<vmem>>, vector<8x24xf32>,
    %c0_417 = arith.constant 0 : index
    %c10_418 = arith.constant 10 : index
    %c81_419 = arith.constant 81 : index
    %273 = vector.load %arg1[%c0_417, %c10_418, %c81_419] : memref<1x36x108xf32, #tpu.memory_space<vmem>>, vector<1x8x24xf32>
    %274 = vector.shape_cast %273 : vector<1x8x24xf32> to vector<8x24xf32>
    %c24_420 = arith.constant 24 : index
    %c384_421 = arith.constant 384 : index
    %275 = vector.load %arg9[%c24_420, %c384_421] : memref<32x600xf32, #tpu.memory_space<vmem>>, vector<8x24xf32>
    tpu.vector_store %arg9[%c24_420, %c384_421], %274 {strides = array<i32>} : memref<32x600xf32, #tpu.memory_space<vmem>>, vector<8x24xf32>,
    %c0_422 = arith.constant 0 : index
    %c10_423 = arith.constant 10 : index
    %c3_424 = arith.constant 3 : index
    %276 = vector.load %arg1[%c0_422, %c10_423, %c3_424] : memref<1x36x108xf32, #tpu.memory_space<vmem>>, vector<1x8x24xf32>
    %277 = vector.shape_cast %276 : vector<1x8x24xf32> to vector<8x24xf32>
    %c24_425 = arith.constant 24 : index
    %c408_426 = arith.constant 408 : index
    %278 = vector.load %arg9[%c24_425, %c408_426] : memref<32x600xf32, #tpu.memory_space<vmem>>, vector<8x24xf32>
    tpu.vector_store %arg9[%c24_425, %c408_426], %277 {strides = array<i32>} : memref<32x600xf32, #tpu.memory_space<vmem>>, vector<8x24xf32>,
    %c0_427 = arith.constant 0 : index
    %c10_428 = arith.constant 10 : index
    %c30_429 = arith.constant 30 : index
    %279 = vector.load %arg1[%c0_427, %c10_428, %c30_429] : memref<1x36x108xf32, #tpu.memory_space<vmem>>, vector<1x8x24xf32>
    %280 = vector.shape_cast %279 : vector<1x8x24xf32> to vector<8x24xf32>
    %c24_430 = arith.constant 24 : index
    %c432_431 = arith.constant 432 : index
    %281 = vector.load %arg9[%c24_430, %c432_431] : memref<32x600xf32, #tpu.memory_space<vmem>>, vector<8x24xf32>
    tpu.vector_store %arg9[%c24_430, %c432_431], %280 {strides = array<i32>} : memref<32x600xf32, #tpu.memory_space<vmem>>, vector<8x24xf32>,
    %c0_432 = arith.constant 0 : index
    %c10_433 = arith.constant 10 : index
    %c57_434 = arith.constant 57 : index
    %282 = vector.load %arg1[%c0_432, %c10_433, %c57_434] : memref<1x36x108xf32, #tpu.memory_space<vmem>>, vector<1x8x24xf32>
    %283 = vector.shape_cast %282 : vector<1x8x24xf32> to vector<8x24xf32>
    %c24_435 = arith.constant 24 : index
    %c456_436 = arith.constant 456 : index
    %284 = vector.load %arg9[%c24_435, %c456_436] : memref<32x600xf32, #tpu.memory_space<vmem>>, vector<8x24xf32>
    tpu.vector_store %arg9[%c24_435, %c456_436], %283 {strides = array<i32>} : memref<32x600xf32, #tpu.memory_space<vmem>>, vector<8x24xf32>,
    %c0_437 = arith.constant 0 : index
    %c19_438 = arith.constant 19 : index
    %c54_439 = arith.constant 54 : index
    %285 = vector.load %arg1[%c0_437, %c19_438, %c54_439] : memref<1x36x108xf32, #tpu.memory_space<vmem>>, vector<1x8x24xf32>
    %286 = vector.shape_cast %285 : vector<1x8x24xf32> to vector<8x24xf32>
    %c24_440 = arith.constant 24 : index
    %c480_441 = arith.constant 480 : index
    %287 = vector.load %arg9[%c24_440, %c480_441] : memref<32x600xf32, #tpu.memory_space<vmem>>, vector<8x24xf32>
    tpu.vector_store %arg9[%c24_440, %c480_441], %286 {strides = array<i32>} : memref<32x600xf32, #tpu.memory_space<vmem>>, vector<8x24xf32>,
    %c0_442 = arith.constant 0 : index
    %c19_443 = arith.constant 19 : index
    %c81_444 = arith.constant 81 : index
    %288 = vector.load %arg1[%c0_442, %c19_443, %c81_444] : memref<1x36x108xf32, #tpu.memory_space<vmem>>, vector<1x8x24xf32>
    %289 = vector.shape_cast %288 : vector<1x8x24xf32> to vector<8x24xf32>
    %c24_445 = arith.constant 24 : index
    %c504_446 = arith.constant 504 : index
    %290 = vector.load %arg9[%c24_445, %c504_446] : memref<32x600xf32, #tpu.memory_space<vmem>>, vector<8x24xf32>
    tpu.vector_store %arg9[%c24_445, %c504_446], %289 {strides = array<i32>} : memref<32x600xf32, #tpu.memory_space<vmem>>, vector<8x24xf32>,
    %c0_447 = arith.constant 0 : index
    %c19_448 = arith.constant 19 : index
    %c3_449 = arith.constant 3 : index
    %291 = vector.load %arg1[%c0_447, %c19_448, %c3_449] : memref<1x36x108xf32, #tpu.memory_space<vmem>>, vector<1x8x24xf32>
    %292 = vector.shape_cast %291 : vector<1x8x24xf32> to vector<8x24xf32>
    %c24_450 = arith.constant 24 : index
    %c528_451 = arith.constant 528 : index
    %293 = vector.load %arg9[%c24_450, %c528_451] : memref<32x600xf32, #tpu.memory_space<vmem>>, vector<8x24xf32>
    tpu.vector_store %arg9[%c24_450, %c528_451], %292 {strides = array<i32>} : memref<32x600xf32, #tpu.memory_space<vmem>>, vector<8x24xf32>,
    %c0_452 = arith.constant 0 : index
    %c19_453 = arith.constant 19 : index
    %c30_454 = arith.constant 30 : index
    %294 = vector.load %arg1[%c0_452, %c19_453, %c30_454] : memref<1x36x108xf32, #tpu.memory_space<vmem>>, vector<1x8x24xf32>
    %295 = vector.shape_cast %294 : vector<1x8x24xf32> to vector<8x24xf32>
    %c24_455 = arith.constant 24 : index
    %c552_456 = arith.constant 552 : index
    %296 = vector.load %arg9[%c24_455, %c552_456] : memref<32x600xf32, #tpu.memory_space<vmem>>, vector<8x24xf32>
    tpu.vector_store %arg9[%c24_455, %c552_456], %295 {strides = array<i32>} : memref<32x600xf32, #tpu.memory_space<vmem>>, vector<8x24xf32>,
    %c0_457 = arith.constant 0 : index
    %c19_458 = arith.constant 19 : index
    %c57_459 = arith.constant 57 : index
    %297 = vector.load %arg1[%c0_457, %c19_458, %c57_459] : memref<1x36x108xf32, #tpu.memory_space<vmem>>, vector<1x8x24xf32>
    %298 = vector.shape_cast %297 : vector<1x8x24xf32> to vector<8x24xf32>
    %c24_460 = arith.constant 24 : index
    %c576_461 = arith.constant 576 : index
    %299 = vector.load %arg9[%c24_460, %c576_461] : memref<32x600xf32, #tpu.memory_space<vmem>>, vector<8x24xf32>
    tpu.vector_store %arg9[%c24_460, %c576_461], %298 {strides = array<i32>} : memref<32x600xf32, #tpu.memory_space<vmem>>, vector<8x24xf32>,
    %c0_462 = arith.constant 0 : index
    %c0_463 = arith.constant 0 : index
    %300 = vector.load %arg9[%c0_462, %c0_463] : memref<32x600xf32, #tpu.memory_space<vmem>>, vector<32x600xf32>
    %c0_464 = arith.constant 0 : index
    %c0_465 = arith.constant 0 : index
    %301 = vector.load %arg2[%c0_464, %c0_465] : memref<600x64xf32, #tpu.memory_space<vmem>>, vector<600x64xf32>
    %cst = arith.constant dense<0.000000e+00> : vector<32x64xf32>
    %302 = tpu.matmul %300, %301, %cst {dimension_numbers = #tpu.dot_dimension_numbers<[1], [0], [0], [1], [0, 0, 1, 1], [], []>} : vector<32x600xf32>, vector<600x64xf32>, vector<32x64xf32> -> vector<32x64xf32>
    %303 = vector.extract_strided_slice %302 {offsets = [0, 0], sizes = [8, 64], strides = [1, 1]} : vector<32x64xf32> to vector<8x64xf32>
    %304 = vector.extract_strided_slice %302 {offsets = [8, 0], sizes = [8, 64], strides = [1, 1]} : vector<32x64xf32> to vector<8x64xf32>
    %305 = arith.maximumf %303, %304 : vector<8x64xf32>
    %306 = vector.extract_strided_slice %302 {offsets = [16, 0], sizes = [8, 64], strides = [1, 1]} : vector<32x64xf32> to vector<8x64xf32>
    %307 = vector.extract_strided_slice %302 {offsets = [24, 0], sizes = [8, 64], strides = [1, 1]} : vector<32x64xf32> to vector<8x64xf32>
    %308 = arith.maximumf %306, %307 : vector<8x64xf32>
    %309 = arith.maximumf %305, %308 : vector<8x64xf32>
    %c0_466 = arith.constant 0 : index
    %c0_467 = arith.constant 0 : index
    %310 = vector.load %arg3[%c0_466, %c0_467] : memref<1x64xf32, #tpu.memory_space<vmem>>, vector<1x64xf32>
    %311 = vector.broadcast %310 : vector<1x64xf32> to vector<8x64xf32>
    %312 = arith.addf %309, %311 : vector<8x64xf32>
    %cst_468 = arith.constant 0.000000e+00 : f32
    %313 = vector.broadcast %cst_468 : f32 to vector<12x96xf32>
    %c0_469 = arith.constant 0 : index
    %c0_470 = arith.constant 0 : index
    %314 = vector.load %arg10[%c0_469, %c0_470] : memref<12x96xf32, #tpu.memory_space<vmem>>, vector<12x96xf32>
    tpu.vector_store %arg10[%c0_469, %c0_470], %313 {strides = array<i32>} : memref<12x96xf32, #tpu.memory_space<vmem>>, vector<12x96xf32>,
    %c2 = arith.constant 2 : index
    %c16_471 = arith.constant 16 : index
    %315 = vector.load %arg10[%c2, %c16_471] : memref<12x96xf32, #tpu.memory_space<vmem>>, vector<8x64xf32>
    tpu.vector_store %arg10[%c2, %c16_471], %312 {strides = array<i32>} : memref<12x96xf32, #tpu.memory_space<vmem>>, vector<8x64xf32>,
    %c0_472 = arith.constant 0 : index
    %c0_473 = arith.constant 0 : index
    %316 = vector.load %arg10[%c0_472, %c0_473] : memref<12x96xf32, #tpu.memory_space<vmem>>, vector<1x40xf32>
    %c0_474 = arith.constant 0 : index
    %c0_475 = arith.constant 0 : index
    %317 = vector.load %arg11[%c0_474, %c0_475] : memref<16x200xf32, #tpu.memory_space<vmem>>, vector<1x40xf32>
    tpu.vector_store %arg11[%c0_474, %c0_475], %316 {strides = array<i32>} : memref<16x200xf32, #tpu.memory_space<vmem>>, vector<1x40xf32>,
    %c1_476 = arith.constant 1 : index
    %c0_477 = arith.constant 0 : index
    %318 = vector.load %arg10[%c1_476, %c0_477] : memref<12x96xf32, #tpu.memory_space<vmem>>, vector<1x40xf32>
    %c0_478 = arith.constant 0 : index
    %c40 = arith.constant 40 : index
    %319 = vector.load %arg11[%c0_478, %c40] : memref<16x200xf32, #tpu.memory_space<vmem>>, vector<1x40xf32>
    tpu.vector_store %arg11[%c0_478, %c40], %318 {strides = array<i32>} : memref<16x200xf32, #tpu.memory_space<vmem>>, vector<1x40xf32>,
    %c2_479 = arith.constant 2 : index
    %c0_480 = arith.constant 0 : index
    %320 = vector.load %arg10[%c2_479, %c0_480] : memref<12x96xf32, #tpu.memory_space<vmem>>, vector<1x40xf32>
    %c0_481 = arith.constant 0 : index
    %c80 = arith.constant 80 : index
    %321 = vector.load %arg11[%c0_481, %c80] : memref<16x200xf32, #tpu.memory_space<vmem>>, vector<1x40xf32>
    tpu.vector_store %arg11[%c0_481, %c80], %320 {strides = array<i32>} : memref<16x200xf32, #tpu.memory_space<vmem>>, vector<1x40xf32>,
    %c3_482 = arith.constant 3 : index
    %c0_483 = arith.constant 0 : index
    %322 = vector.load %arg10[%c3_482, %c0_483] : memref<12x96xf32, #tpu.memory_space<vmem>>, vector<1x40xf32>
    %c0_484 = arith.constant 0 : index
    %c120_485 = arith.constant 120 : index
    %323 = vector.load %arg11[%c0_484, %c120_485] : memref<16x200xf32, #tpu.memory_space<vmem>>, vector<1x40xf32>
    tpu.vector_store %arg11[%c0_484, %c120_485], %322 {strides = array<i32>} : memref<16x200xf32, #tpu.memory_space<vmem>>, vector<1x40xf32>,
    %c4 = arith.constant 4 : index
    %c0_486 = arith.constant 0 : index
    %324 = vector.load %arg10[%c4, %c0_486] : memref<12x96xf32, #tpu.memory_space<vmem>>, vector<1x40xf32>
    %c0_487 = arith.constant 0 : index
    %c160 = arith.constant 160 : index
    %325 = vector.load %arg11[%c0_487, %c160] : memref<16x200xf32, #tpu.memory_space<vmem>>, vector<1x40xf32>
    tpu.vector_store %arg11[%c0_487, %c160], %324 {strides = array<i32>} : memref<16x200xf32, #tpu.memory_space<vmem>>, vector<1x40xf32>,
    %c0_488 = arith.constant 0 : index
    %c16_489 = arith.constant 16 : index
    %326 = vector.load %arg10[%c0_488, %c16_489] : memref<12x96xf32, #tpu.memory_space<vmem>>, vector<1x40xf32>
    %c1_490 = arith.constant 1 : index
    %c0_491 = arith.constant 0 : index
    %327 = vector.load %arg11[%c1_490, %c0_491] : memref<16x200xf32, #tpu.memory_space<vmem>>, vector<1x40xf32>
    tpu.vector_store %arg11[%c1_490, %c0_491], %326 {strides = array<i32>} : memref<16x200xf32, #tpu.memory_space<vmem>>, vector<1x40xf32>,
    %c1_492 = arith.constant 1 : index
    %c16_493 = arith.constant 16 : index
    %328 = vector.load %arg10[%c1_492, %c16_493] : memref<12x96xf32, #tpu.memory_space<vmem>>, vector<1x40xf32>
    %c1_494 = arith.constant 1 : index
    %c40_495 = arith.constant 40 : index
    %329 = vector.load %arg11[%c1_494, %c40_495] : memref<16x200xf32, #tpu.memory_space<vmem>>, vector<1x40xf32>
    tpu.vector_store %arg11[%c1_494, %c40_495], %328 {strides = array<i32>} : memref<16x200xf32, #tpu.memory_space<vmem>>, vector<1x40xf32>,
    %c2_496 = arith.constant 2 : index
    %c16_497 = arith.constant 16 : index
    %330 = vector.load %arg10[%c2_496, %c16_497] : memref<12x96xf32, #tpu.memory_space<vmem>>, vector<1x40xf32>
    %c1_498 = arith.constant 1 : index
    %c80_499 = arith.constant 80 : index
    %331 = vector.load %arg11[%c1_498, %c80_499] : memref<16x200xf32, #tpu.memory_space<vmem>>, vector<1x40xf32>
    tpu.vector_store %arg11[%c1_498, %c80_499], %330 {strides = array<i32>} : memref<16x200xf32, #tpu.memory_space<vmem>>, vector<1x40xf32>,
    %c3_500 = arith.constant 3 : index
    %c16_501 = arith.constant 16 : index
    %332 = vector.load %arg10[%c3_500, %c16_501] : memref<12x96xf32, #tpu.memory_space<vmem>>, vector<1x40xf32>
    %c1_502 = arith.constant 1 : index
    %c120_503 = arith.constant 120 : index
    %333 = vector.load %arg11[%c1_502, %c120_503] : memref<16x200xf32, #tpu.memory_space<vmem>>, vector<1x40xf32>
    tpu.vector_store %arg11[%c1_502, %c120_503], %332 {strides = array<i32>} : memref<16x200xf32, #tpu.memory_space<vmem>>, vector<1x40xf32>,
    %c4_504 = arith.constant 4 : index
    %c16_505 = arith.constant 16 : index
    %334 = vector.load %arg10[%c4_504, %c16_505] : memref<12x96xf32, #tpu.memory_space<vmem>>, vector<1x40xf32>
    %c1_506 = arith.constant 1 : index
    %c160_507 = arith.constant 160 : index
    %335 = vector.load %arg11[%c1_506, %c160_507] : memref<16x200xf32, #tpu.memory_space<vmem>>, vector<1x40xf32>
    tpu.vector_store %arg11[%c1_506, %c160_507], %334 {strides = array<i32>} : memref<16x200xf32, #tpu.memory_space<vmem>>, vector<1x40xf32>,
    %c0_508 = arith.constant 0 : index
    %c32 = arith.constant 32 : index
    %336 = vector.load %arg10[%c0_508, %c32] : memref<12x96xf32, #tpu.memory_space<vmem>>, vector<1x40xf32>
    %c2_509 = arith.constant 2 : index
    %c0_510 = arith.constant 0 : index
    %337 = vector.load %arg11[%c2_509, %c0_510] : memref<16x200xf32, #tpu.memory_space<vmem>>, vector<1x40xf32>
    tpu.vector_store %arg11[%c2_509, %c0_510], %336 {strides = array<i32>} : memref<16x200xf32, #tpu.memory_space<vmem>>, vector<1x40xf32>,
    %c1_511 = arith.constant 1 : index
    %c32_512 = arith.constant 32 : index
    %338 = vector.load %arg10[%c1_511, %c32_512] : memref<12x96xf32, #tpu.memory_space<vmem>>, vector<1x40xf32>
    %c2_513 = arith.constant 2 : index
    %c40_514 = arith.constant 40 : index
    %339 = vector.load %arg11[%c2_513, %c40_514] : memref<16x200xf32, #tpu.memory_space<vmem>>, vector<1x40xf32>
    tpu.vector_store %arg11[%c2_513, %c40_514], %338 {strides = array<i32>} : memref<16x200xf32, #tpu.memory_space<vmem>>, vector<1x40xf32>,
    %c2_515 = arith.constant 2 : index
    %c32_516 = arith.constant 32 : index
    %340 = vector.load %arg10[%c2_515, %c32_516] : memref<12x96xf32, #tpu.memory_space<vmem>>, vector<1x40xf32>
    %c2_517 = arith.constant 2 : index
    %c80_518 = arith.constant 80 : index
    %341 = vector.load %arg11[%c2_517, %c80_518] : memref<16x200xf32, #tpu.memory_space<vmem>>, vector<1x40xf32>
    tpu.vector_store %arg11[%c2_517, %c80_518], %340 {strides = array<i32>} : memref<16x200xf32, #tpu.memory_space<vmem>>, vector<1x40xf32>,
    %c3_519 = arith.constant 3 : index
    %c32_520 = arith.constant 32 : index
    %342 = vector.load %arg10[%c3_519, %c32_520] : memref<12x96xf32, #tpu.memory_space<vmem>>, vector<1x40xf32>
    %c2_521 = arith.constant 2 : index
    %c120_522 = arith.constant 120 : index
    %343 = vector.load %arg11[%c2_521, %c120_522] : memref<16x200xf32, #tpu.memory_space<vmem>>, vector<1x40xf32>
    tpu.vector_store %arg11[%c2_521, %c120_522], %342 {strides = array<i32>} : memref<16x200xf32, #tpu.memory_space<vmem>>, vector<1x40xf32>,
    %c4_523 = arith.constant 4 : index
    %c32_524 = arith.constant 32 : index
    %344 = vector.load %arg10[%c4_523, %c32_524] : memref<12x96xf32, #tpu.memory_space<vmem>>, vector<1x40xf32>
    %c2_525 = arith.constant 2 : index
    %c160_526 = arith.constant 160 : index
    %345 = vector.load %arg11[%c2_525, %c160_526] : memref<16x200xf32, #tpu.memory_space<vmem>>, vector<1x40xf32>
    tpu.vector_store %arg11[%c2_525, %c160_526], %344 {strides = array<i32>} : memref<16x200xf32, #tpu.memory_space<vmem>>, vector<1x40xf32>,
    %c0_527 = arith.constant 0 : index
    %c48_528 = arith.constant 48 : index
    %346 = vector.load %arg10[%c0_527, %c48_528] : memref<12x96xf32, #tpu.memory_space<vmem>>, vector<1x40xf32>
    %c3_529 = arith.constant 3 : index
    %c0_530 = arith.constant 0 : index
    %347 = vector.load %arg11[%c3_529, %c0_530] : memref<16x200xf32, #tpu.memory_space<vmem>>, vector<1x40xf32>
    tpu.vector_store %arg11[%c3_529, %c0_530], %346 {strides = array<i32>} : memref<16x200xf32, #tpu.memory_space<vmem>>, vector<1x40xf32>,
    %c1_531 = arith.constant 1 : index
    %c48_532 = arith.constant 48 : index
    %348 = vector.load %arg10[%c1_531, %c48_532] : memref<12x96xf32, #tpu.memory_space<vmem>>, vector<1x40xf32>
    %c3_533 = arith.constant 3 : index
    %c40_534 = arith.constant 40 : index
    %349 = vector.load %arg11[%c3_533, %c40_534] : memref<16x200xf32, #tpu.memory_space<vmem>>, vector<1x40xf32>
    tpu.vector_store %arg11[%c3_533, %c40_534], %348 {strides = array<i32>} : memref<16x200xf32, #tpu.memory_space<vmem>>, vector<1x40xf32>,
    %c2_535 = arith.constant 2 : index
    %c48_536 = arith.constant 48 : index
    %350 = vector.load %arg10[%c2_535, %c48_536] : memref<12x96xf32, #tpu.memory_space<vmem>>, vector<1x40xf32>
    %c3_537 = arith.constant 3 : index
    %c80_538 = arith.constant 80 : index
    %351 = vector.load %arg11[%c3_537, %c80_538] : memref<16x200xf32, #tpu.memory_space<vmem>>, vector<1x40xf32>
    tpu.vector_store %arg11[%c3_537, %c80_538], %350 {strides = array<i32>} : memref<16x200xf32, #tpu.memory_space<vmem>>, vector<1x40xf32>,
    %c3_539 = arith.constant 3 : index
    %c48_540 = arith.constant 48 : index
    %352 = vector.load %arg10[%c3_539, %c48_540] : memref<12x96xf32, #tpu.memory_space<vmem>>, vector<1x40xf32>
    %c3_541 = arith.constant 3 : index
    %c120_542 = arith.constant 120 : index
    %353 = vector.load %arg11[%c3_541, %c120_542] : memref<16x200xf32, #tpu.memory_space<vmem>>, vector<1x40xf32>
    tpu.vector_store %arg11[%c3_541, %c120_542], %352 {strides = array<i32>} : memref<16x200xf32, #tpu.memory_space<vmem>>, vector<1x40xf32>,
    %c4_543 = arith.constant 4 : index
    %c48_544 = arith.constant 48 : index
    %354 = vector.load %arg10[%c4_543, %c48_544] : memref<12x96xf32, #tpu.memory_space<vmem>>, vector<1x40xf32>
    %c3_545 = arith.constant 3 : index
    %c160_546 = arith.constant 160 : index
    %355 = vector.load %arg11[%c3_545, %c160_546] : memref<16x200xf32, #tpu.memory_space<vmem>>, vector<1x40xf32>
    tpu.vector_store %arg11[%c3_545, %c160_546], %354 {strides = array<i32>} : memref<16x200xf32, #tpu.memory_space<vmem>>, vector<1x40xf32>,
    %c2_547 = arith.constant 2 : index
    %c0_548 = arith.constant 0 : index
    %356 = vector.load %arg10[%c2_547, %c0_548] : memref<12x96xf32, #tpu.memory_space<vmem>>, vector<1x40xf32>
    %c4_549 = arith.constant 4 : index
    %c0_550 = arith.constant 0 : index
    %357 = vector.load %arg11[%c4_549, %c0_550] : memref<16x200xf32, #tpu.memory_space<vmem>>, vector<1x40xf32>
    tpu.vector_store %arg11[%c4_549, %c0_550], %356 {strides = array<i32>} : memref<16x200xf32, #tpu.memory_space<vmem>>, vector<1x40xf32>,
    %c3_551 = arith.constant 3 : index
    %c0_552 = arith.constant 0 : index
    %358 = vector.load %arg10[%c3_551, %c0_552] : memref<12x96xf32, #tpu.memory_space<vmem>>, vector<1x40xf32>
    %c4_553 = arith.constant 4 : index
    %c40_554 = arith.constant 40 : index
    %359 = vector.load %arg11[%c4_553, %c40_554] : memref<16x200xf32, #tpu.memory_space<vmem>>, vector<1x40xf32>
    tpu.vector_store %arg11[%c4_553, %c40_554], %358 {strides = array<i32>} : memref<16x200xf32, #tpu.memory_space<vmem>>, vector<1x40xf32>,
    %c4_555 = arith.constant 4 : index
    %c0_556 = arith.constant 0 : index
    %360 = vector.load %arg10[%c4_555, %c0_556] : memref<12x96xf32, #tpu.memory_space<vmem>>, vector<1x40xf32>
    %c4_557 = arith.constant 4 : index
    %c80_558 = arith.constant 80 : index
    %361 = vector.load %arg11[%c4_557, %c80_558] : memref<16x200xf32, #tpu.memory_space<vmem>>, vector<1x40xf32>
    tpu.vector_store %arg11[%c4_557, %c80_558], %360 {strides = array<i32>} : memref<16x200xf32, #tpu.memory_space<vmem>>, vector<1x40xf32>,
    %c5 = arith.constant 5 : index
    %c0_559 = arith.constant 0 : index
    %362 = vector.load %arg10[%c5, %c0_559] : memref<12x96xf32, #tpu.memory_space<vmem>>, vector<1x40xf32>
    %c4_560 = arith.constant 4 : index
    %c120_561 = arith.constant 120 : index
    %363 = vector.load %arg11[%c4_560, %c120_561] : memref<16x200xf32, #tpu.memory_space<vmem>>, vector<1x40xf32>
    tpu.vector_store %arg11[%c4_560, %c120_561], %362 {strides = array<i32>} : memref<16x200xf32, #tpu.memory_space<vmem>>, vector<1x40xf32>,
    %c6 = arith.constant 6 : index
    %c0_562 = arith.constant 0 : index
    %364 = vector.load %arg10[%c6, %c0_562] : memref<12x96xf32, #tpu.memory_space<vmem>>, vector<1x40xf32>
    %c4_563 = arith.constant 4 : index
    %c160_564 = arith.constant 160 : index
    %365 = vector.load %arg11[%c4_563, %c160_564] : memref<16x200xf32, #tpu.memory_space<vmem>>, vector<1x40xf32>
    tpu.vector_store %arg11[%c4_563, %c160_564], %364 {strides = array<i32>} : memref<16x200xf32, #tpu.memory_space<vmem>>, vector<1x40xf32>,
    %c2_565 = arith.constant 2 : index
    %c16_566 = arith.constant 16 : index
    %366 = vector.load %arg10[%c2_565, %c16_566] : memref<12x96xf32, #tpu.memory_space<vmem>>, vector<1x40xf32>
    %c5_567 = arith.constant 5 : index
    %c0_568 = arith.constant 0 : index
    %367 = vector.load %arg11[%c5_567, %c0_568] : memref<16x200xf32, #tpu.memory_space<vmem>>, vector<1x40xf32>
    tpu.vector_store %arg11[%c5_567, %c0_568], %366 {strides = array<i32>} : memref<16x200xf32, #tpu.memory_space<vmem>>, vector<1x40xf32>,
    %c3_569 = arith.constant 3 : index
    %c16_570 = arith.constant 16 : index
    %368 = vector.load %arg10[%c3_569, %c16_570] : memref<12x96xf32, #tpu.memory_space<vmem>>, vector<1x40xf32>
    %c5_571 = arith.constant 5 : index
    %c40_572 = arith.constant 40 : index
    %369 = vector.load %arg11[%c5_571, %c40_572] : memref<16x200xf32, #tpu.memory_space<vmem>>, vector<1x40xf32>
    tpu.vector_store %arg11[%c5_571, %c40_572], %368 {strides = array<i32>} : memref<16x200xf32, #tpu.memory_space<vmem>>, vector<1x40xf32>,
    %c4_573 = arith.constant 4 : index
    %c16_574 = arith.constant 16 : index
    %370 = vector.load %arg10[%c4_573, %c16_574] : memref<12x96xf32, #tpu.memory_space<vmem>>, vector<1x40xf32>
    %c5_575 = arith.constant 5 : index
    %c80_576 = arith.constant 80 : index
    %371 = vector.load %arg11[%c5_575, %c80_576] : memref<16x200xf32, #tpu.memory_space<vmem>>, vector<1x40xf32>
    tpu.vector_store %arg11[%c5_575, %c80_576], %370 {strides = array<i32>} : memref<16x200xf32, #tpu.memory_space<vmem>>, vector<1x40xf32>,
    %c5_577 = arith.constant 5 : index
    %c16_578 = arith.constant 16 : index
    %372 = vector.load %arg10[%c5_577, %c16_578] : memref<12x96xf32, #tpu.memory_space<vmem>>, vector<1x40xf32>
    %c5_579 = arith.constant 5 : index
    %c120_580 = arith.constant 120 : index
    %373 = vector.load %arg11[%c5_579, %c120_580] : memref<16x200xf32, #tpu.memory_space<vmem>>, vector<1x40xf32>
    tpu.vector_store %arg11[%c5_579, %c120_580], %372 {strides = array<i32>} : memref<16x200xf32, #tpu.memory_space<vmem>>, vector<1x40xf32>,
    %c6_581 = arith.constant 6 : index
    %c16_582 = arith.constant 16 : index
    %374 = vector.load %arg10[%c6_581, %c16_582] : memref<12x96xf32, #tpu.memory_space<vmem>>, vector<1x40xf32>
    %c5_583 = arith.constant 5 : index
    %c160_584 = arith.constant 160 : index
    %375 = vector.load %arg11[%c5_583, %c160_584] : memref<16x200xf32, #tpu.memory_space<vmem>>, vector<1x40xf32>
    tpu.vector_store %arg11[%c5_583, %c160_584], %374 {strides = array<i32>} : memref<16x200xf32, #tpu.memory_space<vmem>>, vector<1x40xf32>,
    %c2_585 = arith.constant 2 : index
    %c32_586 = arith.constant 32 : index
    %376 = vector.load %arg10[%c2_585, %c32_586] : memref<12x96xf32, #tpu.memory_space<vmem>>, vector<1x40xf32>
    %c6_587 = arith.constant 6 : index
    %c0_588 = arith.constant 0 : index
    %377 = vector.load %arg11[%c6_587, %c0_588] : memref<16x200xf32, #tpu.memory_space<vmem>>, vector<1x40xf32>
    tpu.vector_store %arg11[%c6_587, %c0_588], %376 {strides = array<i32>} : memref<16x200xf32, #tpu.memory_space<vmem>>, vector<1x40xf32>,
    %c3_589 = arith.constant 3 : index
    %c32_590 = arith.constant 32 : index
    %378 = vector.load %arg10[%c3_589, %c32_590] : memref<12x96xf32, #tpu.memory_space<vmem>>, vector<1x40xf32>
    %c6_591 = arith.constant 6 : index
    %c40_592 = arith.constant 40 : index
    %379 = vector.load %arg11[%c6_591, %c40_592] : memref<16x200xf32, #tpu.memory_space<vmem>>, vector<1x40xf32>
    tpu.vector_store %arg11[%c6_591, %c40_592], %378 {strides = array<i32>} : memref<16x200xf32, #tpu.memory_space<vmem>>, vector<1x40xf32>,
    %c4_593 = arith.constant 4 : index
    %c32_594 = arith.constant 32 : index
    %380 = vector.load %arg10[%c4_593, %c32_594] : memref<12x96xf32, #tpu.memory_space<vmem>>, vector<1x40xf32>
    %c6_595 = arith.constant 6 : index
    %c80_596 = arith.constant 80 : index
    %381 = vector.load %arg11[%c6_595, %c80_596] : memref<16x200xf32, #tpu.memory_space<vmem>>, vector<1x40xf32>
    tpu.vector_store %arg11[%c6_595, %c80_596], %380 {strides = array<i32>} : memref<16x200xf32, #tpu.memory_space<vmem>>, vector<1x40xf32>,
    %c5_597 = arith.constant 5 : index
    %c32_598 = arith.constant 32 : index
    %382 = vector.load %arg10[%c5_597, %c32_598] : memref<12x96xf32, #tpu.memory_space<vmem>>, vector<1x40xf32>
    %c6_599 = arith.constant 6 : index
    %c120_600 = arith.constant 120 : index
    %383 = vector.load %arg11[%c6_599, %c120_600] : memref<16x200xf32, #tpu.memory_space<vmem>>, vector<1x40xf32>
    tpu.vector_store %arg11[%c6_599, %c120_600], %382 {strides = array<i32>} : memref<16x200xf32, #tpu.memory_space<vmem>>, vector<1x40xf32>,
    %c6_601 = arith.constant 6 : index
    %c32_602 = arith.constant 32 : index
    %384 = vector.load %arg10[%c6_601, %c32_602] : memref<12x96xf32, #tpu.memory_space<vmem>>, vector<1x40xf32>
    %c6_603 = arith.constant 6 : index
    %c160_604 = arith.constant 160 : index
    %385 = vector.load %arg11[%c6_603, %c160_604] : memref<16x200xf32, #tpu.memory_space<vmem>>, vector<1x40xf32>
    tpu.vector_store %arg11[%c6_603, %c160_604], %384 {strides = array<i32>} : memref<16x200xf32, #tpu.memory_space<vmem>>, vector<1x40xf32>,
    %c2_605 = arith.constant 2 : index
    %c48_606 = arith.constant 48 : index
    %386 = vector.load %arg10[%c2_605, %c48_606] : memref<12x96xf32, #tpu.memory_space<vmem>>, vector<1x40xf32>
    %c7 = arith.constant 7 : index
    %c0_607 = arith.constant 0 : index
    %387 = vector.load %arg11[%c7, %c0_607] : memref<16x200xf32, #tpu.memory_space<vmem>>, vector<1x40xf32>
    tpu.vector_store %arg11[%c7, %c0_607], %386 {strides = array<i32>} : memref<16x200xf32, #tpu.memory_space<vmem>>, vector<1x40xf32>,
    %c3_608 = arith.constant 3 : index
    %c48_609 = arith.constant 48 : index
    %388 = vector.load %arg10[%c3_608, %c48_609] : memref<12x96xf32, #tpu.memory_space<vmem>>, vector<1x40xf32>
    %c7_610 = arith.constant 7 : index
    %c40_611 = arith.constant 40 : index
    %389 = vector.load %arg11[%c7_610, %c40_611] : memref<16x200xf32, #tpu.memory_space<vmem>>, vector<1x40xf32>
    tpu.vector_store %arg11[%c7_610, %c40_611], %388 {strides = array<i32>} : memref<16x200xf32, #tpu.memory_space<vmem>>, vector<1x40xf32>,
    %c4_612 = arith.constant 4 : index
    %c48_613 = arith.constant 48 : index
    %390 = vector.load %arg10[%c4_612, %c48_613] : memref<12x96xf32, #tpu.memory_space<vmem>>, vector<1x40xf32>
    %c7_614 = arith.constant 7 : index
    %c80_615 = arith.constant 80 : index
    %391 = vector.load %arg11[%c7_614, %c80_615] : memref<16x200xf32, #tpu.memory_space<vmem>>, vector<1x40xf32>
    tpu.vector_store %arg11[%c7_614, %c80_615], %390 {strides = array<i32>} : memref<16x200xf32, #tpu.memory_space<vmem>>, vector<1x40xf32>,
    %c5_616 = arith.constant 5 : index
    %c48_617 = arith.constant 48 : index
    %392 = vector.load %arg10[%c5_616, %c48_617] : memref<12x96xf32, #tpu.memory_space<vmem>>, vector<1x40xf32>
    %c7_618 = arith.constant 7 : index
    %c120_619 = arith.constant 120 : index
    %393 = vector.load %arg11[%c7_618, %c120_619] : memref<16x200xf32, #tpu.memory_space<vmem>>, vector<1x40xf32>
    tpu.vector_store %arg11[%c7_618, %c120_619], %392 {strides = array<i32>} : memref<16x200xf32, #tpu.memory_space<vmem>>, vector<1x40xf32>,
    %c6_620 = arith.constant 6 : index
    %c48_621 = arith.constant 48 : index
    %394 = vector.load %arg10[%c6_620, %c48_621] : memref<12x96xf32, #tpu.memory_space<vmem>>, vector<1x40xf32>
    %c7_622 = arith.constant 7 : index
    %c160_623 = arith.constant 160 : index
    %395 = vector.load %arg11[%c7_622, %c160_623] : memref<16x200xf32, #tpu.memory_space<vmem>>, vector<1x40xf32>
    tpu.vector_store %arg11[%c7_622, %c160_623], %394 {strides = array<i32>} : memref<16x200xf32, #tpu.memory_space<vmem>>, vector<1x40xf32>,
    %c4_624 = arith.constant 4 : index
    %c0_625 = arith.constant 0 : index
    %396 = vector.load %arg10[%c4_624, %c0_625] : memref<12x96xf32, #tpu.memory_space<vmem>>, vector<1x40xf32>
    %c8_626 = arith.constant 8 : index
    %c0_627 = arith.constant 0 : index
    %397 = vector.load %arg11[%c8_626, %c0_627] : memref<16x200xf32, #tpu.memory_space<vmem>>, vector<1x40xf32>
    tpu.vector_store %arg11[%c8_626, %c0_627], %396 {strides = array<i32>} : memref<16x200xf32, #tpu.memory_space<vmem>>, vector<1x40xf32>,
    %c5_628 = arith.constant 5 : index
    %c0_629 = arith.constant 0 : index
    %398 = vector.load %arg10[%c5_628, %c0_629] : memref<12x96xf32, #tpu.memory_space<vmem>>, vector<1x40xf32>
    %c8_630 = arith.constant 8 : index
    %c40_631 = arith.constant 40 : index
    %399 = vector.load %arg11[%c8_630, %c40_631] : memref<16x200xf32, #tpu.memory_space<vmem>>, vector<1x40xf32>
    tpu.vector_store %arg11[%c8_630, %c40_631], %398 {strides = array<i32>} : memref<16x200xf32, #tpu.memory_space<vmem>>, vector<1x40xf32>,
    %c6_632 = arith.constant 6 : index
    %c0_633 = arith.constant 0 : index
    %400 = vector.load %arg10[%c6_632, %c0_633] : memref<12x96xf32, #tpu.memory_space<vmem>>, vector<1x40xf32>
    %c8_634 = arith.constant 8 : index
    %c80_635 = arith.constant 80 : index
    %401 = vector.load %arg11[%c8_634, %c80_635] : memref<16x200xf32, #tpu.memory_space<vmem>>, vector<1x40xf32>
    tpu.vector_store %arg11[%c8_634, %c80_635], %400 {strides = array<i32>} : memref<16x200xf32, #tpu.memory_space<vmem>>, vector<1x40xf32>,
    %c7_636 = arith.constant 7 : index
    %c0_637 = arith.constant 0 : index
    %402 = vector.load %arg10[%c7_636, %c0_637] : memref<12x96xf32, #tpu.memory_space<vmem>>, vector<1x40xf32>
    %c8_638 = arith.constant 8 : index
    %c120_639 = arith.constant 120 : index
    %403 = vector.load %arg11[%c8_638, %c120_639] : memref<16x200xf32, #tpu.memory_space<vmem>>, vector<1x40xf32>
    tpu.vector_store %arg11[%c8_638, %c120_639], %402 {strides = array<i32>} : memref<16x200xf32, #tpu.memory_space<vmem>>, vector<1x40xf32>,
    %c8_640 = arith.constant 8 : index
    %c0_641 = arith.constant 0 : index
    %404 = vector.load %arg10[%c8_640, %c0_641] : memref<12x96xf32, #tpu.memory_space<vmem>>, vector<1x40xf32>
    %c8_642 = arith.constant 8 : index
    %c160_643 = arith.constant 160 : index
    %405 = vector.load %arg11[%c8_642, %c160_643] : memref<16x200xf32, #tpu.memory_space<vmem>>, vector<1x40xf32>
    tpu.vector_store %arg11[%c8_642, %c160_643], %404 {strides = array<i32>} : memref<16x200xf32, #tpu.memory_space<vmem>>, vector<1x40xf32>,
    %c4_644 = arith.constant 4 : index
    %c16_645 = arith.constant 16 : index
    %406 = vector.load %arg10[%c4_644, %c16_645] : memref<12x96xf32, #tpu.memory_space<vmem>>, vector<1x40xf32>
    %c9_646 = arith.constant 9 : index
    %c0_647 = arith.constant 0 : index
    %407 = vector.load %arg11[%c9_646, %c0_647] : memref<16x200xf32, #tpu.memory_space<vmem>>, vector<1x40xf32>
    tpu.vector_store %arg11[%c9_646, %c0_647], %406 {strides = array<i32>} : memref<16x200xf32, #tpu.memory_space<vmem>>, vector<1x40xf32>,
    %c5_648 = arith.constant 5 : index
    %c16_649 = arith.constant 16 : index
    %408 = vector.load %arg10[%c5_648, %c16_649] : memref<12x96xf32, #tpu.memory_space<vmem>>, vector<1x40xf32>
    %c9_650 = arith.constant 9 : index
    %c40_651 = arith.constant 40 : index
    %409 = vector.load %arg11[%c9_650, %c40_651] : memref<16x200xf32, #tpu.memory_space<vmem>>, vector<1x40xf32>
    tpu.vector_store %arg11[%c9_650, %c40_651], %408 {strides = array<i32>} : memref<16x200xf32, #tpu.memory_space<vmem>>, vector<1x40xf32>,
    %c6_652 = arith.constant 6 : index
    %c16_653 = arith.constant 16 : index
    %410 = vector.load %arg10[%c6_652, %c16_653] : memref<12x96xf32, #tpu.memory_space<vmem>>, vector<1x40xf32>
    %c9_654 = arith.constant 9 : index
    %c80_655 = arith.constant 80 : index
    %411 = vector.load %arg11[%c9_654, %c80_655] : memref<16x200xf32, #tpu.memory_space<vmem>>, vector<1x40xf32>
    tpu.vector_store %arg11[%c9_654, %c80_655], %410 {strides = array<i32>} : memref<16x200xf32, #tpu.memory_space<vmem>>, vector<1x40xf32>,
    %c7_656 = arith.constant 7 : index
    %c16_657 = arith.constant 16 : index
    %412 = vector.load %arg10[%c7_656, %c16_657] : memref<12x96xf32, #tpu.memory_space<vmem>>, vector<1x40xf32>
    %c9_658 = arith.constant 9 : index
    %c120_659 = arith.constant 120 : index
    %413 = vector.load %arg11[%c9_658, %c120_659] : memref<16x200xf32, #tpu.memory_space<vmem>>, vector<1x40xf32>
    tpu.vector_store %arg11[%c9_658, %c120_659], %412 {strides = array<i32>} : memref<16x200xf32, #tpu.memory_space<vmem>>, vector<1x40xf32>,
    %c8_660 = arith.constant 8 : index
    %c16_661 = arith.constant 16 : index
    %414 = vector.load %arg10[%c8_660, %c16_661] : memref<12x96xf32, #tpu.memory_space<vmem>>, vector<1x40xf32>
    %c9_662 = arith.constant 9 : index
    %c160_663 = arith.constant 160 : index
    %415 = vector.load %arg11[%c9_662, %c160_663] : memref<16x200xf32, #tpu.memory_space<vmem>>, vector<1x40xf32>
    tpu.vector_store %arg11[%c9_662, %c160_663], %414 {strides = array<i32>} : memref<16x200xf32, #tpu.memory_space<vmem>>, vector<1x40xf32>,
    %c4_664 = arith.constant 4 : index
    %c32_665 = arith.constant 32 : index
    %416 = vector.load %arg10[%c4_664, %c32_665] : memref<12x96xf32, #tpu.memory_space<vmem>>, vector<1x40xf32>
    %c10_666 = arith.constant 10 : index
    %c0_667 = arith.constant 0 : index
    %417 = vector.load %arg11[%c10_666, %c0_667] : memref<16x200xf32, #tpu.memory_space<vmem>>, vector<1x40xf32>
    tpu.vector_store %arg11[%c10_666, %c0_667], %416 {strides = array<i32>} : memref<16x200xf32, #tpu.memory_space<vmem>>, vector<1x40xf32>,
    %c5_668 = arith.constant 5 : index
    %c32_669 = arith.constant 32 : index
    %418 = vector.load %arg10[%c5_668, %c32_669] : memref<12x96xf32, #tpu.memory_space<vmem>>, vector<1x40xf32>
    %c10_670 = arith.constant 10 : index
    %c40_671 = arith.constant 40 : index
    %419 = vector.load %arg11[%c10_670, %c40_671] : memref<16x200xf32, #tpu.memory_space<vmem>>, vector<1x40xf32>
    tpu.vector_store %arg11[%c10_670, %c40_671], %418 {strides = array<i32>} : memref<16x200xf32, #tpu.memory_space<vmem>>, vector<1x40xf32>,
    %c6_672 = arith.constant 6 : index
    %c32_673 = arith.constant 32 : index
    %420 = vector.load %arg10[%c6_672, %c32_673] : memref<12x96xf32, #tpu.memory_space<vmem>>, vector<1x40xf32>
    %c10_674 = arith.constant 10 : index
    %c80_675 = arith.constant 80 : index
    %421 = vector.load %arg11[%c10_674, %c80_675] : memref<16x200xf32, #tpu.memory_space<vmem>>, vector<1x40xf32>
    tpu.vector_store %arg11[%c10_674, %c80_675], %420 {strides = array<i32>} : memref<16x200xf32, #tpu.memory_space<vmem>>, vector<1x40xf32>,
    %c7_676 = arith.constant 7 : index
    %c32_677 = arith.constant 32 : index
    %422 = vector.load %arg10[%c7_676, %c32_677] : memref<12x96xf32, #tpu.memory_space<vmem>>, vector<1x40xf32>
    %c10_678 = arith.constant 10 : index
    %c120_679 = arith.constant 120 : index
    %423 = vector.load %arg11[%c10_678, %c120_679] : memref<16x200xf32, #tpu.memory_space<vmem>>, vector<1x40xf32>
    tpu.vector_store %arg11[%c10_678, %c120_679], %422 {strides = array<i32>} : memref<16x200xf32, #tpu.memory_space<vmem>>, vector<1x40xf32>,
    %c8_680 = arith.constant 8 : index
    %c32_681 = arith.constant 32 : index
    %424 = vector.load %arg10[%c8_680, %c32_681] : memref<12x96xf32, #tpu.memory_space<vmem>>, vector<1x40xf32>
    %c10_682 = arith.constant 10 : index
    %c160_683 = arith.constant 160 : index
    %425 = vector.load %arg11[%c10_682, %c160_683] : memref<16x200xf32, #tpu.memory_space<vmem>>, vector<1x40xf32>
    tpu.vector_store %arg11[%c10_682, %c160_683], %424 {strides = array<i32>} : memref<16x200xf32, #tpu.memory_space<vmem>>, vector<1x40xf32>,
    %c4_684 = arith.constant 4 : index
    %c48_685 = arith.constant 48 : index
    %426 = vector.load %arg10[%c4_684, %c48_685] : memref<12x96xf32, #tpu.memory_space<vmem>>, vector<1x40xf32>
    %c11 = arith.constant 11 : index
    %c0_686 = arith.constant 0 : index
    %427 = vector.load %arg11[%c11, %c0_686] : memref<16x200xf32, #tpu.memory_space<vmem>>, vector<1x40xf32>
    tpu.vector_store %arg11[%c11, %c0_686], %426 {strides = array<i32>} : memref<16x200xf32, #tpu.memory_space<vmem>>, vector<1x40xf32>,
    %c5_687 = arith.constant 5 : index
    %c48_688 = arith.constant 48 : index
    %428 = vector.load %arg10[%c5_687, %c48_688] : memref<12x96xf32, #tpu.memory_space<vmem>>, vector<1x40xf32>
    %c11_689 = arith.constant 11 : index
    %c40_690 = arith.constant 40 : index
    %429 = vector.load %arg11[%c11_689, %c40_690] : memref<16x200xf32, #tpu.memory_space<vmem>>, vector<1x40xf32>
    tpu.vector_store %arg11[%c11_689, %c40_690], %428 {strides = array<i32>} : memref<16x200xf32, #tpu.memory_space<vmem>>, vector<1x40xf32>,
    %c6_691 = arith.constant 6 : index
    %c48_692 = arith.constant 48 : index
    %430 = vector.load %arg10[%c6_691, %c48_692] : memref<12x96xf32, #tpu.memory_space<vmem>>, vector<1x40xf32>
    %c11_693 = arith.constant 11 : index
    %c80_694 = arith.constant 80 : index
    %431 = vector.load %arg11[%c11_693, %c80_694] : memref<16x200xf32, #tpu.memory_space<vmem>>, vector<1x40xf32>
    tpu.vector_store %arg11[%c11_693, %c80_694], %430 {strides = array<i32>} : memref<16x200xf32, #tpu.memory_space<vmem>>, vector<1x40xf32>,
    %c7_695 = arith.constant 7 : index
    %c48_696 = arith.constant 48 : index
    %432 = vector.load %arg10[%c7_695, %c48_696] : memref<12x96xf32, #tpu.memory_space<vmem>>, vector<1x40xf32>
    %c11_697 = arith.constant 11 : index
    %c120_698 = arith.constant 120 : index
    %433 = vector.load %arg11[%c11_697, %c120_698] : memref<16x200xf32, #tpu.memory_space<vmem>>, vector<1x40xf32>
    tpu.vector_store %arg11[%c11_697, %c120_698], %432 {strides = array<i32>} : memref<16x200xf32, #tpu.memory_space<vmem>>, vector<1x40xf32>,
    %c8_699 = arith.constant 8 : index
    %c48_700 = arith.constant 48 : index
    %434 = vector.load %arg10[%c8_699, %c48_700] : memref<12x96xf32, #tpu.memory_space<vmem>>, vector<1x40xf32>
    %c11_701 = arith.constant 11 : index
    %c160_702 = arith.constant 160 : index
    %435 = vector.load %arg11[%c11_701, %c160_702] : memref<16x200xf32, #tpu.memory_space<vmem>>, vector<1x40xf32>
    tpu.vector_store %arg11[%c11_701, %c160_702], %434 {strides = array<i32>} : memref<16x200xf32, #tpu.memory_space<vmem>>, vector<1x40xf32>,
    %c6_703 = arith.constant 6 : index
    %c0_704 = arith.constant 0 : index
    %436 = vector.load %arg10[%c6_703, %c0_704] : memref<12x96xf32, #tpu.memory_space<vmem>>, vector<1x40xf32>
    %c12 = arith.constant 12 : index
    %c0_705 = arith.constant 0 : index
    %437 = vector.load %arg11[%c12, %c0_705] : memref<16x200xf32, #tpu.memory_space<vmem>>, vector<1x40xf32>
    tpu.vector_store %arg11[%c12, %c0_705], %436 {strides = array<i32>} : memref<16x200xf32, #tpu.memory_space<vmem>>, vector<1x40xf32>,
    %c7_706 = arith.constant 7 : index
    %c0_707 = arith.constant 0 : index
    %438 = vector.load %arg10[%c7_706, %c0_707] : memref<12x96xf32, #tpu.memory_space<vmem>>, vector<1x40xf32>
    %c12_708 = arith.constant 12 : index
    %c40_709 = arith.constant 40 : index
    %439 = vector.load %arg11[%c12_708, %c40_709] : memref<16x200xf32, #tpu.memory_space<vmem>>, vector<1x40xf32>
    tpu.vector_store %arg11[%c12_708, %c40_709], %438 {strides = array<i32>} : memref<16x200xf32, #tpu.memory_space<vmem>>, vector<1x40xf32>,
    %c8_710 = arith.constant 8 : index
    %c0_711 = arith.constant 0 : index
    %440 = vector.load %arg10[%c8_710, %c0_711] : memref<12x96xf32, #tpu.memory_space<vmem>>, vector<1x40xf32>
    %c12_712 = arith.constant 12 : index
    %c80_713 = arith.constant 80 : index
    %441 = vector.load %arg11[%c12_712, %c80_713] : memref<16x200xf32, #tpu.memory_space<vmem>>, vector<1x40xf32>
    tpu.vector_store %arg11[%c12_712, %c80_713], %440 {strides = array<i32>} : memref<16x200xf32, #tpu.memory_space<vmem>>, vector<1x40xf32>,
    %c9_714 = arith.constant 9 : index
    %c0_715 = arith.constant 0 : index
    %442 = vector.load %arg10[%c9_714, %c0_715] : memref<12x96xf32, #tpu.memory_space<vmem>>, vector<1x40xf32>
    %c12_716 = arith.constant 12 : index
    %c120_717 = arith.constant 120 : index
    %443 = vector.load %arg11[%c12_716, %c120_717] : memref<16x200xf32, #tpu.memory_space<vmem>>, vector<1x40xf32>
    tpu.vector_store %arg11[%c12_716, %c120_717], %442 {strides = array<i32>} : memref<16x200xf32, #tpu.memory_space<vmem>>, vector<1x40xf32>,
    %c10_718 = arith.constant 10 : index
    %c0_719 = arith.constant 0 : index
    %444 = vector.load %arg10[%c10_718, %c0_719] : memref<12x96xf32, #tpu.memory_space<vmem>>, vector<1x40xf32>
    %c12_720 = arith.constant 12 : index
    %c160_721 = arith.constant 160 : index
    %445 = vector.load %arg11[%c12_720, %c160_721] : memref<16x200xf32, #tpu.memory_space<vmem>>, vector<1x40xf32>
    tpu.vector_store %arg11[%c12_720, %c160_721], %444 {strides = array<i32>} : memref<16x200xf32, #tpu.memory_space<vmem>>, vector<1x40xf32>,
    %c6_722 = arith.constant 6 : index
    %c16_723 = arith.constant 16 : index
    %446 = vector.load %arg10[%c6_722, %c16_723] : memref<12x96xf32, #tpu.memory_space<vmem>>, vector<1x40xf32>
    %c13 = arith.constant 13 : index
    %c0_724 = arith.constant 0 : index
    %447 = vector.load %arg11[%c13, %c0_724] : memref<16x200xf32, #tpu.memory_space<vmem>>, vector<1x40xf32>
    tpu.vector_store %arg11[%c13, %c0_724], %446 {strides = array<i32>} : memref<16x200xf32, #tpu.memory_space<vmem>>, vector<1x40xf32>,
    %c7_725 = arith.constant 7 : index
    %c16_726 = arith.constant 16 : index
    %448 = vector.load %arg10[%c7_725, %c16_726] : memref<12x96xf32, #tpu.memory_space<vmem>>, vector<1x40xf32>
    %c13_727 = arith.constant 13 : index
    %c40_728 = arith.constant 40 : index
    %449 = vector.load %arg11[%c13_727, %c40_728] : memref<16x200xf32, #tpu.memory_space<vmem>>, vector<1x40xf32>
    tpu.vector_store %arg11[%c13_727, %c40_728], %448 {strides = array<i32>} : memref<16x200xf32, #tpu.memory_space<vmem>>, vector<1x40xf32>,
    %c8_729 = arith.constant 8 : index
    %c16_730 = arith.constant 16 : index
    %450 = vector.load %arg10[%c8_729, %c16_730] : memref<12x96xf32, #tpu.memory_space<vmem>>, vector<1x40xf32>
    %c13_731 = arith.constant 13 : index
    %c80_732 = arith.constant 80 : index
    %451 = vector.load %arg11[%c13_731, %c80_732] : memref<16x200xf32, #tpu.memory_space<vmem>>, vector<1x40xf32>
    tpu.vector_store %arg11[%c13_731, %c80_732], %450 {strides = array<i32>} : memref<16x200xf32, #tpu.memory_space<vmem>>, vector<1x40xf32>,
    %c9_733 = arith.constant 9 : index
    %c16_734 = arith.constant 16 : index
    %452 = vector.load %arg10[%c9_733, %c16_734] : memref<12x96xf32, #tpu.memory_space<vmem>>, vector<1x40xf32>
    %c13_735 = arith.constant 13 : index
    %c120_736 = arith.constant 120 : index
    %453 = vector.load %arg11[%c13_735, %c120_736] : memref<16x200xf32, #tpu.memory_space<vmem>>, vector<1x40xf32>
    tpu.vector_store %arg11[%c13_735, %c120_736], %452 {strides = array<i32>} : memref<16x200xf32, #tpu.memory_space<vmem>>, vector<1x40xf32>,
    %c10_737 = arith.constant 10 : index
    %c16_738 = arith.constant 16 : index
    %454 = vector.load %arg10[%c10_737, %c16_738] : memref<12x96xf32, #tpu.memory_space<vmem>>, vector<1x40xf32>
    %c13_739 = arith.constant 13 : index
    %c160_740 = arith.constant 160 : index
    %455 = vector.load %arg11[%c13_739, %c160_740] : memref<16x200xf32, #tpu.memory_space<vmem>>, vector<1x40xf32>
    tpu.vector_store %arg11[%c13_739, %c160_740], %454 {strides = array<i32>} : memref<16x200xf32, #tpu.memory_space<vmem>>, vector<1x40xf32>,
    %c6_741 = arith.constant 6 : index
    %c32_742 = arith.constant 32 : index
    %456 = vector.load %arg10[%c6_741, %c32_742] : memref<12x96xf32, #tpu.memory_space<vmem>>, vector<1x40xf32>
    %c14 = arith.constant 14 : index
    %c0_743 = arith.constant 0 : index
    %457 = vector.load %arg11[%c14, %c0_743] : memref<16x200xf32, #tpu.memory_space<vmem>>, vector<1x40xf32>
    tpu.vector_store %arg11[%c14, %c0_743], %456 {strides = array<i32>} : memref<16x200xf32, #tpu.memory_space<vmem>>, vector<1x40xf32>,
    %c7_744 = arith.constant 7 : index
    %c32_745 = arith.constant 32 : index
    %458 = vector.load %arg10[%c7_744, %c32_745] : memref<12x96xf32, #tpu.memory_space<vmem>>, vector<1x40xf32>
    %c14_746 = arith.constant 14 : index
    %c40_747 = arith.constant 40 : index
    %459 = vector.load %arg11[%c14_746, %c40_747] : memref<16x200xf32, #tpu.memory_space<vmem>>, vector<1x40xf32>
    tpu.vector_store %arg11[%c14_746, %c40_747], %458 {strides = array<i32>} : memref<16x200xf32, #tpu.memory_space<vmem>>, vector<1x40xf32>,
    %c8_748 = arith.constant 8 : index
    %c32_749 = arith.constant 32 : index
    %460 = vector.load %arg10[%c8_748, %c32_749] : memref<12x96xf32, #tpu.memory_space<vmem>>, vector<1x40xf32>
    %c14_750 = arith.constant 14 : index
    %c80_751 = arith.constant 80 : index
    %461 = vector.load %arg11[%c14_750, %c80_751] : memref<16x200xf32, #tpu.memory_space<vmem>>, vector<1x40xf32>
    tpu.vector_store %arg11[%c14_750, %c80_751], %460 {strides = array<i32>} : memref<16x200xf32, #tpu.memory_space<vmem>>, vector<1x40xf32>,
    %c9_752 = arith.constant 9 : index
    %c32_753 = arith.constant 32 : index
    %462 = vector.load %arg10[%c9_752, %c32_753] : memref<12x96xf32, #tpu.memory_space<vmem>>, vector<1x40xf32>
    %c14_754 = arith.constant 14 : index
    %c120_755 = arith.constant 120 : index
    %463 = vector.load %arg11[%c14_754, %c120_755] : memref<16x200xf32, #tpu.memory_space<vmem>>, vector<1x40xf32>
    tpu.vector_store %arg11[%c14_754, %c120_755], %462 {strides = array<i32>} : memref<16x200xf32, #tpu.memory_space<vmem>>, vector<1x40xf32>,
    %c10_756 = arith.constant 10 : index
    %c32_757 = arith.constant 32 : index
    %464 = vector.load %arg10[%c10_756, %c32_757] : memref<12x96xf32, #tpu.memory_space<vmem>>, vector<1x40xf32>
    %c14_758 = arith.constant 14 : index
    %c160_759 = arith.constant 160 : index
    %465 = vector.load %arg11[%c14_758, %c160_759] : memref<16x200xf32, #tpu.memory_space<vmem>>, vector<1x40xf32>
    tpu.vector_store %arg11[%c14_758, %c160_759], %464 {strides = array<i32>} : memref<16x200xf32, #tpu.memory_space<vmem>>, vector<1x40xf32>,
    %c6_760 = arith.constant 6 : index
    %c48_761 = arith.constant 48 : index
    %466 = vector.load %arg10[%c6_760, %c48_761] : memref<12x96xf32, #tpu.memory_space<vmem>>, vector<1x40xf32>
    %c15 = arith.constant 15 : index
    %c0_762 = arith.constant 0 : index
    %467 = vector.load %arg11[%c15, %c0_762] : memref<16x200xf32, #tpu.memory_space<vmem>>, vector<1x40xf32>
    tpu.vector_store %arg11[%c15, %c0_762], %466 {strides = array<i32>} : memref<16x200xf32, #tpu.memory_space<vmem>>, vector<1x40xf32>,
    %c7_763 = arith.constant 7 : index
    %c48_764 = arith.constant 48 : index
    %468 = vector.load %arg10[%c7_763, %c48_764] : memref<12x96xf32, #tpu.memory_space<vmem>>, vector<1x40xf32>
    %c15_765 = arith.constant 15 : index
    %c40_766 = arith.constant 40 : index
    %469 = vector.load %arg11[%c15_765, %c40_766] : memref<16x200xf32, #tpu.memory_space<vmem>>, vector<1x40xf32>
    tpu.vector_store %arg11[%c15_765, %c40_766], %468 {strides = array<i32>} : memref<16x200xf32, #tpu.memory_space<vmem>>, vector<1x40xf32>,
    %c8_767 = arith.constant 8 : index
    %c48_768 = arith.constant 48 : index
    %470 = vector.load %arg10[%c8_767, %c48_768] : memref<12x96xf32, #tpu.memory_space<vmem>>, vector<1x40xf32>
    %c15_769 = arith.constant 15 : index
    %c80_770 = arith.constant 80 : index
    %471 = vector.load %arg11[%c15_769, %c80_770] : memref<16x200xf32, #tpu.memory_space<vmem>>, vector<1x40xf32>
    tpu.vector_store %arg11[%c15_769, %c80_770], %470 {strides = array<i32>} : memref<16x200xf32, #tpu.memory_space<vmem>>, vector<1x40xf32>,
    %c9_771 = arith.constant 9 : index
    %c48_772 = arith.constant 48 : index
    %472 = vector.load %arg10[%c9_771, %c48_772] : memref<12x96xf32, #tpu.memory_space<vmem>>, vector<1x40xf32>
    %c15_773 = arith.constant 15 : index
    %c120_774 = arith.constant 120 : index
    %473 = vector.load %arg11[%c15_773, %c120_774] : memref<16x200xf32, #tpu.memory_space<vmem>>, vector<1x40xf32>
    tpu.vector_store %arg11[%c15_773, %c120_774], %472 {strides = array<i32>} : memref<16x200xf32, #tpu.memory_space<vmem>>, vector<1x40xf32>,
    %c10_775 = arith.constant 10 : index
    %c48_776 = arith.constant 48 : index
    %474 = vector.load %arg10[%c10_775, %c48_776] : memref<12x96xf32, #tpu.memory_space<vmem>>, vector<1x40xf32>
    %c15_777 = arith.constant 15 : index
    %c160_778 = arith.constant 160 : index
    %475 = vector.load %arg11[%c15_777, %c160_778] : memref<16x200xf32, #tpu.memory_space<vmem>>, vector<1x40xf32>
    tpu.vector_store %arg11[%c15_777, %c160_778], %474 {strides = array<i32>} : memref<16x200xf32, #tpu.memory_space<vmem>>, vector<1x40xf32>,
    %c0_779 = arith.constant 0 : index
    %c0_780 = arith.constant 0 : index
    %476 = vector.load %arg11[%c0_779, %c0_780] : memref<16x200xf32, #tpu.memory_space<vmem>>, vector<16x200xf32>
    %c0_781 = arith.constant 0 : index
    %c0_782 = arith.constant 0 : index
    %477 = vector.load %arg4[%c0_781, %c0_782] : memref<200x16xf32, #tpu.memory_space<vmem>>, vector<200x16xf32>
    %cst_783 = arith.constant dense<0.000000e+00> : vector<16x16xf32>
    %478 = tpu.matmul %476, %477, %cst_783 {dimension_numbers = #tpu.dot_dimension_numbers<[1], [0], [0], [1], [0, 0, 1, 1], [], []>} : vector<16x200xf32>, vector<200x16xf32>, vector<16x16xf32> -> vector<16x16xf32>
    %c0_784 = arith.constant 0 : index
    %c0_785 = arith.constant 0 : index
    %479 = vector.load %arg5[%c0_784, %c0_785] : memref<1x16xf32, #tpu.memory_space<vmem>>, vector<1x16xf32>
    %480 = vector.broadcast %479 : vector<1x16xf32> to vector<16x16xf32>
    %481 = arith.addf %478, %480 : vector<16x16xf32>
    %482 = vector.extract_strided_slice %481 {offsets = [0, 0], sizes = [1, 16], strides = [1, 1]} : vector<16x16xf32> to vector<1x16xf32>
    %483 = vector.extract_strided_slice %481 {offsets = [1, 0], sizes = [1, 16], strides = [1, 1]} : vector<16x16xf32> to vector<1x16xf32>
    %484 = arith.maximumf %482, %483 : vector<1x16xf32>
    %485 = vector.extract_strided_slice %481 {offsets = [4, 0], sizes = [1, 16], strides = [1, 1]} : vector<16x16xf32> to vector<1x16xf32>
    %486 = vector.extract_strided_slice %481 {offsets = [5, 0], sizes = [1, 16], strides = [1, 1]} : vector<16x16xf32> to vector<1x16xf32>
    %487 = arith.maximumf %485, %486 : vector<1x16xf32>
    %488 = arith.maximumf %484, %487 : vector<1x16xf32>
    %c0_786 = arith.constant 0 : index
    %c0_787 = arith.constant 0 : index
    %489 = vector.load %arg12[%c0_786, %c0_787] : memref<1x64xf32, #tpu.memory_space<vmem>>, vector<1x16xf32>
    tpu.vector_store %arg12[%c0_786, %c0_787], %488 {strides = array<i32>} : memref<1x64xf32, #tpu.memory_space<vmem>>, vector<1x16xf32>,
    %490 = vector.extract_strided_slice %481 {offsets = [2, 0], sizes = [1, 16], strides = [1, 1]} : vector<16x16xf32> to vector<1x16xf32>
    %491 = vector.extract_strided_slice %481 {offsets = [3, 0], sizes = [1, 16], strides = [1, 1]} : vector<16x16xf32> to vector<1x16xf32>
    %492 = arith.maximumf %490, %491 : vector<1x16xf32>
    %493 = vector.extract_strided_slice %481 {offsets = [6, 0], sizes = [1, 16], strides = [1, 1]} : vector<16x16xf32> to vector<1x16xf32>
    %494 = vector.extract_strided_slice %481 {offsets = [7, 0], sizes = [1, 16], strides = [1, 1]} : vector<16x16xf32> to vector<1x16xf32>
    %495 = arith.maximumf %493, %494 : vector<1x16xf32>
    %496 = arith.maximumf %492, %495 : vector<1x16xf32>
    %c0_788 = arith.constant 0 : index
    %c16_789 = arith.constant 16 : index
    %497 = vector.load %arg12[%c0_788, %c16_789] : memref<1x64xf32, #tpu.memory_space<vmem>>, vector<1x16xf32>
    tpu.vector_store %arg12[%c0_788, %c16_789], %496 {strides = array<i32>} : memref<1x64xf32, #tpu.memory_space<vmem>>, vector<1x16xf32>,
    %498 = vector.extract_strided_slice %481 {offsets = [8, 0], sizes = [1, 16], strides = [1, 1]} : vector<16x16xf32> to vector<1x16xf32>
    %499 = vector.extract_strided_slice %481 {offsets = [9, 0], sizes = [1, 16], strides = [1, 1]} : vector<16x16xf32> to vector<1x16xf32>
    %500 = arith.maximumf %498, %499 : vector<1x16xf32>
    %501 = vector.extract_strided_slice %481 {offsets = [12, 0], sizes = [1, 16], strides = [1, 1]} : vector<16x16xf32> to vector<1x16xf32>
    %502 = vector.extract_strided_slice %481 {offsets = [13, 0], sizes = [1, 16], strides = [1, 1]} : vector<16x16xf32> to vector<1x16xf32>
    %503 = arith.maximumf %501, %502 : vector<1x16xf32>
    %504 = arith.maximumf %500, %503 : vector<1x16xf32>
    %c0_790 = arith.constant 0 : index
    %c32_791 = arith.constant 32 : index
    %505 = vector.load %arg12[%c0_790, %c32_791] : memref<1x64xf32, #tpu.memory_space<vmem>>, vector<1x16xf32>
    tpu.vector_store %arg12[%c0_790, %c32_791], %504 {strides = array<i32>} : memref<1x64xf32, #tpu.memory_space<vmem>>, vector<1x16xf32>,
    %506 = vector.extract_strided_slice %481 {offsets = [10, 0], sizes = [1, 16], strides = [1, 1]} : vector<16x16xf32> to vector<1x16xf32>
    %507 = vector.extract_strided_slice %481 {offsets = [11, 0], sizes = [1, 16], strides = [1, 1]} : vector<16x16xf32> to vector<1x16xf32>
    %508 = arith.maximumf %506, %507 : vector<1x16xf32>
    %509 = vector.extract_strided_slice %481 {offsets = [14, 0], sizes = [1, 16], strides = [1, 1]} : vector<16x16xf32> to vector<1x16xf32>
    %510 = vector.extract_strided_slice %481 {offsets = [15, 0], sizes = [1, 16], strides = [1, 1]} : vector<16x16xf32> to vector<1x16xf32>
    %511 = arith.maximumf %509, %510 : vector<1x16xf32>
    %512 = arith.maximumf %508, %511 : vector<1x16xf32>
    %c0_792 = arith.constant 0 : index
    %c48_793 = arith.constant 48 : index
    %513 = vector.load %arg12[%c0_792, %c48_793] : memref<1x64xf32, #tpu.memory_space<vmem>>, vector<1x16xf32>
    tpu.vector_store %arg12[%c0_792, %c48_793], %512 {strides = array<i32>} : memref<1x64xf32, #tpu.memory_space<vmem>>, vector<1x16xf32>,
    %c0_794 = arith.constant 0 : index
    %c0_795 = arith.constant 0 : index
    %514 = vector.load %arg12[%c0_794, %c0_795] : memref<1x64xf32, #tpu.memory_space<vmem>>, vector<1x64xf32>
    %c0_796 = arith.constant 0 : index
    %c0_797 = arith.constant 0 : index
    %515 = vector.load %arg6[%c0_796, %c0_797] : memref<64x128xf32, #tpu.memory_space<vmem>>, vector<64x128xf32>
    %cst_798 = arith.constant dense<0.000000e+00> : vector<1x128xf32>
    %516 = tpu.matmul %514, %515, %cst_798 {dimension_numbers = #tpu.dot_dimension_numbers<[1], [0], [0], [1], [0, 0, 1, 1], [], []>} : vector<1x64xf32>, vector<64x128xf32>, vector<1x128xf32> -> vector<1x128xf32>
    %c0_799 = arith.constant 0 : index
    %c0_800 = arith.constant 0 : index
    %517 = vector.load %arg7[%c0_799, %c0_800] : memref<1x128xf32, #tpu.memory_space<vmem>>, vector<1x128xf32>
    %518 = arith.addf %516, %517 : vector<1x128xf32>
    %519 = vector.shape_cast %518 : vector<1x128xf32> to vector<1x1x128xf32>
    %c0_801 = arith.constant 0 : index
    %c0_802 = arith.constant 0 : index
    %c0_803 = arith.constant 0 : index
    %520 = vector.load %arg8[%c0_801, %c0_802, %c0_803] : memref<1x1x128xf32, #tpu.memory_space<vmem>>, vector<1x1x128xf32>
    tpu.vector_store %arg8[%c0_801, %c0_802, %c0_803], %519 {strides = array<i32>} : memref<1x1x128xf32, #tpu.memory_space<vmem>>, vector<1x1x128xf32>,
    return
  }
  func.func @transform_0(%arg0: i32) -> (i32, i32, i32) {
    %c0_i32 = arith.constant 0 : i32
    %c0_i32_0 = arith.constant 0 : i32
    %c0_i32_1 = arith.constant 0 : i32
    return %arg0, %c0_i32, %c0_i32_0 : i32, i32, i32
  }
  func.func @transform_1(%arg0: i32) -> (i32, i32) {
    %c0_i32 = arith.constant 0 : i32
    %c0_i32_0 = arith.constant 0 : i32
    %c0_i32_1 = arith.constant 0 : i32
    return %c0_i32, %c0_i32_0 : i32, i32
  }
  func.func @transform_2(%arg0: i32) -> (i32, i32) {
    %c0_i32 = arith.constant 0 : i32
    %c0_i32_0 = arith.constant 0 : i32
    %c0_i32_1 = arith.constant 0 : i32
    return %c0_i32, %c0_i32_0 : i32, i32
  }
  func.func @transform_3(%arg0: i32) -> (i32, i32) {
    %c0_i32 = arith.constant 0 : i32
    %c0_i32_0 = arith.constant 0 : i32
    %c0_i32_1 = arith.constant 0 : i32
    return %c0_i32, %c0_i32_0 : i32, i32
  }
  func.func @transform_4(%arg0: i32) -> (i32, i32) {
    %c0_i32 = arith.constant 0 : i32
    %c0_i32_0 = arith.constant 0 : i32
    %c0_i32_1 = arith.constant 0 : i32
    return %c0_i32, %c0_i32_0 : i32, i32
  }
  func.func @transform_5(%arg0: i32) -> (i32, i32) {
    %c0_i32 = arith.constant 0 : i32
    %c0_i32_0 = arith.constant 0 : i32
    %c0_i32_1 = arith.constant 0 : i32
    return %c0_i32, %c0_i32_0 : i32, i32
  }
  func.func @transform_6(%arg0: i32) -> (i32, i32) {
    %c0_i32 = arith.constant 0 : i32
    %c0_i32_0 = arith.constant 0 : i32
    %c0_i32_1 = arith.constant 0 : i32
    return %c0_i32, %c0_i32_0 : i32, i32
  }
  func.func @transform_7(%arg0: i32) -> (i32, i32, i32) {
    %c0_i32 = arith.constant 0 : i32
    %c0_i32_0 = arith.constant 0 : i32
    %c0_i32_1 = arith.constant 0 : i32
    return %arg0, %c0_i32, %c0_i32_0 : i32, i32, i32
  }
}

</mosaic_0001>

<llo_original>
// kernel: tile.8
$region0: #{tile.8}
  #allocation0 [shape = 's32[1]{0}', space=sflag, size = 0x4, scoped, tag = 'scoped memory for tile.8']
  %s0 = inlined_call_operand.vmem [shape: f32[8], index: 0, kind: input, shape index: {}]
  %s1 = inlined_call_operand.vmem [shape: f32[8,8], index: 1, kind: output, shape index: {}]
  // Predicated region
  $region2: #{tile.8} parent=0 // pred_check
    _
  $region3: #{tile.8} parent=0 // pred_check_branch
    %3 = sbr.rel (0) target = $region5
  $region4: #{tile.8} parent=0 // pred_region
    _
  $region5: #{tile.8} parent=0 // pred_fallthru
    _
  %v4 = vld [vmem:[%s0] ss:$0 sm:$0xff]
  %5 = vst [vmem:[%s1] sm:$0xff] %v4

// kernel: tile.9
$region0: #{tile.9}
  %s0 = inlined_call_operand.vmem [shape: f32[8,8], index: 0, kind: input, shape index: {}]
  %s1 = inlined_call_operand.vmem [shape: f32[1,64], index: 1, kind: output, shape index: {}]
  $region1: #{tile.9} parent=0
    #allocation0 [shape = 'u8[4096]{0}', space=vmem, size = 0x1000, scoped, tag = 'scoped mem for output reshape']
    %v2 = vld [vmem:[%s0] sm:$0x1]
    %vm3 = vcmask 64512
    %4 = vst.msk [vmem:[#allocation0] sm:$0x1] %vm3, %v2
    %s5 = scalar_lea.vmem %s0, 7
    %v6 = vld [vmem:[%s5] sm:$0x1]
    %7 = vrot.lane.b32.xlu0 %v6, 56
    %v8 = vpop.permute.xlu0 %7
    %vm9 = vcmask 523712
    %10 = vst.msk [vmem:[#allocation0] sm:$0x1] %vm9, %v8
    %s11 = scalar_lea.vmem %s0, 6
    %v12 = vld [vmem:[%s11] sm:$0x1]
    %13 = vrot.lane.b32.xlu0 %v12, 48
    %v14 = vpop.permute.xlu0 %13
    %vm15 = vcmask 458112
    %16 = vst.msk [vmem:[#allocation0] sm:$0x1] %vm15, %v14
    %s17 = scalar_lea.vmem %s0, 5
    %v18 = vld [vmem:[%s17] sm:$0x1]
    %19 = vrot.lane.b32.xlu0 %v18, 40
    %v20 = vpop.permute.xlu0 %19
    %vm21 = vcmask 392512
    %22 = vst.msk [vmem:[#allocation0] sm:$0x1] %vm21, %v20
    %s23 = scalar_lea.vmem %s0, 4
    %v24 = vld [vmem:[%s23] sm:$0x1]
    %25 = vrot.lane.b32.xlu0 %v24, 32
    %v26 = vpop.permute.xlu0 %25
    %vm27 = vcmask 326912
    %28 = vst.msk [vmem:[#allocation0] sm:$0x1] %vm27, %v26
    %s29 = scalar_lea.vmem %s0, 3
    %v30 = vld [vmem:[%s29] sm:$0x1]
    %31 = vrot.lane.b32.xlu0 %v30, 24
    %v32 = vpop.permute.xlu0 %31
    %vm33 = vcmask 261312
    %34 = vst.msk [vmem:[#allocation0] sm:$0x1] %vm33, %v32
    %s35 = scalar_lea.vmem %s0, 2
    %v36 = vld [vmem:[%s35] sm:$0x1]
    %37 = vrot.lane.b32.xlu0 %v36, 16
    %v38 = vpop.permute.xlu0 %37
    %vm39 = vcmask 195712
    %40 = vst.msk [vmem:[#allocation0] sm:$0x1] %vm39, %v38
    %s41 = scalar_lea.vmem %s0, 1
    %v42 = vld [vmem:[%s41] sm:$0x1]
    %43 = vrot.lane.b32.xlu0 %v42, 8
    %v44 = vpop.permute.xlu0 %43
    %vm45 = vcmask 130112
    %46 = vst.msk [vmem:[#allocation0] sm:$0x1] %vm45, %v44
    %s48 = ssub.s32 2, 1
    %v49 = vld [vmem:[#allocation0] sm:%s48]
    %s51 = ssub.s32 2, 1
    %52 = vst [vmem:[%s1] sm:%s51] %v49

// kernel: corrected_cnn_forward.1
$region0: #{corrected_cnn_forward.1}
  #allocation0 [shape = 'u32[]', space=smem, size = 0x4, offset = 0x4, fixed_abs, tag = 'smem constant byte address 0x4 - core index']
  #allocation1 [shape = 'u32[72,128]{1,0:T(1,128)}', space=vmem, size = 0x9000, scoped, tag = 'internal scratch']
  #allocation2 [shape = 'f32[32,600]{1,0:T(8,128)}', space=vmem, size = 0x14000, scoped, tag = 'scratch operand']
  #allocation3 [shape = 'f32[12,96]{1,0:T(8,128)}', space=vmem, size = 0x2000, scoped, tag = 'scratch operand']
  #allocation4 [shape = 'f32[16,200]{1,0:T(8,128)}', space=vmem, size = 0x4000, scoped, tag = 'scratch operand']
  #allocation5 [shape = 'f32[1,64]{1,0:T(1,128)}', space=vmem, size = 0x200, scoped, tag = 'scratch operand']
  %s0 = inlined_call_operand.vmem [shape: f32[2,36,108], index: 0, kind: input, shape index: {}]
  %s1 = inlined_call_operand.vmem [shape: f32[600,64], index: 1, kind: input, shape index: {}]
  %s2 = inlined_call_operand.vmem [shape: f32[1,64], index: 2, kind: input, shape index: {}]
  %s3 = inlined_call_operand.vmem [shape: f32[200,16], index: 3, kind: input, shape index: {}]
  %s4 = inlined_call_operand.vmem [shape: f32[1,16], index: 4, kind: input, shape index: {}]
  %s5 = inlined_call_operand.vmem [shape: f32[64,128], index: 5, kind: input, shape index: {}]
  %s6 = inlined_call_operand.vmem [shape: f32[1,128], index: 6, kind: input, shape index: {}]
  %s7 = inlined_call_operand.hbm [shape: f32[2,1,128], index: 7, kind: output, shape index: {}]
  %s8 = sld [smem:[#allocation0]]
  $region61: #{corrected_cnn_forward.1} parent=0
    _
  %s10 = ssub.s32 1, %s8
  %s11 = scalar_select 0, %s10, %s8
  $region1: #{corrected_cnn_forward.1} parent=0
    #allocation6 [shape = 'u8[1024]{0}', space=vmem, size = 0x400, scoped, tag = 'output window, operand 0']
    #allocation7 [shape = 's32[2]{0}', space=sflag, size = 0x8, scoped, tag = 'scoped memory for corrected_cnn_forward.1']
    %12 = vsyncpa [#allocation7], 0
    %s13 = scalar_lea.sflag [#allocation7], 1
    %14 = vsyncpa %s13, 0
    loop: start=0, step=1, limit=4
    $region2: #{corrected_cnn_forward.1} parent=1 // loop_pre_header
      _
    $region3: #{corrected_cnn_forward.1} parent=1 // loop_header
      %s16 = sphi 0, %s20
      %p17 = scmp.ge.s32.totalorder %s16, 4
      %s26 = sphi 0, %s28
      %s29 = sphi 0, %s26
      %s30 = sphi 0, %s29
      %s46 = sphi 0, %s30
      %s50 = sphi 0, %s50
      %s52 = sphi 0, %s50
      %s53 = sphi 0, %s52
      %s67 = sphi 0, %s53
      %s71 = sphi 0, %s71
      %s73 = sphi 0, %s71
      %s74 = sphi 0, %s73
      %s88 = sphi 0, %s74
      %s92 = sphi 0, %s92
      %s94 = sphi 0, %s92
      %s95 = sphi 0, %s94
      %s109 = sphi 0, %s95
      %s113 = sphi 0, %s113
      %s115 = sphi 0, %s113
      %s116 = sphi 0, %s115
      %s130 = sphi 0, %s116
      %s134 = sphi 0, %s134
      %s136 = sphi 0, %s134
      %s137 = sphi 0, %s136
      %s151 = sphi 0, %s137
      %s155 = sphi 0, %s155
      %s157 = sphi 0, %s155
      %s158 = sphi 0, %s157
      %s172 = sphi 0, %s158
      %s178 = sphi 0, %s180
      %s181 = sphi 0, %s178
      %s182 = sphi 0, %s181
      %s198 = sphi 0, %s182
    $region4: #{corrected_cnn_forward.1} parent=1 // loop_header_branch
      %19 = sbr.rel (%p17) target = $region8
    $region5: #{corrected_cnn_forward.1} parent=1 // loop_body
      %s21 = ssub.s32 %s16, 1
      %s22 = ssub.s32 %s16, 2
      %s23 = sadd.s32 %s16, 1
      %s24 = ssub.s32 %s16, %s23
      %p25 = scmp.eq.s32.totalorder %s24, 0
      %s27 = sadd.s32 %s26, 1
      %s28 = scalar_select %p25, %s26, %s27
      %p31 = pneg %p25
      %p32 = scmp.eq.s32.totalorder %s16, 1
      %p33 = por %p31, %p32
      %p34 = scmp.ne.s32.totalorder %s26, %s29
      %p35 = scmp.eq.s32.totalorder %s16, 0
      %p36 = por %p34, %p35
      %p37 = scmp.ne.s32.totalorder %s26, %s29
      %p38 = scmp.eq.s32.totalorder %s21, 1
      %p39 = por %p37, %p38
      %p40 = scmp.ne.s32.totalorder %s29, %s30
      %p41 = scmp.eq.s32.totalorder %s21, 0
      %p42 = por %p40, %p41
      %p43 = scmp.ne.s32.totalorder %s29, %s30
      %p44 = scmp.eq.s32.totalorder %s22, 1
      %p45 = por %p43, %p44
      %p47 = scmp.ne.s32.totalorder %s30, %s46
      %p48 = scmp.eq.s32.totalorder %s22, 0
      %p49 = por %p47, %p48
      %s51 = sadd.s32 %s50, 1
      %p54 = scmp.eq.s32.totalorder %s16, 1
      %p55 = scmp.ne.s32.totalorder %s50, %s52
      %p56 = scmp.eq.s32.totalorder %s16, 0
      %p57 = por %p55, %p56
      %p58 = scmp.ne.s32.totalorder %s50, %s52
      %p59 = scmp.eq.s32.totalorder %s21, 1
      %p60 = por %p58, %p59
      %p61 = scmp.ne.s32.totalorder %s52, %s53
      %p62 = scmp.eq.s32.totalorder %s21, 0
      %p63 = por %p61, %p62
      %p64 = scmp.ne.s32.totalorder %s52, %s53
      %p65 = scmp.eq.s32.totalorder %s22, 1
      %p66 = por %p64, %p65
      %p68 = scmp.ne.s32.totalorder %s53, %s67
      %p69 = scmp.eq.s32.totalorder %s22, 0
      %p70 = por %p68, %p69
      %s72 = sadd.s32 %s71, 1
      %p75 = scmp.eq.s32.totalorder %s16, 1
      %p76 = scmp.ne.s32.totalorder %s71, %s73
      %p77 = scmp.eq.s32.totalorder %s16, 0
      %p78 = por %p76, %p77
      %p79 = scmp.ne.s32.totalorder %s71, %s73
      %p80 = scmp.eq.s32.totalorder %s21, 1
      %p81 = por %p79, %p80
      %p82 = scmp.ne.s32.totalorder %s73, %s74
      %p83 = scmp.eq.s32.totalorder %s21, 0
      %p84 = por %p82, %p83
      %p85 = scmp.ne.s32.totalorder %s73, %s74
      %p86 = scmp.eq.s32.totalorder %s22, 1
      %p87 = por %p85, %p86
      %p89 = scmp.ne.s32.totalorder %s74, %s88
      %p90 = scmp.eq.s32.totalorder %s22, 0
      %p91 = por %p89, %p90
      %s93 = sadd.s32 %s92, 1
      %p96 = scmp.eq.s32.totalorder %s16, 1
      %p97 = scmp.ne.s32.totalorder %s92, %s94
      %p98 = scmp.eq.s32.totalorder %s16, 0
      %p99 = por %p97, %p98
      %p100 = scmp.ne.s32.totalorder %s92, %s94
      %p101 = scmp.eq.s32.totalorder %s21, 1
      %p102 = por %p100, %p101
      %p103 = scmp.ne.s32.totalorder %s94, %s95
      %p104 = scmp.eq.s32.totalorder %s21, 0
      %p105 = por %p103, %p104
      %p106 = scmp.ne.s32.totalorder %s94, %s95
      %p107 = scmp.eq.s32.totalorder %s22, 1
      %p108 = por %p106, %p107
      %p110 = scmp.ne.s32.totalorder %s95, %s109
      %p111 = scmp.eq.s32.totalorder %s22, 0
      %p112 = por %p110, %p111
      %s114 = sadd.s32 %s113, 1
      %p117 = scmp.eq.s32.totalorder %s16, 1
      %p118 = scmp.ne.s32.totalorder %s113, %s115
      %p119 = scmp.eq.s32.totalorder %s16, 0
      %p120 = por %p118, %p119
      %p121 = scmp.ne.s32.totalorder %s113, %s115
      %p122 = scmp.eq.s32.totalorder %s21, 1
      %p123 = por %p121, %p122
      %p124 = scmp.ne.s32.totalorder %s115, %s116
      %p125 = scmp.eq.s32.totalorder %s21, 0
      %p126 = por %p124, %p125
      %p127 = scmp.ne.s32.totalorder %s115, %s116
      %p128 = scmp.eq.s32.totalorder %s22, 1
      %p129 = por %p127, %p128
      %p131 = scmp.ne.s32.totalorder %s116, %s130
      %p132 = scmp.eq.s32.totalorder %s22, 0
      %p133 = por %p131, %p132
      %s135 = sadd.s32 %s134, 1
      %p138 = scmp.eq.s32.totalorder %s16, 1
      %p139 = scmp.ne.s32.totalorder %s134, %s136
      %p140 = scmp.eq.s32.totalorder %s16, 0
      %p141 = por %p139, %p140
      %p142 = scmp.ne.s32.totalorder %s134, %s136
      %p143 = scmp.eq.s32.totalorder %s21, 1
      %p144 = por %p142, %p143
      %p145 = scmp.ne.s32.totalorder %s136, %s137
      %p146 = scmp.eq.s32.totalorder %s21, 0
      %p147 = por %p145, %p146
      %p148 = scmp.ne.s32.totalorder %s136, %s137
      %p149 = scmp.eq.s32.totalorder %s22, 1
      %p150 = por %p148, %p149
      %p152 = scmp.ne.s32.totalorder %s137, %s151
      %p153 = scmp.eq.s32.totalorder %s22, 0
      %p154 = por %p152, %p153
      %s156 = sadd.s32 %s155, 1
      %p159 = scmp.eq.s32.totalorder %s16, 1
      %p160 = scmp.ne.s32.totalorder %s155, %s157
      %p161 = scmp.eq.s32.totalorder %s16, 0
      %p162 = por %p160, %p161
      %p163 = scmp.ne.s32.totalorder %s155, %s157
      %p164 = scmp.eq.s32.totalorder %s21, 1
      %p165 = por %p163, %p164
      %p166 = scmp.ne.s32.totalorder %s157, %s158
      %p167 = scmp.eq.s32.totalorder %s21, 0
      %p168 = por %p166, %p167
      %p169 = scmp.ne.s32.totalorder %s157, %s158
      %p170 = scmp.eq.s32.totalorder %s22, 1
      %p171 = por %p169, %p170
      %p173 = scmp.ne.s32.totalorder %s158, %s172
      %p174 = scmp.eq.s32.totalorder %s22, 0
      %p175 = por %p173, %p174
      %s176 = ssub.s32 %s16, %s23
      %p177 = scmp.eq.s32.totalorder %s176, 0
      %s179 = sadd.s32 %s178, 1
      %s180 = scalar_select %p177, %s178, %s179
      %p183 = pneg %p177
      %p184 = scmp.eq.s32.totalorder %s16, 1
      %p185 = por %p183, %p184
      %p186 = scmp.ne.s32.totalorder %s178, %s181
      %p187 = scmp.eq.s32.totalorder %s16, 0
      %p188 = por %p186, %p187
      %p189 = scmp.ne.s32.totalorder %s178, %s181
      %p190 = scmp.eq.s32.totalorder %s21, 1
      %p191 = por %p189, %p190
      %p192 = scmp.ne.s32.totalorder %s181, %s182
      %p193 = scmp.eq.s32.totalorder %s21, 0
      %p194 = por %p192, %p193
      %p195 = scmp.ne.s32.totalorder %s181, %s182
      %p196 = scmp.eq.s32.totalorder %s22, 1
      %p197 = por %p195, %p196
      %p199 = scmp.ne.s32.totalorder %s182, %s198
      %p200 = scmp.eq.s32.totalorder %s22, 0
      %p201 = por %p199, %p200
      %p202 = scmp.le.s32.totalorder 1, %s16
      %p203 = scmp.lt.s32.totalorder %s16, 3
      %p204 = pnand %p202, %p203
      %p205 = pneg %p204
      // Predicated region
      $region9: #{corrected_cnn_forward.1} parent=5 // pred_check
        _
      $region10: #{corrected_cnn_forward.1} parent=5 // pred_check_branch
        %207 = sbr.rel (%p204) target = $region12
      $region11: #{corrected_cnn_forward.1} parent=5 // pred_region
        %s208 = ssub.s32 %s16, 1
        // Predicated region
        $region13: #{corrected_cnn_forward.1} parent=11 // pred_check
          %p209 = pneg %p63
        $region14: #{corrected_cnn_forward.1} parent=11 // pred_check_branch
          %211 = sbr.rel (%p209) target = $region16
        $region15: #{corrected_cnn_forward.1} parent=11 // pred_region
          _
        $region16: #{corrected_cnn_forward.1} parent=11 // pred_fallthru
          _
        // Predicated region
        $region17: #{corrected_cnn_forward.1} parent=11 // pred_check
          %p212 = pneg %p84
        $region18: #{corrected_cnn_forward.1} parent=11 // pred_check_branch
          %214 = sbr.rel (%p212) target = $region20
        $region19: #{corrected_cnn_forward.1} parent=11 // pred_region
          _
        $region20: #{corrected_cnn_forward.1} parent=11 // pred_fallthru
          _
        // Predicated region
        $region21: #{corrected_cnn_forward.1} parent=11 // pred_check
          %p215 = pneg %p105
        $region22: #{corrected_cnn_forward.1} parent=11 // pred_check_branch
          %217 = sbr.rel (%p215) target = $region24
        $region23: #{corrected_cnn_forward.1} parent=11 // pred_region
          _
        $region24: #{corrected_cnn_forward.1} parent=11 // pred_fallthru
          _
        // Predicated region
        $region25: #{corrected_cnn_forward.1} parent=11 // pred_check
          %p218 = pneg %p126
        $region26: #{corrected_cnn_forward.1} parent=11 // pred_check_branch
          %220 = sbr.rel (%p218) target = $region28
        $region27: #{corrected_cnn_forward.1} parent=11 // pred_region
          _
        $region28: #{corrected_cnn_forward.1} parent=11 // pred_fallthru
          _
        // Predicated region
        $region29: #{corrected_cnn_forward.1} parent=11 // pred_check
          %p221 = pneg %p147
        $region30: #{corrected_cnn_forward.1} parent=11 // pred_check_branch
          %223 = sbr.rel (%p221) target = $region32
        $region31: #{corrected_cnn_forward.1} parent=11 // pred_region
          _
        $region32: #{corrected_cnn_forward.1} parent=11 // pred_fallthru
          _
        // Predicated region
        $region33: #{corrected_cnn_forward.1} parent=11 // pred_check
          %p224 = pneg %p168
        $region34: #{corrected_cnn_forward.1} parent=11 // pred_check_branch
          %226 = sbr.rel (%p224) target = $region36
        $region35: #{corrected_cnn_forward.1} parent=11 // pred_region
          _
        $region36: #{corrected_cnn_forward.1} parent=11 // pred_fallthru
          _
      $region12: #{corrected_cnn_forward.1} parent=5 // pred_fallthru
        _
      %p227 = scmp.lt.s32.totalorder %s16, 2
      // Predicated region
      $region37: #{corrected_cnn_forward.1} parent=5 // pred_check
        %p228 = pneg %p227
      $region38: #{corrected_cnn_forward.1} parent=5 // pred_check_branch
        %230 = sbr.rel (%p228) target = $region40
      $region39: #{corrected_cnn_forward.1} parent=5 // pred_region
        // Predicated region
        $region41: #{corrected_cnn_forward.1} parent=39 // pred_check
          %p231 = pneg %p36
        $region42: #{corrected_cnn_forward.1} parent=39 // pred_check_branch
          %233 = sbr.rel (%p231) target = $region44
        $region43: #{corrected_cnn_forward.1} parent=39 // pred_region
          %p234 = scmp.lt.s32.totalorder %s16, 1
          %s235 = scalar_select %p234, %s16, 1
          %s236 = smul.addr %s235, 5
          %s237 = smul.addr %s236, 8
          %s238 = scalar_lea.vmem %s0, %s237
        $region44: #{corrected_cnn_forward.1} parent=39 // pred_fallthru
          _
      $region40: #{corrected_cnn_forward.1} parent=5 // pred_fallthru
        _
      %p239 = scmp.le.s32.totalorder 1, %s16
      %p240 = scmp.lt.s32.totalorder %s16, 3
      %p241 = pnand %p239, %p240
      %p242 = pneg %p241
      // Predicated region
      $region45: #{corrected_cnn_forward.1} parent=5 // pred_check
        _
      $region46: #{corrected_cnn_forward.1} parent=5 // pred_check_branch
        %244 = sbr.rel (%p241) target = $region48
      $region47: #{corrected_cnn_forward.1} parent=5 // pred_region
        %s245 = ssub.s32 %s16, 1
        %p246 = scmp.lt.s32.totalorder %s21, 1
        %s247 = scalar_select %p246, %s21, 1
        %s248 = smul.addr %s247, 5
        %s249 = smul.addr %s248, 8
        %s250 = scalar_lea.vmem %s0, %s249
        %p251 = pneg %p42
        %p252 = pneg %p39
        %p253 = pneg %p63
        %p254 = pneg %p60
        %p255 = pneg %p84
        %p256 = pneg %p81
        %p257 = pneg %p105
        %p258 = pneg %p102
        %p259 = pneg %p126
        %p260 = pneg %p123
        %p261 = pneg %p147
        %p262 = pneg %p144
        %p263 = pneg %p168
        %p264 = pneg %p165
        %p265 = pneg %p194
        %p266 = pneg %p191
        %s267 = sand.u32 %s181, 1
        %s268 = scalar_lea.sflag [#allocation7], %s267
        %s269 = sand.u32 %s181, 1
        %s270 = scalar_lea.vmem [#allocation6], %s269
        %p271 = scmp.lt.s32.totalorder %s21, 1
        %s272 = scalar_select %p271, %s21, 1
        %s273 = smul.addr %s272, 5
        %s274 = smul.addr %s273, 8
        %s275 = scalar_lea.vmem %s0, %s274
        %v276 = vld [vmem:[%s275] sm:$0xff]
        %vm277 = vcmask 195584
        %278 = vst.msk [vmem:[#allocation2] sm:$0xff] %vm277, %v276
        %v279 = vld [vmem:[%s275] sm:$0xff]
        %281 = vrot.lane.b32.xlu0 %v279, 125
        %v282 = vpop.permute.xlu0 %281
        %vm284 = vcmask 392384
        %285 = vst.msk [vmem:[#allocation2] sm:$0xff] %vm284, %v282
        %v286 = vld [vmem:[%s275] sm:$0xff]
        %288 = vrot.lane.b32.xlu0 %v286, 122
        %v289 = vpop.permute.xlu0 %288
        %vm291 = vcmask 589184
        %292 = vst.msk [vmem:[#allocation2] sm:$0xff] %vm291, %v289
        %v293 = vld [vmem:[%s275] sm:$0xff]
        %295 = vrot.lane.b32.xlu0 %v293, 119
        %v296 = vpop.permute.xlu0 %295
        %vm298 = vcmask 785984
        %299 = vst.msk [vmem:[#allocation2] sm:$0xff] %vm298, %v296
        %v300 = vld [vmem:[%s275] sm:$0xff]
        %302 = vrot.lane.b32.xlu0 %v300, 93
        %v303 = vpop.permute.xlu0 %302
        %vm305 = vcmask 982784
        %306 = vst.msk [vmem:[#allocation2] sm:$0xff] %vm305, %v303
        %v307 = vld [vmem:[%s275 + $0x9] sm:$0xff]
        %309 = vrot.lane.b32.xlu0 %v307, 120
        %v310 = vpop.permute.xlu0 %309
        %vm312 = vcmask 1048512
        %313 = vst.msk [vmem:[#allocation2] sm:$0xff] %vm312, %v310
        %vm314 = vcmask 130048
        %315 = vst.msk [vmem:[#allocation2 + $0x8] sm:$0xff] %vm314, %v310
        %v316 = vld [vmem:[%s275 + $0x9] sm:$0xff]
        %318 = vrot.lane.b32.xlu0 %v316, 117
        %v319 = vpop.permute.xlu0 %318
        %vm321 = vcmask 326784
        %322 = vst.msk [vmem:[#allocation2 + $0x8] sm:$0xff] %vm321, %v319
        %v323 = vld [vmem:[%s275 + $0x9] sm:$0xff]
        %325 = vrot.lane.b32.xlu0 %v323, 114
        %v326 = vpop.permute.xlu0 %325
        %vm328 = vcmask 523584
        %329 = vst.msk [vmem:[#allocation2 + $0x8] sm:$0xff] %vm328, %v326
        %v330 = vld [vmem:[%s275 + $0x9] sm:$0xff]
        %332 = vrot.lane.b32.xlu0 %v330, 111
        %v333 = vpop.permute.xlu0 %332
        %vm335 = vcmask 720384
        %336 = vst.msk [vmem:[#allocation2 + $0x8] sm:$0xff] %vm335, %v333
        %v337 = vld [vmem:[%s275 + $0x9] sm:$0xff]
        %339 = vrot.lane.b32.xlu0 %v337, 85
        %v340 = vpop.permute.xlu0 %339
        %vm342 = vcmask 917184
        %343 = vst.msk [vmem:[#allocation2 + $0x8] sm:$0xff] %vm342, %v340
        %v344 = vld [vmem:[%s275 + $0x12] sm:$0xff]
        %346 = vrot.lane.b32.xlu0 %v344, 112
        %v347 = vpop.permute.xlu0 %346
        %vm349 = vcmask 1048448
        %350 = vst.msk [vmem:[#allocation2 + $0x8] sm:$0xff] %vm349, %v347
        %vm351 = vcmask 64512
        %352 = vst.msk [vmem:[#allocation2 + $0x10] sm:$0xff] %vm351, %v347
        %v353 = vld [vmem:[%s275 + $0x12] sm:$0xff]
        %355 = vrot.lane.b32.xlu0 %v353, 109
        %v356 = vpop.permute.xlu0 %355
        %vm358 = vcmask 261184
        %359 = vst.msk [vmem:[#allocation2 + $0x10] sm:$0xff] %vm358, %v356
        %v360 = vld [vmem:[%s275 + $0x12] sm:$0xff]
        %362 = vrot.lane.b32.xlu0 %v360, 106
        %v363 = vpop.permute.xlu0 %362
        %vm365 = vcmask 457984
        %366 = vst.msk [vmem:[#allocation2 + $0x10] sm:$0xff] %vm365, %v363
        %v367 = vld [vmem:[%s275 + $0x12] sm:$0xff]
        %369 = vrot.lane.b32.xlu0 %v367, 103
        %v370 = vpop.permute.xlu0 %369
        %vm372 = vcmask 654784
        %373 = vst.msk [vmem:[#allocation2 + $0x10] sm:$0xff] %vm372, %v370
        %v374 = vld [vmem:[%s275 + $0x12] sm:$0xff]
        %376 = vrot.lane.b32.xlu0 %v374, 77
        %v377 = vpop.permute.xlu0 %376
        %vm379 = vcmask 851584
        %380 = vst.msk [vmem:[#allocation2 + $0x10] sm:$0xff] %vm379, %v377
        %v381 = vld [vmem:[%s275 + $0x1b] sm:$0xff]
        %383 = vrot.lane.b32.xlu0 %v381, 104
        %v384 = vpop.permute.xlu0 %383
        %vm386 = vcmask 1048384
        %387 = vst.msk [vmem:[#allocation2 + $0x10] sm:$0xff] %vm386, %v384
        %v388 = vld [vmem:[%s275 + $0x1b] sm:$0xff]
        %390 = vrot.lane.b32.xlu0 %v388, 101
        %v391 = vpop.permute.xlu0 %390
        %393 = vst.msk [vmem:[#allocation2 + $0x18] sm:$0xff] %vm277, %v391
        %v394 = vld [vmem:[%s275 + $0x1b] sm:$0xff]
        %396 = vrot.lane.b32.xlu0 %v394, 98
        %v397 = vpop.permute.xlu0 %396
        %399 = vst.msk [vmem:[#allocation2 + $0x18] sm:$0xff] %vm284, %v397
        %v400 = vld [vmem:[%s275 + $0x1b] sm:$0xff]
        %402 = vrot.lane.b32.xlu0 %v400, 95
        %v403 = vpop.permute.xlu0 %402
        %405 = vst.msk [vmem:[#allocation2 + $0x18] sm:$0xff] %vm291, %v403
        %v406 = vld [vmem:[%s275 + $0x1b] sm:$0xff]
        %408 = vrot.lane.b32.xlu0 %v406, 69
        %v409 = vpop.permute.xlu0 %408
        %411 = vst.msk [vmem:[#allocation2 + $0x18] sm:$0xff] %vm298, %v409
        %v412 = vld [vmem:[%s275 + $0x1] sm:$0xff]
        %414 = vrot.lane.b32.xlu0 %v412, 96
        %v415 = vpop.permute.xlu0 %414
        %417 = vst.msk [vmem:[#allocation2 + $0x18] sm:$0xff] %vm305, %v415
        %v418 = vld [vmem:[%s275 + $0x1] sm:$0xff]
        %420 = vrot.lane.b32.xlu0 %v418, 93
        %v421 = vpop.permute.xlu0 %420
        %423 = vst.msk [vmem:[#allocation2 + $0x18] sm:$0xff] %vm312, %v421
        %424 = vst.msk [vmem:[#allocation2 + $0x20] sm:$0xff] %vm314, %v421
        %v425 = vld [vmem:[%s275 + $0x1] sm:$0xff]
        %427 = vrot.lane.b32.xlu0 %v425, 90
        %v428 = vpop.permute.xlu0 %427
        %430 = vst.msk [vmem:[#allocation2 + $0x20] sm:$0xff] %vm321, %v428
        %v431 = vld [vmem:[%s275 + $0x1] sm:$0xff]
        %433 = vrot.lane.b32.xlu0 %v431, 87
        %v434 = vpop.permute.xlu0 %433
        %436 = vst.msk [vmem:[#allocation2 + $0x20] sm:$0xff] %vm328, %v434
        %v437 = vld [vmem:[%s275 + $0x1] sm:$0xff]
        %439 = vrot.lane.b32.xlu0 %v437, 61
        %v440 = vpop.permute.xlu0 %439
        %442 = vst.msk [vmem:[#allocation2 + $0x20] sm:$0xff] %vm335, %v440
        %v443 = vld [vmem:[%s275] sm:$0xff]
        %445 = vrot.lane.b32.xlu0 %v443, 74
        %v446 = vpop.permute.xlu0 %445
        %448 = vst.msk [vmem:[#allocation2 + $0x28] sm:$0xff] %vm277, %v446
        %v449 = vld [vmem:[%s275] sm:$0xff]
        %451 = vrot.lane.b32.xlu0 %v449, 71
        %v452 = vpop.permute.xlu0 %451
        %454 = vst.msk [vmem:[#allocation2 + $0x28] sm:$0xff] %vm284, %v452
        %v455 = vld [vmem:[%s275] sm:$0xff]
        %457 = vrot.lane.b32.xlu0 %v455, 45
        %v458 = vpop.permute.xlu0 %457
        %460 = vst.msk [vmem:[#allocation2 + $0x28] sm:$0xff] %vm291, %v458
        %v461 = vld [vmem:[%s275] sm:$0xff]
        %463 = vrot.lane.b32.xlu0 %v461, 42
        %v464 = vpop.permute.xlu0 %463
        %466 = vst.msk [vmem:[#allocation2 + $0x28] sm:$0xff] %vm298, %v464
        %v467 = vld [vmem:[%s275] sm:$0xff]
        %469 = vrot.lane.b32.xlu0 %v467, 39
        %v470 = vpop.permute.xlu0 %469
        %472 = vst.msk [vmem:[#allocation2 + $0x28] sm:$0xff] %vm305, %v470
        %v473 = vld [vmem:[%s275 + $0x9] sm:$0xff]
        %475 = vrot.lane.b32.xlu0 %v473, 66
        %v476 = vpop.permute.xlu0 %475
        %478 = vst.msk [vmem:[#allocation2 + $0x28] sm:$0xff] %vm312, %v476
        %479 = vst.msk [vmem:[#allocation2 + $0x30] sm:$0xff] %vm314, %v476
        %v480 = vld [vmem:[%s275 + $0x9] sm:$0xff]
        %482 = vrot.lane.b32.xlu0 %v480, 63
        %v483 = vpop.permute.xlu0 %482
        %485 = vst.msk [vmem:[#allocation2 + $0x30] sm:$0xff] %vm321, %v483
        %v486 = vld [vmem:[%s275 + $0x9] sm:$0xff]
        %488 = vrot.lane.b32.xlu0 %v486, 37
        %v489 = vpop.permute.xlu0 %488
        %491 = vst.msk [vmem:[#allocation2 + $0x30] sm:$0xff] %vm328, %v489
        %v492 = vld [vmem:[%s275 + $0x9] sm:$0xff]
        %494 = vrot.lane.b32.xlu0 %v492, 34
        %v495 = vpop.permute.xlu0 %494
        %497 = vst.msk [vmem:[#allocation2 + $0x30] sm:$0xff] %vm335, %v495
        %v498 = vld [vmem:[%s275 + $0x9] sm:$0xff]
        %500 = vrot.lane.b32.xlu0 %v498, 31
        %v501 = vpop.permute.xlu0 %500
        %503 = vst.msk [vmem:[#allocation2 + $0x30] sm:$0xff] %vm342, %v501
        %v504 = vld [vmem:[%s275 + $0x12] sm:$0xff]
        %506 = vrot.lane.b32.xlu0 %v504, 58
        %v507 = vpop.permute.xlu0 %506
        %509 = vst.msk [vmem:[#allocation2 + $0x30] sm:$0xff] %vm349, %v507
        %510 = vst.msk [vmem:[#allocation2 + $0x38] sm:$0xff] %vm351, %v507
        %v511 = vld [vmem:[%s275 + $0x12] sm:$0xff]
        %513 = vrot.lane.b32.xlu0 %v511, 55
        %v514 = vpop.permute.xlu0 %513
        %516 = vst.msk [vmem:[#allocation2 + $0x38] sm:$0xff] %vm358, %v514
        %v517 = vld [vmem:[%s275 + $0x12] sm:$0xff]
        %519 = vrot.lane.b32.xlu0 %v517, 29
        %v520 = vpop.permute.xlu0 %519
        %522 = vst.msk [vmem:[#allocation2 + $0x38] sm:$0xff] %vm365, %v520
        %v523 = vld [vmem:[%s275 + $0x12] sm:$0xff]
        %525 = vrot.lane.b32.xlu0 %v523, 26
        %v526 = vpop.permute.xlu0 %525
        %528 = vst.msk [vmem:[#allocation2 + $0x38] sm:$0xff] %vm372, %v526
        %v529 = vld [vmem:[%s275 + $0x12] sm:$0xff]
        %531 = vrot.lane.b32.xlu0 %v529, 23
        %v532 = vpop.permute.xlu0 %531
        %534 = vst.msk [vmem:[#allocation2 + $0x38] sm:$0xff] %vm379, %v532
        %v535 = vld [vmem:[%s275 + $0x1b] sm:$0xff]
        %537 = vrot.lane.b32.xlu0 %v535, 50
        %v538 = vpop.permute.xlu0 %537
        %540 = vst.msk [vmem:[#allocation2 + $0x38] sm:$0xff] %vm386, %v538
        %v541 = vld [vmem:[%s275 + $0x1b] sm:$0xff]
        %543 = vrot.lane.b32.xlu0 %v541, 47
        %v544 = vpop.permute.xlu0 %543
        %546 = vst.msk [vmem:[#allocation2 + $0x40] sm:$0xff] %vm277, %v544
        %v547 = vld [vmem:[%s275 + $0x1b] sm:$0xff]
        %549 = vrot.lane.b32.xlu0 %v547, 21
        %v550 = vpop.permute.xlu0 %549
        %552 = vst.msk [vmem:[#allocation2 + $0x40] sm:$0xff] %vm284, %v550
        %v553 = vld [vmem:[%s275 + $0x1b] sm:$0xff]
        %555 = vrot.lane.b32.xlu0 %v553, 18
        %v556 = vpop.permute.xlu0 %555
        %558 = vst.msk [vmem:[#allocation2 + $0x40] sm:$0xff] %vm291, %v556
        %v559 = vld [vmem:[%s275 + $0x1b] sm:$0xff]
        %561 = vrot.lane.b32.xlu0 %v559, 15
        %v562 = vpop.permute.xlu0 %561
        %564 = vst.msk [vmem:[#allocation2 + $0x40] sm:$0xff] %vm298, %v562
        %v565 = vld [vmem:[%s275 + $0x1] sm:$0xff]
        %567 = vrot.lane.b32.xlu0 %v565, 42
        %v568 = vpop.permute.xlu0 %567
        %570 = vst.msk [vmem:[#allocation2 + $0x40] sm:$0xff] %vm305, %v568
        %v571 = vld [vmem:[%s275 + $0x1] sm:$0xff]
        %573 = vrot.lane.b32.xlu0 %v571, 39
        %v574 = vpop.permute.xlu0 %573
        %576 = vst.msk [vmem:[#allocation2 + $0x40] sm:$0xff] %vm312, %v574
        %577 = vst.msk [vmem:[#allocation2 + $0x48] sm:$0xff] %vm314, %v574
        %v578 = vld [vmem:[%s275 + $0x1] sm:$0xff]
        %580 = vrot.lane.b32.xlu0 %v578, 13
        %v581 = vpop.permute.xlu0 %580
        %583 = vst.msk [vmem:[#allocation2 + $0x48] sm:$0xff] %vm321, %v581
        %v584 = vld [vmem:[%s275 + $0x1] sm:$0xff]
        %586 = vrot.lane.b32.xlu0 %v584, 10
        %v587 = vpop.permute.xlu0 %586
        %589 = vst.msk [vmem:[#allocation2 + $0x48] sm:$0xff] %vm328, %v587
        %v590 = vld [vmem:[%s275 + $0x1] sm:$0xff]
        %592 = vrot.lane.b32.xlu0 %v590, 7
        %v593 = vpop.permute.xlu0 %592
        %595 = vst.msk [vmem:[#allocation2 + $0x48] sm:$0xff] %vm335, %v593
        %v596 = vld [vmem:[%s275 + $0x12] sm:$0xff]
        %597 = vst.msk [vmem:[#allocation2 + $0x50] sm:$0xff] %vm277, %v596
        %v598 = vld [vmem:[%s275 + $0x12] sm:$0xff]
        %600 = vrot.lane.b32.xlu0 %v598, 125
        %v601 = vpop.permute.xlu0 %600
        %603 = vst.msk [vmem:[#allocation2 + $0x50] sm:$0xff] %vm284, %v601
        %v604 = vld [vmem:[%s275 + $0x12] sm:$0xff]
        %606 = vrot.lane.b32.xlu0 %v604, 122
        %v607 = vpop.permute.xlu0 %606
        %609 = vst.msk [vmem:[#allocation2 + $0x50] sm:$0xff] %vm291, %v607
        %v610 = vld [vmem:[%s275 + $0x12] sm:$0xff]
        %612 = vrot.lane.b32.xlu0 %v610, 119
        %v613 = vpop.permute.xlu0 %612
        %615 = vst.msk [vmem:[#allocation2 + $0x50] sm:$0xff] %vm298, %v613
        %v616 = vld [vmem:[%s275 + $0x12] sm:$0xff]
        %618 = vrot.lane.b32.xlu0 %v616, 93
        %v619 = vpop.permute.xlu0 %618
        %621 = vst.msk [vmem:[#allocation2 + $0x50] sm:$0xff] %vm305, %v619
        %v622 = vld [vmem:[%s275 + $0x1b] sm:$0xff]
        %624 = vrot.lane.b32.xlu0 %v622, 120
        %v625 = vpop.permute.xlu0 %624
        %627 = vst.msk [vmem:[#allocation2 + $0x50] sm:$0xff] %vm312, %v625
        %628 = vst.msk [vmem:[#allocation2 + $0x58] sm:$0xff] %vm314, %v625
        %v629 = vld [vmem:[%s275 + $0x1b] sm:$0xff]
        %631 = vrot.lane.b32.xlu0 %v629, 117
        %v632 = vpop.permute.xlu0 %631
        %634 = vst.msk [vmem:[#allocation2 + $0x58] sm:$0xff] %vm321, %v632
        %v635 = vld [vmem:[%s275 + $0x1b] sm:$0xff]
        %637 = vrot.lane.b32.xlu0 %v635, 114
        %v638 = vpop.permute.xlu0 %637
        %640 = vst.msk [vmem:[#allocation2 + $0x58] sm:$0xff] %vm328, %v638
        %v641 = vld [vmem:[%s275 + $0x1b] sm:$0xff]
        %643 = vrot.lane.b32.xlu0 %v641, 111
        %v644 = vpop.permute.xlu0 %643
        %646 = vst.msk [vmem:[#allocation2 + $0x58] sm:$0xff] %vm335, %v644
        %v647 = vld [vmem:[%s275 + $0x1b] sm:$0xff]
        %649 = vrot.lane.b32.xlu0 %v647, 85
        %v650 = vpop.permute.xlu0 %649
        %652 = vst.msk [vmem:[#allocation2 + $0x58] sm:$0xff] %vm342, %v650
        %v653 = vld [vmem:[%s275 + $0x1] sm:$0xff]
        %655 = vrot.lane.b32.xlu0 %v653, 112
        %v656 = vpop.permute.xlu0 %655
        %658 = vst.msk [vmem:[#allocation2 + $0x58] sm:$0xff] %vm349, %v656
        %659 = vst.msk [vmem:[#allocation2 + $0x60] sm:$0xff] %vm351, %v656
        %v660 = vld [vmem:[%s275 + $0x1] sm:$0xff]
        %662 = vrot.lane.b32.xlu0 %v660, 109
        %v663 = vpop.permute.xlu0 %662
        %665 = vst.msk [vmem:[#allocation2 + $0x60] sm:$0xff] %vm358, %v663
        %v666 = vld [vmem:[%s275 + $0x1] sm:$0xff]
        %668 = vrot.lane.b32.xlu0 %v666, 106
        %v669 = vpop.permute.xlu0 %668
        %671 = vst.msk [vmem:[#allocation2 + $0x60] sm:$0xff] %vm365, %v669
        %v672 = vld [vmem:[%s275 + $0x1] sm:$0xff]
        %674 = vrot.lane.b32.xlu0 %v672, 103
        %v675 = vpop.permute.xlu0 %674
        %677 = vst.msk [vmem:[#allocation2 + $0x60] sm:$0xff] %vm372, %v675
        %v678 = vld [vmem:[%s275 + $0x1] sm:$0xff]
        %680 = vrot.lane.b32.xlu0 %v678, 77
        %v681 = vpop.permute.xlu0 %680
        %683 = vst.msk [vmem:[#allocation2 + $0x60] sm:$0xff] %vm379, %v681
        %v684 = vld [vmem:[%s275 + $0xa] sm:$0xff]
        %686 = vrot.lane.b32.xlu0 %v684, 104
        %v687 = vpop.permute.xlu0 %686
        %689 = vst.msk [vmem:[#allocation2 + $0x60] sm:$0xff] %vm386, %v687
        %v690 = vld [vmem:[%s275 + $0xa] sm:$0xff]
        %692 = vrot.lane.b32.xlu0 %v690, 101
        %v693 = vpop.permute.xlu0 %692
        %695 = vst.msk [vmem:[#allocation2 + $0x68] sm:$0xff] %vm277, %v693
        %v696 = vld [vmem:[%s275 + $0xa] sm:$0xff]
        %698 = vrot.lane.b32.xlu0 %v696, 98
        %v699 = vpop.permute.xlu0 %698
        %701 = vst.msk [vmem:[#allocation2 + $0x68] sm:$0xff] %vm284, %v699
        %v702 = vld [vmem:[%s275 + $0xa] sm:$0xff]
        %704 = vrot.lane.b32.xlu0 %v702, 95
        %v705 = vpop.permute.xlu0 %704
        %707 = vst.msk [vmem:[#allocation2 + $0x68] sm:$0xff] %vm291, %v705
        %v708 = vld [vmem:[%s275 + $0xa] sm:$0xff]
        %710 = vrot.lane.b32.xlu0 %v708, 69
        %v711 = vpop.permute.xlu0 %710
        %713 = vst.msk [vmem:[#allocation2 + $0x68] sm:$0xff] %vm298, %v711
        %v714 = vld [vmem:[%s275 + $0x13] sm:$0xff]
        %716 = vrot.lane.b32.xlu0 %v714, 96
        %v717 = vpop.permute.xlu0 %716
        %719 = vst.msk [vmem:[#allocation2 + $0x68] sm:$0xff] %vm305, %v717
        %v720 = vld [vmem:[%s275 + $0x13] sm:$0xff]
        %722 = vrot.lane.b32.xlu0 %v720, 93
        %v723 = vpop.permute.xlu0 %722
        %725 = vst.msk [vmem:[#allocation2 + $0x68] sm:$0xff] %vm312, %v723
        %726 = vst.msk [vmem:[#allocation2 + $0x70] sm:$0xff] %vm314, %v723
        %v727 = vld [vmem:[%s275 + $0x13] sm:$0xff]
        %729 = vrot.lane.b32.xlu0 %v727, 90
        %v730 = vpop.permute.xlu0 %729
        %732 = vst.msk [vmem:[#allocation2 + $0x70] sm:$0xff] %vm321, %v730
        %v733 = vld [vmem:[%s275 + $0x13] sm:$0xff]
        %735 = vrot.lane.b32.xlu0 %v733, 87
        %v736 = vpop.permute.xlu0 %735
        %738 = vst.msk [vmem:[#allocation2 + $0x70] sm:$0xff] %vm328, %v736
        %v739 = vld [vmem:[%s275 + $0x13] sm:$0xff]
        %741 = vrot.lane.b32.xlu0 %v739, 61
        %v742 = vpop.permute.xlu0 %741
        %744 = vst.msk [vmem:[#allocation2 + $0x70] sm:$0xff] %vm335, %v742
        %v745 = vld [vmem:[%s275 + $0x12] sm:$0xff]
        %747 = vrot.lane.b32.xlu0 %v745, 74
        %v748 = vpop.permute.xlu0 %747
        %750 = vst.msk [vmem:[#allocation2 + $0x78] sm:$0xff] %vm277, %v748
        %v751 = vld [vmem:[%s275 + $0x12] sm:$0xff]
        %753 = vrot.lane.b32.xlu0 %v751, 71
        %v754 = vpop.permute.xlu0 %753
        %756 = vst.msk [vmem:[#allocation2 + $0x78] sm:$0xff] %vm284, %v754
        %v757 = vld [vmem:[%s275 + $0x12] sm:$0xff]
        %759 = vrot.lane.b32.xlu0 %v757, 45
        %v760 = vpop.permute.xlu0 %759
        %762 = vst.msk [vmem:[#allocation2 + $0x78] sm:$0xff] %vm291, %v760
        %v763 = vld [vmem:[%s275 + $0x12] sm:$0xff]
        %765 = vrot.lane.b32.xlu0 %v763, 42
        %v766 = vpop.permute.xlu0 %765
        %768 = vst.msk [vmem:[#allocation2 + $0x78] sm:$0xff] %vm298, %v766
        %v769 = vld [vmem:[%s275 + $0x12] sm:$0xff]
        %771 = vrot.lane.b32.xlu0 %v769, 39
        %v772 = vpop.permute.xlu0 %771
        %774 = vst.msk [vmem:[#allocation2 + $0x78] sm:$0xff] %vm305, %v772
        %v775 = vld [vmem:[%s275 + $0x1b] sm:$0xff]
        %777 = vrot.lane.b32.xlu0 %v775, 66
        %v778 = vpop.permute.xlu0 %777
        %780 = vst.msk [vmem:[#allocation2 + $0x78] sm:$0xff] %vm312, %v778
        %781 = vst.msk [vmem:[#allocation2 + $0x80] sm:$0xff] %vm314, %v778
        %v782 = vld [vmem:[%s275 + $0x1b] sm:$0xff]
        %784 = vrot.lane.b32.xlu0 %v782, 63
        %v785 = vpop.permute.xlu0 %784
        %787 = vst.msk [vmem:[#allocation2 + $0x80] sm:$0xff] %vm321, %v785
        %v788 = vld [vmem:[%s275 + $0x1b] sm:$0xff]
        %790 = vrot.lane.b32.xlu0 %v788, 37
        %v791 = vpop.permute.xlu0 %790
        %793 = vst.msk [vmem:[#allocation2 + $0x80] sm:$0xff] %vm328, %v791
        %v794 = vld [vmem:[%s275 + $0x1b] sm:$0xff]
        %796 = vrot.lane.b32.xlu0 %v794, 34
        %v797 = vpop.permute.xlu0 %796
        %799 = vst.msk [vmem:[#allocation2 + $0x80] sm:$0xff] %vm335, %v797
        %v800 = vld [vmem:[%s275 + $0x1b] sm:$0xff]
        %802 = vrot.lane.b32.xlu0 %v800, 31
        %v803 = vpop.permute.xlu0 %802
        %805 = vst.msk [vmem:[#allocation2 + $0x80] sm:$0xff] %vm342, %v803
        %v806 = vld [vmem:[%s275 + $0x1] sm:$0xff]
        %808 = vrot.lane.b32.xlu0 %v806, 58
        %v809 = vpop.permute.xlu0 %808
        %811 = vst.msk [vmem:[#allocation2 + $0x80] sm:$0xff] %vm349, %v809
        %812 = vst.msk [vmem:[#allocation2 + $0x88] sm:$0xff] %vm351, %v809
        %v813 = vld [vmem:[%s275 + $0x1] sm:$0xff]
        %815 = vrot.lane.b32.xlu0 %v813, 55
        %v816 = vpop.permute.xlu0 %815
        %818 = vst.msk [vmem:[#allocation2 + $0x88] sm:$0xff] %vm358, %v816
        %v819 = vld [vmem:[%s275 + $0x1] sm:$0xff]
        %821 = vrot.lane.b32.xlu0 %v819, 29
        %v822 = vpop.permute.xlu0 %821
        %824 = vst.msk [vmem:[#allocation2 + $0x88] sm:$0xff] %vm365, %v822
        %v825 = vld [vmem:[%s275 + $0x1] sm:$0xff]
        %827 = vrot.lane.b32.xlu0 %v825, 26
        %v828 = vpop.permute.xlu0 %827
        %830 = vst.msk [vmem:[#allocation2 + $0x88] sm:$0xff] %vm372, %v828
        %v831 = vld [vmem:[%s275 + $0x1] sm:$0xff]
        %833 = vrot.lane.b32.xlu0 %v831, 23
        %v834 = vpop.permute.xlu0 %833
        %836 = vst.msk [vmem:[#allocation2 + $0x88] sm:$0xff] %vm379, %v834
        %v837 = vld [vmem:[%s275 + $0xa] sm:$0xff]
        %839 = vrot.lane.b32.xlu0 %v837, 50
        %v840 = vpop.permute.xlu0 %839
        %842 = vst.msk [vmem:[#allocation2 + $0x88] sm:$0xff] %vm386, %v840
        %v843 = vld [vmem:[%s275 + $0xa] sm:$0xff]
        %845 = vrot.lane.b32.xlu0 %v843, 47
        %v846 = vpop.permute.xlu0 %845
        %848 = vst.msk [vmem:[#allocation2 + $0x90] sm:$0xff] %vm277, %v846
        %v849 = vld [vmem:[%s275 + $0xa] sm:$0xff]
        %851 = vrot.lane.b32.xlu0 %v849, 21
        %v852 = vpop.permute.xlu0 %851
        %854 = vst.msk [vmem:[#allocation2 + $0x90] sm:$0xff] %vm284, %v852
        %v855 = vld [vmem:[%s275 + $0xa] sm:$0xff]
        %857 = vrot.lane.b32.xlu0 %v855, 18
        %v858 = vpop.permute.xlu0 %857
        %860 = vst.msk [vmem:[#allocation2 + $0x90] sm:$0xff] %vm291, %v858
        %v861 = vld [vmem:[%s275 + $0xa] sm:$0xff]
        %863 = vrot.lane.b32.xlu0 %v861, 15
        %v864 = vpop.permute.xlu0 %863
        %866 = vst.msk [vmem:[#allocation2 + $0x90] sm:$0xff] %vm298, %v864
        %v867 = vld [vmem:[%s275 + $0x13] sm:$0xff]
        %869 = vrot.lane.b32.xlu0 %v867, 42
        %v870 = vpop.permute.xlu0 %869
        %872 = vst.msk [vmem:[#allocation2 + $0x90] sm:$0xff] %vm305, %v870
        %v873 = vld [vmem:[%s275 + $0x13] sm:$0xff]
        %875 = vrot.lane.b32.xlu0 %v873, 39
        %v876 = vpop.permute.xlu0 %875
        %878 = vst.msk [vmem:[#allocation2 + $0x90] sm:$0xff] %vm312, %v876
        %879 = vst.msk [vmem:[#allocation2 + $0x98] sm:$0xff] %vm314, %v876
        %v880 = vld [vmem:[%s275 + $0x13] sm:$0xff]
        %882 = vrot.lane.b32.xlu0 %v880, 13
        %v883 = vpop.permute.xlu0 %882
        %885 = vst.msk [vmem:[#allocation2 + $0x98] sm:$0xff] %vm321, %v883
        %v886 = vld [vmem:[%s275 + $0x13] sm:$0xff]
        %888 = vrot.lane.b32.xlu0 %v886, 10
        %v889 = vpop.permute.xlu0 %888
        %891 = vst.msk [vmem:[#allocation2 + $0x98] sm:$0xff] %vm328, %v889
        %v892 = vld [vmem:[%s275 + $0x13] sm:$0xff]
        %894 = vrot.lane.b32.xlu0 %v892, 7
        %v895 = vpop.permute.xlu0 %894
        %897 = vst.msk [vmem:[#allocation2 + $0x98] sm:$0xff] %vm335, %v895
        %v898 = vld [vmem:[#allocation2] sm:$0xff]
        %v899 = vld [vmem:[#allocation2 + $0x8] sm:$0xff]
        %v900 = vld [vmem:[#allocation2 + $0x10] sm:$0xff]
        %v901 = vld [vmem:[#allocation2 + $0x18] sm:$0xff]
        %v902 = vld [vmem:[#allocation2 + $0x20] sm:$0xff]
        %v903 = vld [vmem:[#allocation2 + $0x28] sm:$0xff]
        %v904 = vld [vmem:[#allocation2 + $0x30] sm:$0xff]
        %v905 = vld [vmem:[#allocation2 + $0x38] sm:$0xff]
        %v906 = vld [vmem:[#allocation2 + $0x40] sm:$0xff]
        %v907 = vld [vmem:[#allocation2 + $0x48] sm:$0xff]
        %v908 = vld [vmem:[#allocation2 + $0x50] sm:$0xff]
        %v909 = vld [vmem:[#allocation2 + $0x58] sm:$0xff]
        %v910 = vld [vmem:[#allocation2 + $0x60] sm:$0xff]
        %v911 = vld [vmem:[#allocation2 + $0x68] sm:$0xff]
        %v912 = vld [vmem:[#allocation2 + $0x70] sm:$0xff]
        %v913 = vld [vmem:[#allocation2 + $0x78] sm:$0xff]
        %v914 = vld [vmem:[#allocation2 + $0x80] sm:$0xff]
        %v915 = vld [vmem:[#allocation2 + $0x88] sm:$0xff]
        %v916 = vld [vmem:[#allocation2 + $0x90] sm:$0xff]
        %v917 = vld [vmem:[#allocation2 + $0x98] sm:$0xff]
        %v918 = vld [vmem:[%s1] sm:$0xff]
        %v919 = vld [vmem:[%s1 + $0x8] sm:$0xff]
        %v920 = vld [vmem:[%s1 + $0x10] sm:$0xff]
        %v921 = vld [vmem:[%s1 + $0x18] sm:$0xff]
        %v922 = vld [vmem:[%s1 + $0x20] sm:$0xff]
        %v923 = vld [vmem:[%s1 + $0x28] sm:$0xff]
        %v924 = vld [vmem:[%s1 + $0x30] sm:$0xff]
        %v925 = vld [vmem:[%s1 + $0x38] sm:$0xff]
        %v926 = vld [vmem:[%s1 + $0x40] sm:$0xff]
        %v927 = vld [vmem:[%s1 + $0x48] sm:$0xff]
        %v928 = vld [vmem:[%s1 + $0x50] sm:$0xff]
        %v929 = vld [vmem:[%s1 + $0x58] sm:$0xff]
        %v930 = vld [vmem:[%s1 + $0x60] sm:$0xff]
        %v931 = vld [vmem:[%s1 + $0x68] sm:$0xff]
        %v932 = vld [vmem:[%s1 + $0x70] sm:$0xff]
        %v933 = vld [vmem:[%s1 + $0x78] sm:$0xff]
        %v934 = vld [vmem:[%s1 + $0x80] sm:$0xff]
        %v935 = vld [vmem:[%s1 + $0x88] sm:$0xff]
        %v936 = vld [vmem:[%s1 + $0x90] sm:$0xff]
        %v937 = vld [vmem:[%s1 + $0x98] sm:$0xff]
        %v938 = vld [vmem:[%s1 + $0xa0] sm:$0xff]
        %v939 = vld [vmem:[%s1 + $0xa8] sm:$0xff]
        %v940 = vld [vmem:[%s1 + $0xb0] sm:$0xff]
        %v941 = vld [vmem:[%s1 + $0xb8] sm:$0xff]
        %v942 = vld [vmem:[%s1 + $0xc0] sm:$0xff]
        %v943 = vld [vmem:[%s1 + $0xc8] sm:$0xff]
        %v944 = vld [vmem:[%s1 + $0xd0] sm:$0xff]
        %v945 = vld [vmem:[%s1 + $0xd8] sm:$0xff]
        %v946 = vld [vmem:[%s1 + $0xe0] sm:$0xff]
        %v947 = vld [vmem:[%s1 + $0xe8] sm:$0xff]
        %v948 = vld [vmem:[%s1 + $0xf0] sm:$0xff]
        %v949 = vld [vmem:[%s1 + $0xf8] sm:$0xff]
        %v950 = vld [vmem:[%s1 + $0x100] sm:$0xff]
        %v951 = vld [vmem:[%s1 + $0x108] sm:$0xff]
        %v952 = vld [vmem:[%s1 + $0x110] sm:$0xff]
        %v953 = vld [vmem:[%s1 + $0x118] sm:$0xff]
        %v954 = vld [vmem:[%s1 + $0x120] sm:$0xff]
        %v955 = vld [vmem:[%s1 + $0x128] sm:$0xff]
        %v956 = vld [vmem:[%s1 + $0x130] sm:$0xff]
        %v957 = vld [vmem:[%s1 + $0x138] sm:$0xff]
        %v958 = vld [vmem:[%s1 + $0x140] sm:$0xff]
        %v959 = vld [vmem:[%s1 + $0x148] sm:$0xff]
        %v960 = vld [vmem:[%s1 + $0x150] sm:$0xff]
        %v961 = vld [vmem:[%s1 + $0x158] sm:$0xff]
        %v962 = vld [vmem:[%s1 + $0x160] sm:$0xff]
        %v963 = vld [vmem:[%s1 + $0x168] sm:$0xff]
        %v964 = vld [vmem:[%s1 + $0x170] sm:$0xff]
        %v965 = vld [vmem:[%s1 + $0x178] sm:$0xff]
        %v966 = vld [vmem:[%s1 + $0x180] sm:$0xff]
        %v967 = vld [vmem:[%s1 + $0x188] sm:$0xff]
        %v968 = vld [vmem:[%s1 + $0x190] sm:$0xff]
        %v969 = vld [vmem:[%s1 + $0x198] sm:$0xff]
        %v970 = vld [vmem:[%s1 + $0x1a0] sm:$0xff]
        %v971 = vld [vmem:[%s1 + $0x1a8] sm:$0xff]
        %v972 = vld [vmem:[%s1 + $0x1b0] sm:$0xff]
        %v973 = vld [vmem:[%s1 + $0x1b8] sm:$0xff]
        %v974 = vld [vmem:[%s1 + $0x1c0] sm:$0xff]
        %v975 = vld [vmem:[%s1 + $0x1c8] sm:$0xff]
        %v976 = vld [vmem:[%s1 + $0x1d0] sm:$0xff]
        %v977 = vld [vmem:[%s1 + $0x1d8] sm:$0xff]
        %v978 = vld [vmem:[%s1 + $0x1e0] sm:$0xff]
        %v979 = vld [vmem:[%s1 + $0x1e8] sm:$0xff]
        %v980 = vld [vmem:[%s1 + $0x1f0] sm:$0xff]
        %v981 = vld [vmem:[%s1 + $0x1f8] sm:$0xff]
        %v982 = vld [vmem:[%s1 + $0x200] sm:$0xff]
        %v983 = vld [vmem:[%s1 + $0x208] sm:$0xff]
        %v984 = vld [vmem:[%s1 + $0x210] sm:$0xff]
        %v985 = vld [vmem:[%s1 + $0x218] sm:$0xff]
        %v986 = vld [vmem:[%s1 + $0x220] sm:$0xff]
        %v987 = vld [vmem:[%s1 + $0x228] sm:$0xff]
        %v988 = vld [vmem:[%s1 + $0x230] sm:$0xff]
        %v989 = vld [vmem:[%s1 + $0x238] sm:$0xff]
        %v990 = vld [vmem:[%s1 + $0x240] sm:$0xff]
        %v991 = vld [vmem:[%s1 + $0x248] sm:$0xff]
        %v992 = vld [vmem:[%s1 + $0x250] sm:$0xff]
        %vm993 = vcmask 719872
        %v995 = vsel %vm993, %v902, 0
        %v998 = vsel %vm993, %v907, 0
        %v1001 = vsel %vm993, %v912, 0
        %v1004 = vsel %vm993, %v917, 0
        %1006 = vmatpush.msra.mxu0 %v933
        %1007 = vmatpush.msra.mxu0 %v932
        %1008 = vmatpush.msra.mxu0 %v931
        %1009 = vmatpush.msra.mxu0 %v930
        %1010 = vmatpush.msra.mxu0 %v929
        %1011 = vmatpush.msra.mxu0 %v928
        %1012 = vmatpush.msra.mxu0 %v927
        %1013 = vmatpush.msra.mxu0 %v926
        %1014 = vmatpush.msra.mxu0 %v925
        %1015 = vmatpush.msra.mxu0 %v924
        %1016 = vmatpush.msra.mxu0 %v923
        %1017 = vmatpush.msra.mxu0 %v922
        %1018 = vmatpush.msra.mxu0 %v921
        %1019 = vmatpush.msra.mxu0 %v920
        %1020 = vmatpush.msra.mxu0 %v919
        %1021 = vmatpush.msra.mxu0 %v918
        %1022 = vmatmul.f32.gmra.mxu0 %v898
        %v1023 = vpop.f32.mrf.mxu0
        %v1024 = vadd.f32 0.0, %v1023
        %1025 = vmatmul.f32.gmra.mxu0 %v903
        %v1026 = vpop.f32.mrf.mxu0
        %v1027 = vadd.f32 0.0, %v1026
        %1028 = vmatmul.f32.gmra.mxu0 %v908
        %v1029 = vpop.f32.mrf.mxu0
        %v1030 = vadd.f32 0.0, %v1029
        %1031 = vmatmul.f32.gmra.mxu0 %v913
        %v1032 = vpop.f32.mrf.mxu0
        %v1033 = vadd.f32 0.0, %v1032
        %1034 = vdwg.mxu0
        %1035 = vmatpush.msra.mxu0 %v949
        %1036 = vmatpush.msra.mxu0 %v948
        %1037 = vmatpush.msra.mxu0 %v947
        %1038 = vmatpush.msra.mxu0 %v946
        %1039 = vmatpush.msra.mxu0 %v945
        %1040 = vmatpush.msra.mxu0 %v944
        %1041 = vmatpush.msra.mxu0 %v943
        %1042 = vmatpush.msra.mxu0 %v942
        %1043 = vmatpush.msra.mxu0 %v941
        %1044 = vmatpush.msra.mxu0 %v940
        %1045 = vmatpush.msra.mxu0 %v939
        %1046 = vmatpush.msra.mxu0 %v938
        %1047 = vmatpush.msra.mxu0 %v937
        %1048 = vmatpush.msra.mxu0 %v936
        %1049 = vmatpush.msra.mxu0 %v935
        %1050 = vmatpush.msra.mxu0 %v934
        %1051 = vmatmul.f32.gmra.mxu0 %v899
        %v1052 = vpop.f32.mrf.mxu0
        %v1053 = vadd.f32 %v1024, %v1052
        %1054 = vmatmul.f32.gmra.mxu0 %v904
        %v1055 = vpop.f32.mrf.mxu0
        %v1056 = vadd.f32 %v1027, %v1055
        %1057 = vmatmul.f32.gmra.mxu0 %v909
        %v1058 = vpop.f32.mrf.mxu0
        %v1059 = vadd.f32 %v1030, %v1058
        %1060 = vmatmul.f32.gmra.mxu0 %v914
        %v1061 = vpop.f32.mrf.mxu0
        %v1062 = vadd.f32 %v1033, %v1061
        %1063 = vdwg.mxu0
        %1064 = vmatpush.msra.mxu0 %v965
        %1065 = vmatpush.msra.mxu0 %v964
        %1066 = vmatpush.msra.mxu0 %v963
        %1067 = vmatpush.msra.mxu0 %v962
        %1068 = vmatpush.msra.mxu0 %v961
        %1069 = vmatpush.msra.mxu0 %v960
        %1070 = vmatpush.msra.mxu0 %v959
        %1071 = vmatpush.msra.mxu0 %v958
        %1072 = vmatpush.msra.mxu0 %v957
        %1073 = vmatpush.msra.mxu0 %v956
        %1074 = vmatpush.msra.mxu0 %v955
        %1075 = vmatpush.msra.mxu0 %v954
        %1076 = vmatpush.msra.mxu0 %v953
        %1077 = vmatpush.msra.mxu0 %v952
        %1078 = vmatpush.msra.mxu0 %v951
        %1079 = vmatpush.msra.mxu0 %v950
        %1080 = vmatmul.f32.gmra.mxu0 %v900
        %v1081 = vpop.f32.mrf.mxu0
        %v1082 = vadd.f32 %v1053, %v1081
        %1083 = vmatmul.f32.gmra.mxu0 %v905
        %v1084 = vpop.f32.mrf.mxu0
        %v1085 = vadd.f32 %v1056, %v1084
        %1086 = vmatmul.f32.gmra.mxu0 %v910
        %v1087 = vpop.f32.mrf.mxu0
        %v1088 = vadd.f32 %v1059, %v1087
        %1089 = vmatmul.f32.gmra.mxu0 %v915
        %v1090 = vpop.f32.mrf.mxu0
        %v1091 = vadd.f32 %v1062, %v1090
        %1092 = vdwg.mxu0
        %1093 = vmatpush.msra.mxu0 %v981
        %1094 = vmatpush.msra.mxu0 %v980
        %1095 = vmatpush.msra.mxu0 %v979
        %1096 = vmatpush.msra.mxu0 %v978
        %1097 = vmatpush.msra.mxu0 %v977
        %1098 = vmatpush.msra.mxu0 %v976
        %1099 = vmatpush.msra.mxu0 %v975
        %1100 = vmatpush.msra.mxu0 %v974
        %1101 = vmatpush.msra.mxu0 %v973
        %1102 = vmatpush.msra.mxu0 %v972
        %1103 = vmatpush.msra.mxu0 %v971
        %1104 = vmatpush.msra.mxu0 %v970
        %1105 = vmatpush.msra.mxu0 %v969
        %1106 = vmatpush.msra.mxu0 %v968
        %1107 = vmatpush.msra.mxu0 %v967
        %1108 = vmatpush.msra.mxu0 %v966
        %1109 = vmatmul.f32.gmra.mxu0 %v901
        %v1110 = vpop.f32.mrf.mxu0
        %v1111 = vadd.f32 %v1082, %v1110
        %1112 = vmatmul.f32.gmra.mxu0 %v906
        %v1113 = vpop.f32.mrf.mxu0
        %v1114 = vadd.f32 %v1085, %v1113
        %1115 = vmatmul.f32.gmra.mxu0 %v911
        %v1116 = vpop.f32.mrf.mxu0
        %v1117 = vadd.f32 %v1088, %v1116
        %1118 = vmatmul.f32.gmra.mxu0 %v916
        %v1119 = vpop.f32.mrf.mxu0
        %v1120 = vadd.f32 %v1091, %v1119
        %1121 = vdwg.mxu0
        %1122 = vmatpush.msra.mxu0 0.0
        %1123 = vmatpush.msra.mxu0 0.0
        %1124 = vmatpush.msra.mxu0 0.0
        %1125 = vmatpush.msra.mxu0 0.0
        %1126 = vmatpush.msra.mxu0 0.0
        %1127 = vmatpush.msra.mxu0 %v992
        %1128 = vmatpush.msra.mxu0 %v991
        %1129 = vmatpush.msra.mxu0 %v990
        %1130 = vmatpush.msra.mxu0 %v989
        %1131 = vmatpush.msra.mxu0 %v988
        %1132 = vmatpush.msra.mxu0 %v987
        %1133 = vmatpush.msra.mxu0 %v986
        %1134 = vmatpush.msra.mxu0 %v985
        %1135 = vmatpush.msra.mxu0 %v984
        %1136 = vmatpush.msra.mxu0 %v983
        %1137 = vmatpush.msra.mxu0 %v982
        %1138 = vmatmul.f32.gmra.mxu0 %v995
        %v1139 = vpop.f32.mrf.mxu0
        %v1140 = vadd.f32 %v1111, %v1139
        %1141 = vmatmul.f32.gmra.mxu0 %v998
        %v1142 = vpop.f32.mrf.mxu0
        %v1143 = vadd.f32 %v1114, %v1142
        %1144 = vmatmul.f32.gmra.mxu0 %v1001
        %v1145 = vpop.f32.mrf.mxu0
        %v1146 = vadd.f32 %v1117, %v1145
        %1147 = vmatmul.f32.gmra.mxu0 %v1004
        %v1148 = vpop.f32.mrf.mxu0
        %v1149 = vadd.f32 %v1120, %v1148
        %1150 = vdwg.mxu0
        %v1151 = vmax.f32 %v1140, %v1143
        %v1152 = vmax.f32 %v1146, %v1149
        %v1153 = vmax.f32 %v1151, %v1152
        %v1154 = vld [vmem:[%s2] sm:$0x1]
        %v1156 = vperm.slane %v1154, 0
        %v1158 = vadd.f32 %v1153, %v1156
        %vm1159 = vcmask 785408
        %1160 = vst.msk [vmem:[#allocation3] sm:$0xff] %vm1159, 0.0
        %vm1161 = vcmask 781312
        %1162 = vst.msk [vmem:[#allocation3 + $0x8] sm:$0xf] %vm1161, 0.0
        %1164 = vrot.lane.b32.xlu0 %v1158, 16
        %v1165 = vpop.permute.xlu0 %1164
        %vm1167 = vcmask 654464
        %1168 = vst.msk [vmem:[#allocation3 + $0x2] sm:$0xff] %vm1167, %v1165
        %v1169 = vld [vmem:[#allocation3] sm:$0x1]
        %vm1170 = vcmask 319488
        %1171 = vst.msk [vmem:[#allocation4] sm:$0x1] %vm1170, %v1169
        %v1172 = vld [vmem:[#allocation3 + $0x1] sm:$0x1]
        %1174 = vrot.lane.b32.xlu0 %v1172, 40
        %v1175 = vpop.permute.xlu0 %1174
        %vm1177 = vcmask 647488
        %1178 = vst.msk [vmem:[#allocation4] sm:$0x1] %vm1177, %v1175
        %v1179 = vld [vmem:[#allocation3 + $0x2] sm:$0x1]
        %1181 = vrot.lane.b32.xlu0 %v1179, 80
        %v1182 = vpop.permute.xlu0 %1181
        %vm1184 = vcmask 975488
        %1185 = vst.msk [vmem:[#allocation4] sm:$0x1] %vm1184, %v1182
        %v1186 = vld [vmem:[#allocation3 + $0x3] sm:$0x1]
        %1188 = vrot.lane.b32.xlu0 %v1186, 120
        %v1189 = vpop.permute.xlu0 %1188
        %vm1191 = vcmask 1041344
        %1192 = vst.msk [vmem:[#allocation4] sm:$0x1] %vm1191, %v1189
        %vm1193 = vcmask 253952
        %1194 = vst.msk [vmem:[#allocation4 + $0x8] sm:$0x1] %vm1193, %v1189
        %v1195 = vld [vmem:[#allocation3 + $0x4] sm:$0x1]
        %1197 = vrot.lane.b32.xlu0 %v1195, 32
        %v1198 = vpop.permute.xlu0 %1197
        %vm1200 = vcmask 581888
        %1201 = vst.msk [vmem:[#allocation4 + $0x8] sm:$0x1] %vm1200, %v1198
        %v1202 = vld [vmem:[#allocation3] sm:$0x1]
        %1204 = vrot.lane.b32.xlu0 %v1202, 112
        %v1205 = vpop.permute.xlu0 %1204
        %1207 = vst.msk [vmem:[#allocation4 + $0x1] sm:$0x1] %vm1170, %v1205
        %v1208 = vld [vmem:[#allocation3 + $0x1] sm:$0x1]
        %1210 = vrot.lane.b32.xlu0 %v1208, 24
        %v1211 = vpop.permute.xlu0 %1210
        %1213 = vst.msk [vmem:[#allocation4 + $0x1] sm:$0x1] %vm1177, %v1211
        %v1214 = vld [vmem:[#allocation3 + $0x2] sm:$0x1]
        %1216 = vrot.lane.b32.xlu0 %v1214, 64
        %v1217 = vpop.permute.xlu0 %1216
        %1219 = vst.msk [vmem:[#allocation4 + $0x1] sm:$0x1] %vm1184, %v1217
        %v1220 = vld [vmem:[#allocation3 + $0x3] sm:$0x1]
        %1222 = vrot.lane.b32.xlu0 %v1220, 104
        %v1223 = vpop.permute.xlu0 %1222
        %1225 = vst.msk [vmem:[#allocation4 + $0x1] sm:$0x1] %vm1191, %v1223
        %1226 = vst.msk [vmem:[#allocation4 + $0x9] sm:$0x1] %vm1193, %v1223
        %v1227 = vld [vmem:[#allocation3 + $0x4] sm:$0x1]
        %1229 = vrot.lane.b32.xlu0 %v1227, 16
        %v1230 = vpop.permute.xlu0 %1229
        %1232 = vst.msk [vmem:[#allocation4 + $0x9] sm:$0x1] %vm1200, %v1230
        %v1233 = vld [vmem:[#allocation3] sm:$0x1]
        %1235 = vrot.lane.b32.xlu0 %v1233, 96
        %v1236 = vpop.permute.xlu0 %1235
        %1238 = vst.msk [vmem:[#allocation4 + $0x2] sm:$0x1] %vm1170, %v1236
        %v1239 = vld [vmem:[#allocation3 + $0x1] sm:$0x1]
        %1241 = vrot.lane.b32.xlu0 %v1239, 8
        %v1242 = vpop.permute.xlu0 %1241
        %1244 = vst.msk [vmem:[#allocation4 + $0x2] sm:$0x1] %vm1177, %v1242
        %v1245 = vld [vmem:[#allocation3 + $0x2] sm:$0x1]
        %1247 = vrot.lane.b32.xlu0 %v1245, 48
        %v1248 = vpop.permute.xlu0 %1247
        %1250 = vst.msk [vmem:[#allocation4 + $0x2] sm:$0x1] %vm1184, %v1248
        %v1251 = vld [vmem:[#allocation3 + $0x3] sm:$0x1]
        %1253 = vrot.lane.b32.xlu0 %v1251, 88
        %v1254 = vpop.permute.xlu0 %1253
        %1256 = vst.msk [vmem:[#allocation4 + $0x2] sm:$0x1] %vm1191, %v1254
        %1257 = vst.msk [vmem:[#allocation4 + $0xa] sm:$0x1] %vm1193, %v1254
        %v1258 = vld [vmem:[#allocation3 + $0x4] sm:$0x1]
        %1259 = vst.msk [vmem:[#allocation4 + $0xa] sm:$0x1] %vm1200, %v1258
        %v1260 = vld [vmem:[#allocation3] sm:$0x1]
        %1262 = vrot.lane.b32.xlu0 %v1260, 80
        %v1263 = vpop.permute.xlu0 %1262
        %1265 = vst.msk [vmem:[#allocation4 + $0x3] sm:$0x1] %vm1170, %v1263
        %v1266 = vld [vmem:[#allocation3 + $0x1] sm:$0x1]
        %1268 = vrot.lane.b32.xlu0 %v1266, 120
        %v1269 = vpop.permute.xlu0 %1268
        %1271 = vst.msk [vmem:[#allocation4 + $0x3] sm:$0x1] %vm1177, %v1269
        %v1272 = vld [vmem:[#allocation3 + $0x2] sm:$0x1]
        %1274 = vrot.lane.b32.xlu0 %v1272, 32
        %v1275 = vpop.permute.xlu0 %1274
        %1277 = vst.msk [vmem:[#allocation4 + $0x3] sm:$0x1] %vm1184, %v1275
        %v1278 = vld [vmem:[#allocation3 + $0x3] sm:$0x1]
        %1280 = vrot.lane.b32.xlu0 %v1278, 72
        %v1281 = vpop.permute.xlu0 %1280
        %1283 = vst.msk [vmem:[#allocation4 + $0x3] sm:$0x1] %vm1191, %v1281
        %1284 = vst.msk [vmem:[#allocation4 + $0xb] sm:$0x1] %vm1193, %v1281
        %v1285 = vld [vmem:[#allocation3 + $0x4] sm:$0x1]
        %1287 = vrot.lane.b32.xlu0 %v1285, 112
        %v1288 = vpop.permute.xlu0 %1287
        %1290 = vst.msk [vmem:[#allocation4 + $0xb] sm:$0x1] %vm1200, %v1288
        %v1291 = vld [vmem:[#allocation3 + $0x2] sm:$0x1]
        %1292 = vst.msk [vmem:[#allocation4 + $0x4] sm:$0x1] %vm1170, %v1291
        %v1293 = vld [vmem:[#allocation3 + $0x3] sm:$0x1]
        %1295 = vrot.lane.b32.xlu0 %v1293, 40
        %v1296 = vpop.permute.xlu0 %1295
        %1298 = vst.msk [vmem:[#allocation4 + $0x4] sm:$0x1] %vm1177, %v1296
        %v1299 = vld [vmem:[#allocation3 + $0x4] sm:$0x1]
        %1301 = vrot.lane.b32.xlu0 %v1299, 80
        %v1302 = vpop.permute.xlu0 %1301
        %1304 = vst.msk [vmem:[#allocation4 + $0x4] sm:$0x1] %vm1184, %v1302
        %v1305 = vld [vmem:[#allocation3 + $0x5] sm:$0x1]
        %1307 = vrot.lane.b32.xlu0 %v1305, 120
        %v1308 = vpop.permute.xlu0 %1307
        %1310 = vst.msk [vmem:[#allocation4 + $0x4] sm:$0x1] %vm1191, %v1308
        %1311 = vst.msk [vmem:[#allocation4 + $0xc] sm:$0x1] %vm1193, %v1308
        %v1312 = vld [vmem:[#allocation3 + $0x6] sm:$0x1]
        %1314 = vrot.lane.b32.xlu0 %v1312, 32
        %v1315 = vpop.permute.xlu0 %1314
        %1317 = vst.msk [vmem:[#allocation4 + $0xc] sm:$0x1] %vm1200, %v1315
        %v1318 = vld [vmem:[#allocation3 + $0x2] sm:$0x1]
        %1320 = vrot.lane.b32.xlu0 %v1318, 112
        %v1321 = vpop.permute.xlu0 %1320
        %1323 = vst.msk [vmem:[#allocation4 + $0x5] sm:$0x1] %vm1170, %v1321
        %v1324 = vld [vmem:[#allocation3 + $0x3] sm:$0x1]
        %1326 = vrot.lane.b32.xlu0 %v1324, 24
        %v1327 = vpop.permute.xlu0 %1326
        %1329 = vst.msk [vmem:[#allocation4 + $0x5] sm:$0x1] %vm1177, %v1327
        %v1330 = vld [vmem:[#allocation3 + $0x4] sm:$0x1]
        %1332 = vrot.lane.b32.xlu0 %v1330, 64
        %v1333 = vpop.permute.xlu0 %1332
        %1335 = vst.msk [vmem:[#allocation4 + $0x5] sm:$0x1] %vm1184, %v1333
        %v1336 = vld [vmem:[#allocation3 + $0x5] sm:$0x1]
        %1338 = vrot.lane.b32.xlu0 %v1336, 104
        %v1339 = vpop.permute.xlu0 %1338
        %1341 = vst.msk [vmem:[#allocation4 + $0x5] sm:$0x1] %vm1191, %v1339
        %1342 = vst.msk [vmem:[#allocation4 + $0xd] sm:$0x1] %vm1193, %v1339
        %v1343 = vld [vmem:[#allocation3 + $0x6] sm:$0x1]
        %1345 = vrot.lane.b32.xlu0 %v1343, 16
        %v1346 = vpop.permute.xlu0 %1345
        %1348 = vst.msk [vmem:[#allocation4 + $0xd] sm:$0x1] %vm1200, %v1346
        %v1349 = vld [vmem:[#allocation3 + $0x2] sm:$0x1]
        %1351 = vrot.lane.b32.xlu0 %v1349, 96
        %v1352 = vpop.permute.xlu0 %1351
        %1354 = vst.msk [vmem:[#allocation4 + $0x6] sm:$0x1] %vm1170, %v1352
        %v1355 = vld [vmem:[#allocation3 + $0x3] sm:$0x1]
        %1357 = vrot.lane.b32.xlu0 %v1355, 8
        %v1358 = vpop.permute.xlu0 %1357
        %1360 = vst.msk [vmem:[#allocation4 + $0x6] sm:$0x1] %vm1177, %v1358
        %v1361 = vld [vmem:[#allocation3 + $0x4] sm:$0x1]
        %1363 = vrot.lane.b32.xlu0 %v1361, 48
        %v1364 = vpop.permute.xlu0 %1363
        %1366 = vst.msk [vmem:[#allocation4 + $0x6] sm:$0x1] %vm1184, %v1364
        %v1367 = vld [vmem:[#allocation3 + $0x5] sm:$0x1]
        %1369 = vrot.lane.b32.xlu0 %v1367, 88
        %v1370 = vpop.permute.xlu0 %1369
        %1372 = vst.msk [vmem:[#allocation4 + $0x6] sm:$0x1] %vm1191, %v1370
        %1373 = vst.msk [vmem:[#allocation4 + $0xe] sm:$0x1] %vm1193, %v1370
        %v1374 = vld [vmem:[#allocation3 + $0x6] sm:$0x1]
        %1375 = vst.msk [vmem:[#allocation4 + $0xe] sm:$0x1] %vm1200, %v1374
        %v1376 = vld [vmem:[#allocation3 + $0x2] sm:$0x1]
        %1378 = vrot.lane.b32.xlu0 %v1376, 80
        %v1379 = vpop.permute.xlu0 %1378
        %1381 = vst.msk [vmem:[#allocation4 + $0x7] sm:$0x1] %vm1170, %v1379
        %v1382 = vld [vmem:[#allocation3 + $0x3] sm:$0x1]
        %1384 = vrot.lane.b32.xlu0 %v1382, 120
        %v1385 = vpop.permute.xlu0 %1384
        %1387 = vst.msk [vmem:[#allocation4 + $0x7] sm:$0x1] %vm1177, %v1385
        %v1388 = vld [vmem:[#allocation3 + $0x4] sm:$0x1]
        %1390 = vrot.lane.b32.xlu0 %v1388, 32
        %v1391 = vpop.permute.xlu0 %1390
        %1393 = vst.msk [vmem:[#allocation4 + $0x7] sm:$0x1] %vm1184, %v1391
        %v1394 = vld [vmem:[#allocation3 + $0x5] sm:$0x1]
        %1396 = vrot.lane.b32.xlu0 %v1394, 72
        %v1397 = vpop.permute.xlu0 %1396
        %1399 = vst.msk [vmem:[#allocation4 + $0x7] sm:$0x1] %vm1191, %v1397
        %1400 = vst.msk [vmem:[#allocation4 + $0xf] sm:$0x1] %vm1193, %v1397
        %v1401 = vld [vmem:[#allocation3 + $0x6] sm:$0x1]
        %1403 = vrot.lane.b32.xlu0 %v1401, 112
        %v1404 = vpop.permute.xlu0 %1403
        %1406 = vst.msk [vmem:[#allocation4 + $0xf] sm:$0x1] %vm1200, %v1404
        %v1407 = vld [vmem:[#allocation3 + $0x4] sm:$0x1]
        %1408 = vst.msk [vmem:[#allocation4 + $0x10] sm:$0x1] %vm1170, %v1407
        %v1409 = vld [vmem:[#allocation3 + $0x5] sm:$0x1]
        %1411 = vrot.lane.b32.xlu0 %v1409, 40
        %v1412 = vpop.permute.xlu0 %1411
        %1414 = vst.msk [vmem:[#allocation4 + $0x10] sm:$0x1] %vm1177, %v1412
        %v1415 = vld [vmem:[#allocation3 + $0x6] sm:$0x1]
        %1417 = vrot.lane.b32.xlu0 %v1415, 80
        %v1418 = vpop.permute.xlu0 %1417
        %1420 = vst.msk [vmem:[#allocation4 + $0x10] sm:$0x1] %vm1184, %v1418
        %v1421 = vld [vmem:[#allocation3 + $0x7] sm:$0x1]
        %1423 = vrot.lane.b32.xlu0 %v1421, 120
        %v1424 = vpop.permute.xlu0 %1423
        %1426 = vst.msk [vmem:[#allocation4 + $0x10] sm:$0x1] %vm1191, %v1424
        %1427 = vst.msk [vmem:[#allocation4 + $0x18] sm:$0x1] %vm1193, %v1424
        %v1428 = vld [vmem:[#allocation3 + $0x8] sm:$0x1]
        %1430 = vrot.lane.b32.xlu0 %v1428, 32
        %v1431 = vpop.permute.xlu0 %1430
        %1433 = vst.msk [vmem:[#allocation4 + $0x18] sm:$0x1] %vm1200, %v1431
        %v1434 = vld [vmem:[#allocation3 + $0x4] sm:$0x1]
        %1436 = vrot.lane.b32.xlu0 %v1434, 112
        %v1437 = vpop.permute.xlu0 %1436
        %1439 = vst.msk [vmem:[#allocation4 + $0x11] sm:$0x1] %vm1170, %v1437
        %v1440 = vld [vmem:[#allocation3 + $0x5] sm:$0x1]
        %1442 = vrot.lane.b32.xlu0 %v1440, 24
        %v1443 = vpop.permute.xlu0 %1442
        %1445 = vst.msk [vmem:[#allocation4 + $0x11] sm:$0x1] %vm1177, %v1443
        %v1446 = vld [vmem:[#allocation3 + $0x6] sm:$0x1]
        %1448 = vrot.lane.b32.xlu0 %v1446, 64
        %v1449 = vpop.permute.xlu0 %1448
        %1451 = vst.msk [vmem:[#allocation4 + $0x11] sm:$0x1] %vm1184, %v1449
        %v1452 = vld [vmem:[#allocation3 + $0x7] sm:$0x1]
        %1454 = vrot.lane.b32.xlu0 %v1452, 104
        %v1455 = vpop.permute.xlu0 %1454
        %1457 = vst.msk [vmem:[#allocation4 + $0x11] sm:$0x1] %vm1191, %v1455
        %1458 = vst.msk [vmem:[#allocation4 + $0x19] sm:$0x1] %vm1193, %v1455
        %v1459 = vld [vmem:[#allocation3 + $0x8] sm:$0x1]
        %1461 = vrot.lane.b32.xlu0 %v1459, 16
        %v1462 = vpop.permute.xlu0 %1461
        %1464 = vst.msk [vmem:[#allocation4 + $0x19] sm:$0x1] %vm1200, %v1462
        %v1465 = vld [vmem:[#allocation3 + $0x4] sm:$0x1]
        %1467 = vrot.lane.b32.xlu0 %v1465, 96
        %v1468 = vpop.permute.xlu0 %1467
        %1470 = vst.msk [vmem:[#allocation4 + $0x12] sm:$0x1] %vm1170, %v1468
        %v1471 = vld [vmem:[#allocation3 + $0x5] sm:$0x1]
        %1473 = vrot.lane.b32.xlu0 %v1471, 8
        %v1474 = vpop.permute.xlu0 %1473
        %1476 = vst.msk [vmem:[#allocation4 + $0x12] sm:$0x1] %vm1177, %v1474
        %v1477 = vld [vmem:[#allocation3 + $0x6] sm:$0x1]
        %1479 = vrot.lane.b32.xlu0 %v1477, 48
        %v1480 = vpop.permute.xlu0 %1479
        %1482 = vst.msk [vmem:[#allocation4 + $0x12] sm:$0x1] %vm1184, %v1480
        %v1483 = vld [vmem:[#allocation3 + $0x7] sm:$0x1]
        %1485 = vrot.lane.b32.xlu0 %v1483, 88
        %v1486 = vpop.permute.xlu0 %1485
        %1488 = vst.msk [vmem:[#allocation4 + $0x12] sm:$0x1] %vm1191, %v1486
        %1489 = vst.msk [vmem:[#allocation4 + $0x1a] sm:$0x1] %vm1193, %v1486
        %v1490 = vld [vmem:[#allocation3 + $0x8] sm:$0x1]
        %1491 = vst.msk [vmem:[#allocation4 + $0x1a] sm:$0x1] %vm1200, %v1490
        %v1492 = vld [vmem:[#allocation3 + $0x4] sm:$0x1]
        %1494 = vrot.lane.b32.xlu0 %v1492, 80
        %v1495 = vpop.permute.xlu0 %1494
        %1497 = vst.msk [vmem:[#allocation4 + $0x13] sm:$0x1] %vm1170, %v1495
        %v1498 = vld [vmem:[#allocation3 + $0x5] sm:$0x1]
        %1500 = vrot.lane.b32.xlu0 %v1498, 120
        %v1501 = vpop.permute.xlu0 %1500
        %1503 = vst.msk [vmem:[#allocation4 + $0x13] sm:$0x1] %vm1177, %v1501
        %v1504 = vld [vmem:[#allocation3 + $0x6] sm:$0x1]
        %1506 = vrot.lane.b32.xlu0 %v1504, 32
        %v1507 = vpop.permute.xlu0 %1506
        %1509 = vst.msk [vmem:[#allocation4 + $0x13] sm:$0x1] %vm1184, %v1507
        %v1510 = vld [vmem:[#allocation3 + $0x7] sm:$0x1]
        %1512 = vrot.lane.b32.xlu0 %v1510, 72
        %v1513 = vpop.permute.xlu0 %1512
        %1515 = vst.msk [vmem:[#allocation4 + $0x13] sm:$0x1] %vm1191, %v1513
        %1516 = vst.msk [vmem:[#allocation4 + $0x1b] sm:$0x1] %vm1193, %v1513
        %v1517 = vld [vmem:[#allocation3 + $0x8] sm:$0x1]
        %1519 = vrot.lane.b32.xlu0 %v1517, 112
        %v1520 = vpop.permute.xlu0 %1519
        %1522 = vst.msk [vmem:[#allocation4 + $0x1b] sm:$0x1] %vm1200, %v1520
        %v1523 = vld [vmem:[#allocation3 + $0x6] sm:$0x1]
        %1524 = vst.msk [vmem:[#allocation4 + $0x14] sm:$0x1] %vm1170, %v1523
        %v1525 = vld [vmem:[#allocation3 + $0x7] sm:$0x1]
        %1527 = vrot.lane.b32.xlu0 %v1525, 40
        %v1528 = vpop.permute.xlu0 %1527
        %1530 = vst.msk [vmem:[#allocation4 + $0x14] sm:$0x1] %vm1177, %v1528
        %v1531 = vld [vmem:[#allocation3 + $0x8] sm:$0x1]
        %1533 = vrot.lane.b32.xlu0 %v1531, 80
        %v1534 = vpop.permute.xlu0 %1533
        %1536 = vst.msk [vmem:[#allocation4 + $0x14] sm:$0x1] %vm1184, %v1534
        %v1537 = vld [vmem:[#allocation3 + $0x9] sm:$0x1]
        %1539 = vrot.lane.b32.xlu0 %v1537, 120
        %v1540 = vpop.permute.xlu0 %1539
        %1542 = vst.msk [vmem:[#allocation4 + $0x14] sm:$0x1] %vm1191, %v1540
        %1543 = vst.msk [vmem:[#allocation4 + $0x1c] sm:$0x1] %vm1193, %v1540
        %v1544 = vld [vmem:[#allocation3 + $0xa] sm:$0x1]
        %1546 = vrot.lane.b32.xlu0 %v1544, 32
        %v1547 = vpop.permute.xlu0 %1546
        %1549 = vst.msk [vmem:[#allocation4 + $0x1c] sm:$0x1] %vm1200, %v1547
        %v1550 = vld [vmem:[#allocation3 + $0x6] sm:$0x1]
        %1552 = vrot.lane.b32.xlu0 %v1550, 112
        %v1553 = vpop.permute.xlu0 %1552
        %1555 = vst.msk [vmem:[#allocation4 + $0x15] sm:$0x1] %vm1170, %v1553
        %v1556 = vld [vmem:[#allocation3 + $0x7] sm:$0x1]
        %1558 = vrot.lane.b32.xlu0 %v1556, 24
        %v1559 = vpop.permute.xlu0 %1558
        %1561 = vst.msk [vmem:[#allocation4 + $0x15] sm:$0x1] %vm1177, %v1559
        %v1562 = vld [vmem:[#allocation3 + $0x8] sm:$0x1]
        %1564 = vrot.lane.b32.xlu0 %v1562, 64
        %v1565 = vpop.permute.xlu0 %1564
        %1567 = vst.msk [vmem:[#allocation4 + $0x15] sm:$0x1] %vm1184, %v1565
        %v1568 = vld [vmem:[#allocation3 + $0x9] sm:$0x1]
        %1570 = vrot.lane.b32.xlu0 %v1568, 104
        %v1571 = vpop.permute.xlu0 %1570
        %1573 = vst.msk [vmem:[#allocation4 + $0x15] sm:$0x1] %vm1191, %v1571
        %1574 = vst.msk [vmem:[#allocation4 + $0x1d] sm:$0x1] %vm1193, %v1571
        %v1575 = vld [vmem:[#allocation3 + $0xa] sm:$0x1]
        %1577 = vrot.lane.b32.xlu0 %v1575, 16
        %v1578 = vpop.permute.xlu0 %1577
        %1580 = vst.msk [vmem:[#allocation4 + $0x1d] sm:$0x1] %vm1200, %v1578
        %v1581 = vld [vmem:[#allocation3 + $0x6] sm:$0x1]
        %1583 = vrot.lane.b32.xlu0 %v1581, 96
        %v1584 = vpop.permute.xlu0 %1583
        %1586 = vst.msk [vmem:[#allocation4 + $0x16] sm:$0x1] %vm1170, %v1584
        %v1587 = vld [vmem:[#allocation3 + $0x7] sm:$0x1]
        %1589 = vrot.lane.b32.xlu0 %v1587, 8
        %v1590 = vpop.permute.xlu0 %1589
        %1592 = vst.msk [vmem:[#allocation4 + $0x16] sm:$0x1] %vm1177, %v1590
        %v1593 = vld [vmem:[#allocation3 + $0x8] sm:$0x1]
        %1595 = vrot.lane.b32.xlu0 %v1593, 48
        %v1596 = vpop.permute.xlu0 %1595
        %1598 = vst.msk [vmem:[#allocation4 + $0x16] sm:$0x1] %vm1184, %v1596
        %v1599 = vld [vmem:[#allocation3 + $0x9] sm:$0x1]
        %1601 = vrot.lane.b32.xlu0 %v1599, 88
        %v1602 = vpop.permute.xlu0 %1601
        %1604 = vst.msk [vmem:[#allocation4 + $0x16] sm:$0x1] %vm1191, %v1602
        %1605 = vst.msk [vmem:[#allocation4 + $0x1e] sm:$0x1] %vm1193, %v1602
        %v1606 = vld [vmem:[#allocation3 + $0xa] sm:$0x1]
        %1607 = vst.msk [vmem:[#allocation4 + $0x1e] sm:$0x1] %vm1200, %v1606
        %v1608 = vld [vmem:[#allocation3 + $0x6] sm:$0x1]
        %1610 = vrot.lane.b32.xlu0 %v1608, 80
        %v1611 = vpop.permute.xlu0 %1610
        %1613 = vst.msk [vmem:[#allocation4 + $0x17] sm:$0x1] %vm1170, %v1611
        %v1614 = vld [vmem:[#allocation3 + $0x7] sm:$0x1]
        %1616 = vrot.lane.b32.xlu0 %v1614, 120
        %v1617 = vpop.permute.xlu0 %1616
        %1619 = vst.msk [vmem:[#allocation4 + $0x17] sm:$0x1] %vm1177, %v1617
        %v1620 = vld [vmem:[#allocation3 + $0x8] sm:$0x1]
        %1622 = vrot.lane.b32.xlu0 %v1620, 32
        %v1623 = vpop.permute.xlu0 %1622
        %1625 = vst.msk [vmem:[#allocation4 + $0x17] sm:$0x1] %vm1184, %v1623
        %v1626 = vld [vmem:[#allocation3 + $0x9] sm:$0x1]
        %1628 = vrot.lane.b32.xlu0 %v1626, 72
        %v1629 = vpop.permute.xlu0 %1628
        %1631 = vst.msk [vmem:[#allocation4 + $0x17] sm:$0x1] %vm1191, %v1629
        %1632 = vst.msk [vmem:[#allocation4 + $0x1f] sm:$0x1] %vm1193, %v1629
        %v1633 = vld [vmem:[#allocation3 + $0xa] sm:$0x1]
        %1635 = vrot.lane.b32.xlu0 %v1633, 112
        %v1636 = vpop.permute.xlu0 %1635
        %1638 = vst.msk [vmem:[#allocation4 + $0x1f] sm:$0x1] %vm1200, %v1636
        %v1639 = vld [vmem:[#allocation4] sm:$0xff]
        %v1640 = vld [vmem:[#allocation4 + $0x8] sm:$0xff]
        %v1641 = vld [vmem:[#allocation4 + $0x10] sm:$0xff]
        %v1642 = vld [vmem:[#allocation4 + $0x18] sm:$0xff]
        %v1643 = vld [vmem:[%s3] sm:$0xff]
        %v1644 = vld [vmem:[%s3 + $0x8] sm:$0xff]
        %v1645 = vld [vmem:[%s3 + $0x10] sm:$0xff]
        %v1646 = vld [vmem:[%s3 + $0x18] sm:$0xff]
        %v1647 = vld [vmem:[%s3 + $0x20] sm:$0xff]
        %v1648 = vld [vmem:[%s3 + $0x28] sm:$0xff]
        %v1649 = vld [vmem:[%s3 + $0x30] sm:$0xff]
        %v1650 = vld [vmem:[%s3 + $0x38] sm:$0xff]
        %v1651 = vld [vmem:[%s3 + $0x40] sm:$0xff]
        %v1652 = vld [vmem:[%s3 + $0x48] sm:$0xff]
        %v1653 = vld [vmem:[%s3 + $0x50] sm:$0xff]
        %v1654 = vld [vmem:[%s3 + $0x58] sm:$0xff]
        %v1655 = vld [vmem:[%s3 + $0x60] sm:$0xff]
        %v1656 = vld [vmem:[%s3 + $0x68] sm:$0xff]
        %v1657 = vld [vmem:[%s3 + $0x70] sm:$0xff]
        %v1658 = vld [vmem:[%s3 + $0x78] sm:$0xff]
        %v1659 = vld [vmem:[%s3 + $0x80] sm:$0xff]
        %v1660 = vld [vmem:[%s3 + $0x88] sm:$0xff]
        %v1661 = vld [vmem:[%s3 + $0x90] sm:$0xff]
        %v1662 = vld [vmem:[%s3 + $0x98] sm:$0xff]
        %v1663 = vld [vmem:[%s3 + $0xa0] sm:$0xff]
        %v1664 = vld [vmem:[%s3 + $0xa8] sm:$0xff]
        %v1665 = vld [vmem:[%s3 + $0xb0] sm:$0xff]
        %v1666 = vld [vmem:[%s3 + $0xb8] sm:$0xff]
        %v1667 = vld [vmem:[%s3 + $0xc0] sm:$0xff]
        %v1668 = vld [vmem:[%s4] sm:$0x1]
        %v1670 = vperm.slane %v1668, 0
        %vm1672 = vcmask 588800
        %v1674 = vsel %vm1672, %v1640, 0
        %v1677 = vsel %vm1672, %v1642, 0
        %1679 = vmatpush.msra.mxu0 %v1658
        %1680 = vmatpush.msra.mxu0 %v1657
        %1681 = vmatpush.msra.mxu0 %v1656
        %1682 = vmatpush.msra.mxu0 %v1655
        %1683 = vmatpush.msra.mxu0 %v1654
        %1684 = vmatpush.msra.mxu0 %v1653
        %1685 = vmatpush.msra.mxu0 %v1652
        %1686 = vmatpush.msra.mxu0 %v1651
        %1687 = vmatpush.msra.mxu0 %v1650
        %1688 = vmatpush.msra.mxu0 %v1649
        %1689 = vmatpush.msra.mxu0 %v1648
        %1690 = vmatpush.msra.mxu0 %v1647
        %1691 = vmatpush.msra.mxu0 %v1646
        %1692 = vmatpush.msra.mxu0 %v1645
        %1693 = vmatpush.msra.mxu0 %v1644
        %1694 = vmatpush.msra.mxu0 %v1643
        %1695 = vmatmul.f32.gmra.mxu0 %v1639
        %v1696 = vpop.f32.mrf.mxu0
        %v1697 = vadd.f32 %v1670, %v1696
        %1698 = vmatmul.f32.gmra.mxu0 %v1641
        %v1699 = vpop.f32.mrf.mxu0
        %v1700 = vadd.f32 %v1670, %v1699
        %1701 = vdwg.mxu0
        %1702 = vmatpush.msra.mxu0 0.0
        %1703 = vmatpush.msra.mxu0 0.0
        %1704 = vmatpush.msra.mxu0 0.0
        %1705 = vmatpush.msra.mxu0 0.0
        %1706 = vmatpush.msra.mxu0 0.0
        %1707 = vmatpush.msra.mxu0 0.0
        %1708 = vmatpush.msra.mxu0 0.0
        %1709 = vmatpush.msra.mxu0 %v1667
        %1710 = vmatpush.msra.mxu0 %v1666
        %1711 = vmatpush.msra.mxu0 %v1665
        %1712 = vmatpush.msra.mxu0 %v1664
        %1713 = vmatpush.msra.mxu0 %v1663
        %1714 = vmatpush.msra.mxu0 %v1662
        %1715 = vmatpush.msra.mxu0 %v1661
        %1716 = vmatpush.msra.mxu0 %v1660
        %1717 = vmatpush.msra.mxu0 %v1659
        %1718 = vmatmul.f32.gmra.mxu0 %v1674
        %v1719 = vpop.f32.mrf.mxu0
        %v1720 = vadd.f32 %v1697, %v1719
        %1721 = vmatmul.f32.gmra.mxu0 %v1677
        %v1722 = vpop.f32.mrf.mxu0
        %v1723 = vadd.f32 %v1700, %v1722
        %1724 = vdwg.mxu0
        %v1726 = vrot.slane %v1720, 1
        %v1728 = vmax.f32 %v1720, %v1726
        %v1730 = vrot.slane %v1728, 4
        %v1732 = vmax.f32 %v1728, %v1730
        %vm1733 = vcmask 122880
        %1734 = vst.msk [vmem:[#allocation5] sm:$0x1] %vm1733, %v1732
        %1736 = vrot.lane.b32.xlu0 %v1732, 16
        %v1737 = vpop.permute.xlu0 %1736
        %vm1739 = vcmask 256130
        %1740 = vst.msk [vmem:[#allocation5 - $0x2] sm:$0x4] %vm1739, %v1737
        %v1742 = vrot.slane %v1723, 1
        %v1744 = vmax.f32 %v1723, %v1742
        %v1746 = vrot.slane %v1744, 4
        %v1748 = vmax.f32 %v1744, %v1746
        %1750 = vrot.lane.b32.xlu0 %v1748, 32
        %v1751 = vpop.permute.xlu0 %1750
        %vm1753 = vcmask 385280
        %1754 = vst.msk [vmem:[#allocation5] sm:$0x1] %vm1753, %v1751
        %1755 = vrot.lane.b32.xlu0 %v1748, 48
        %v1756 = vpop.permute.xlu0 %1755
        %vm1758 = vcmask 518530
        %1759 = vst.msk [vmem:[#allocation5 - $0x2] sm:$0x4] %vm1758, %v1756
        %v1760 = vld [vmem:[#allocation5] sm:$0x1]
        %v1761 = vld [vmem:[%s5] sm:$0xff]
        %v1762 = vld [vmem:[%s5 + $0x8] sm:$0xff]
        %v1763 = vld [vmem:[%s5 + $0x10] sm:$0xff]
        %v1764 = vld [vmem:[%s5 + $0x18] sm:$0xff]
        %v1765 = vld [vmem:[%s5 + $0x20] sm:$0xff]
        %v1766 = vld [vmem:[%s5 + $0x28] sm:$0xff]
        %v1767 = vld [vmem:[%s5 + $0x30] sm:$0xff]
        %v1768 = vld [vmem:[%s5 + $0x38] sm:$0xff]
        %v1769 = vld [vmem:[%s6] sm:$0x1]
        %vm1770 = vcmask 523264
        %v1772 = vsel %vm1770, %v1760, 0
        %1774 = vmatpush.msra.mxu0 0.0
        %1775 = vmatpush.msra.mxu0 0.0
        %1776 = vmatpush.msra.mxu0 0.0
        %1777 = vmatpush.msra.mxu0 0.0
        %1778 = vmatpush.msra.mxu0 0.0
        %1779 = vmatpush.msra.mxu0 0.0
        %1780 = vmatpush.msra.mxu0 0.0
        %1781 = vmatpush.msra.mxu0 0.0
        %1782 = vmatpush.msra.mxu0 %v1768
        %1783 = vmatpush.msra.mxu0 %v1767
        %1784 = vmatpush.msra.mxu0 %v1766
        %1785 = vmatpush.msra.mxu0 %v1765
        %1786 = vmatpush.msra.mxu0 %v1764
        %1787 = vmatpush.msra.mxu0 %v1763
        %1788 = vmatpush.msra.mxu0 %v1762
        %1789 = vmatpush.msra.mxu0 %v1761
        %1790 = vmatmul.f32.gmra.mxu0 %v1772
        %v1791 = vpop.f32.mrf.mxu0
        %v1792 = vadd.f32 %v1769, %v1791
        %1793 = vdwg.mxu0
        %1794 = vst [vmem:[%s270] sm:$0x1] %v1792
        %s1795 = sand.u32 %s181, 1
        %s1796 = scalar_lea.sflag [#allocation7], %s1795
        %s1797 = sand.u32 %s181, 1
        %s1798 = scalar_lea.vmem [#allocation6], %s1797
        // Predicated region
        $region49: #{corrected_cnn_forward.1} parent=47 // pred_check
          %p1799 = pneg %p191
        $region50: #{corrected_cnn_forward.1} parent=47 // pred_check_branch
          %1801 = sbr.rel (%p1799) target = $region52
        $region51: #{corrected_cnn_forward.1} parent=47 // pred_region
          %1803 = vsyncadd %s1796, 0
          %s1804 = scalar_lea.hbm %s7, %s21
          %s1806 = sshll.u32 %s1798, 4
          %s1807 = int_to_ptr.vmem [resolvable:$true] %s1806
          %s1808 = sshll.u32 %s1804, 4
          %s1809 = int_to_ptr.hbm [resolvable:$true] %s1808
          %1811 = dma.vmem_to_hbm [thread:$0]  %s1807, 16, %s1809, %s1796
        $region52: #{corrected_cnn_forward.1} parent=47 // pred_fallthru
          _
      $region48: #{corrected_cnn_forward.1} parent=5 // pred_fallthru
        _
      %p1812 = scmp.le.s32.totalorder 2, %s16
      // Predicated region
      $region53: #{corrected_cnn_forward.1} parent=5 // pred_check
        %p1813 = pneg %p1812
      $region54: #{corrected_cnn_forward.1} parent=5 // pred_check_branch
        %1815 = sbr.rel (%p1813) target = $region56
      $region55: #{corrected_cnn_forward.1} parent=5 // pred_region
        %s1816 = ssub.s32 %s16, 2
        // Predicated region
        $region57: #{corrected_cnn_forward.1} parent=55 // pred_check
          %p1817 = pneg %p197
        $region58: #{corrected_cnn_forward.1} parent=55 // pred_check_branch
          %1819 = sbr.rel (%p1817) target = $region60
        $region59: #{corrected_cnn_forward.1} parent=55 // pred_region
          %s1820 = sand.u32 %s182, 1
          %s1821 = scalar_lea.sflag [#allocation7], %s1820
          %s1822 = sand.u32 %s182, 1
          %s1823 = scalar_lea.vmem [#allocation6], %s1822
          %1825 = dma.done %s1821, 16
        $region60: #{corrected_cnn_forward.1} parent=55 // pred_fallthru
          _
      $region56: #{corrected_cnn_forward.1} parent=5 // pred_fallthru
        _
    $region6: #{corrected_cnn_forward.1} parent=1 // loop_footer
      %s20 = sadd.s32 1, %s16
    $region7: #{corrected_cnn_forward.1} parent=1 // loop_footer_branch
      %15 = sbr.rel target = $region3
    $region8: #{corrected_cnn_forward.1} parent=1 // loop_exit
      _
    %1826 = vsyncpa [#allocation7], 1
    %s1827 = scalar_lea.sflag [#allocation7], 1
    %1828 = vsyncpa %s1827, 1

</llo_original>
